<compile_context>
chip_gen: v6e
topology: v6e:2x2x1
jax: 0.10.0
libtpu: 0.0.40
codegen_flags: <defaults>
</compile_context>

<pallas_src>
import jax
import jax.numpy as jnp
from jax.experimental import pallas as pl
from jax.experimental.pallas import tpu as pltpu

EPS = 1e-5          # BatchNorm eps (PyTorch default)
HID = 150           # LSTM hidden size
HPAD = 256          # padded hidden (lane-aligned gate slices)
C1 = 100            # conv1 out channels
C2 = 50             # conv2 out channels
KC = 4              # conv2 K-chunks streamed through kernel 2
SPC = 144 // KC     # spatial positions per chunk (36)
KP = SPC * C1       # contraction elements per chunk (3600)


def _vmem():
    return pl.BlockSpec(memory_space=pltpu.MemorySpace.VMEM)


# ----------------------------------------------------------------------------
# Kernel 1: conv1 (im2col matmul) + folded BatchNorm + ReLU  -> bf16 activations
# ----------------------------------------------------------------------------
def conv1_kernel(p_ref, w_ref, b_ref, o_ref):
    y = jnp.dot(p_ref[...], w_ref[...], preferred_element_type=jnp.float32)
    o_ref[...] = jnp.maximum(y + b_ref[...], 0.0).astype(o_ref.dtype)


# ----------------------------------------------------------------------------
# Kernel 2: conv2 (full-extent kernel == matmul), K streamed in KC chunks so
#           the w2 DMA overlaps the MXU accumulation; at the last chunk:
#           + BN bias + ReLU -> Se(50) -> LSTM cell (i,g,o) -> Se(150)
#           -> dense -> sigmoid.
# Packed parameter slabs (all slices start at 0 or multiples of 128 lanes):
#   wx   (50, 896)  bf16 : [:,   0:128] Se(50) squeeze W1 (3 valid cols)
#                          [:, 128:896] LSTM [Wi|Wg|Wo], each padded to 256
#   wmid (128, 384) bf16 : [:,   0:128] Se(50) excite W2 (3x50 valid)
#                          [:, 128:384] Se(150) excite W2 (9x150 valid)
#   wh   (256, 640) bf16 : [:,   0:128] Se(150) squeeze W1 (150x9 valid)
#                          [:, 128:640] dense W (150x500 valid)
#   bias (1, 1408)  f32  : [0:128] conv2 folded bias | [128:896] gate biases
#                          [896:1408] dense bias
# ----------------------------------------------------------------------------
def conv2_head_kernel(a2_ref, w2_ref, wx_ref, wmid_ref, wh_ref, b_ref,
                      out_ref, acc_ref):
    k = pl.program_id(0)

    @pl.when(k == 0)
    def _init():
        acc_ref[...] = jnp.zeros_like(acc_ref)

    # conv2 partial sum for this K-chunk: (B, 3600) @ (3600, 50), bf16 MXU,
    # f32 accumulation in VMEM scratch.
    acc_ref[...] += jnp.dot(a2_ref[0], w2_ref[0],
                            preferred_element_type=jnp.float32)

    @pl.when(k == pl.num_programs(0) - 1)
    def _finalize():
        x = jnp.maximum(acc_ref[...] + b_ref[:, 0:C2], 0.0)          # (B, 50)

        # --- Se(50): x * sigmoid(relu(x @ W1) @ W2) --------------------------
        s = jnp.maximum(
            jnp.dot(x.astype(jnp.bfloat16), wx_ref[:, 0:128],
                    preferred_element_type=jnp.float32), 0.0)         # (B, 128)
        s = jax.nn.sigmoid(
            jnp.dot(s.astype(jnp.bfloat16), wmid_ref[:, 0:C2],
                    preferred_element_type=jnp.float32))              # (B, 50)
        x = s * x

        # --- single LSTM cell step (seq_len == 1, h0 == c0 == 0) -------------
        # Forget gate dropped (c0 == 0).  One fused [i|g|o] gate matmul.
        gates = jnp.dot(x.astype(jnp.bfloat16), wx_ref[:, 128:896],
                        preferred_element_type=jnp.float32) + b_ref[:, 128:896]
        i = jax.nn.sigmoid(gates[:, 0:256])
        g = jnp.tanh(gates[:, 256:512])
        o = jax.nn.sigmoid(gates[:, 512:768])
        h = o * jnp.tanh(i * g)             # (B, 256); padded lanes are exactly 0

        # --- Se(150) ----------------------------------------------------------
        s2 = jnp.maximum(
            jnp.dot(h.astype(jnp.bfloat16), wh_ref[:, 0:128],
                    preferred_element_type=jnp.float32), 0.0)          # (B, 128)
        s2 = jax.nn.sigmoid(
            jnp.dot(s2.astype(jnp.bfloat16), wmid_ref[:, 128:384],
                    preferred_element_type=jnp.float32))               # (B, 256)
        h = s2 * h

        # --- dense (Flatten + Linear(150, 500)) + sigmoid, padded to 512 ------
        y = jnp.dot(h.astype(jnp.bfloat16), wh_ref[:, 128:640],
                    preferred_element_type=jnp.float32) + b_ref[:, 896:1408]
        out_ref[...] = jax.nn.sigmoid(y)


# ----------------------------------------------------------------------------
# JAX glue
# ----------------------------------------------------------------------------
def im2col_3x3(x):
    # Tiny (6.4 KB input at B=2): negligible XLA fusion before the kernel.
    B, C, H, W = x.shape
    Ho, Wo = H - 2, W - 2
    cols = [x[:, :, kh:kh + Ho, kw:kw + Wo] for kh in range(3) for kw in range(3)]
    p = jnp.stack(cols, axis=2)              # (B, C, 9, Ho, Wo)
    p = p.transpose(0, 3, 4, 1, 2)           # (B, Ho, Wo, C, 9)
    return p.reshape(B * Ho * Wo, C * 9)     # columns ordered (c, kh, kw)


def cnn_lstm_forward(x, p):
    B, Cin, H, W = x.shape
    # Se.view / conv2 (18,8) kernel hard-wire the network to (20, 10) inputs.
    assert (H, W) == (20, 10), "CNNLSTM forward requires (H, W) == (20, 10)"
    Ho, Wo = H - 2, W - 2                                        # 18, 8
    patches = im2col_3x3(x)                                      # (B*144, Cin*9)

    conv1_cost = pl.CostEstimate(
        flops=2 * B * Ho * Wo * Cin * 9 * C1,
        transcendentals=0,
        bytes_accessed=(patches.size * 4 + Cin * 9 * C1 * 4 + C1 * 4
                        + B * Ho * Wo * C1 * 2),
    )

    # conv1 + BN + ReLU  (BN folded into w1f/b1f).  Dropout: identity in eval.
    y1 = pl.pallas_call(
        conv1_kernel,
        out_shape=jax.ShapeDtypeStruct((B * Ho * Wo, C1), jnp.bfloat16),
        in_specs=[_vmem()] * 3,
        out_specs=_vmem(),
        cost_estimate=conv1_cost,
    )(patches, p["w1f"], p["b1f"])

    # (B*144, 100) -> (KC, B, 3600): chunk the conv2 contraction so kernel 2 can
    # stream w2/a2 K-blocks with lane-aligned BlockSpecs.  One small (57.6 KB)
    # XLA relayout copy; w2's rows are pre-permuted to (h, w, c) order at init.
    # TODO(synk): fusing this into a single kernel needs an in-kernel
    # (144,100)->(1,14400) lane relayout, which Mosaic reshape does not
    # reliably support; kept as the XLA copy instead.
    a2 = y1.reshape(B, KC, SPC, C1).transpose(1, 0, 2, 3).reshape(KC, B, KP)

    head_flops = (2 * B * KC * KP * C2                    # conv2
                  + 2 * B * (C2 * 128 + 128 * C2)         # Se(50)
                  + 2 * B * C2 * 768                      # gates
                  + 2 * B * (HPAD * 128 + 128 * HPAD)     # Se(150)
                  + 2 * B * HPAD * 512)                   # dense
    head_bytes = (B * KC * KP * 2 + KC * KP * C2 * 2 + C2 * 896 * 2
                  + 128 * 384 * 2 + HPAD * 640 * 2 + 1408 * 4 + B * 512 * 4)
    head_cost = pl.CostEstimate(flops=head_flops,
                                transcendentals=B * 1900,
                                bytes_accessed=head_bytes)

    out = pl.pallas_call(
        conv2_head_kernel,
        out_shape=jax.ShapeDtypeStruct((B, 512), jnp.float32),
        grid_spec=pltpu.PrefetchScalarGridSpec(
            num_scalar_prefetch=0,
            grid=(KC,),
            in_specs=[
                pl.BlockSpec((1, B, KP), lambda k: (k, 0, 0)),    # a2 chunks
                pl.BlockSpec((1, KP, C2), lambda k: (k, 0, 0)),   # w2 chunks
                pl.BlockSpec((C2, 896), lambda k: (0, 0)),        # wx (resident)
                pl.BlockSpec((128, 384), lambda k: (0, 0)),       # wmid
                pl.BlockSpec((HPAD, 640), lambda k: (0, 0)),      # wh
                pl.BlockSpec((1, 1408), lambda k: (0, 0)),        # bias
            ],
            out_specs=pl.BlockSpec((B, 512), lambda k: (0, 0)),
            scratch_shapes=[pltpu.VMEM((B, C2), jnp.float32)],
        ),
        compiler_params=pltpu.CompilerParams(
            dimension_semantics=("arbitrary",)),
        cost_estimate=head_cost,
    )(a2, p["w2"], p["wx"], p["wmid"], p["wh"], p["bias"])

    return out[:, :500]                                          # drop pad lanes


# ----------------------------------------------------------------------------
# Parameter setup: random "PyTorch-like" raw params, then fold / permute / pack.
# ----------------------------------------------------------------------------
def init_raw_params(key, cin):
    ks = iter(jax.random.split(key, 32))

    def nrm(shape, s=0.05):
        return s * jax.random.normal(next(ks), shape, jnp.float32)

    def uni(shape, lo, hi):
        return jax.random.uniform(next(ks), shape, jnp.float32, lo, hi)

    return dict(
        w1=nrm((C1, cin, 3, 3)), b1=nrm((C1,)),
        g1=uni((C1,), 0.5, 1.5), be1=nrm((C1,)), rm1=nrm((C1,)), rv1=uni((C1,), 0.5, 1.5),
        w2=nrm((C2, C1, 18, 8)), b2=nrm((C2,)),
        g2=uni((C2,), 0.5, 1.5), be2=nrm((C2,)), rm2=nrm((C2,)), rv2=uni((C2,), 0.5, 1.5),
        se1_w1=nrm((3, 50)), se1_w2=nrm((50, 3)),          # Se(50) fc weights
        w_ih=nrm((4 * HID, 50)), b_ih=nrm((4 * HID,)), b_hh=nrm((4 * HID,)),
        se2_w1=nrm((9, 150)), se2_w2=nrm((150, 9)),        # Se(150) fc weights
        wd=nrm((500, 150)), bd=nrm((500,)),
    )


def pack_params(r):
    cin = r["w1"].shape[1]

    # conv1 + BN1 folded: w' = w * g*rsqrt(rv+eps), b' = (b-rm)*scale + beta
    s1 = r["g1"] / jnp.sqrt(r["rv1"] + EPS)
    w1f = r["w1"].reshape(C1, cin * 9).T * s1[None, :]           # (cin*9, 100)
    b1f = ((r["b1"] - r["rm1"]) * s1 + r["be1"]).reshape(1, C1)

    # conv2 + BN2 folded; rows permuted to (h, w, c) order; stored bf16 and
    # chunked along K into (KC, KP, C2) for the streamed grid in kernel 2.
    s2 = r["g2"] / jnp.sqrt(r["rv2"] + EPS)
    w2p = (r["w2"].transpose(2, 3, 1, 0).reshape(18 * 8 * C1, C2) * s2[None, :])
    w2p = w2p.astype(jnp.bfloat16).reshape(KC, KP, C2)
    b2f = (r["b2"] - r["rm2"]) * s2 + r["be2"]                   # (50,)

    # LSTM gates: keep i, g, o (torch order [i,f,g,o]); forget gate is dead
    # (c0 == 0).  W_hh omitted (h0 == 0); its bias is folded in.
    b_g = r["b_ih"] + r["b_hh"]
    wg = jnp.zeros((50, 3 * HPAD), jnp.float32)
    bg = jnp.zeros((3 * HPAD,), jnp.float32)
    for k, gi in enumerate((0, 2, 3)):                           # i, g, o
        sl = slice(gi * HID, (gi + 1) * HID)
        wg = wg.at[:, k * HPAD:k * HPAD + HID].set(r["w_ih"][sl].T)
        bg = bg.at[k * HPAD:k * HPAD + HID].set(b_g[sl])

    # Packed slabs (zero padding everywhere outside the valid blocks).
    # bf16 storage: zeros stay exactly zero, so the pad-lane invariants hold.
    wx = jnp.zeros((50, 128 + 3 * HPAD), jnp.float32)            # (50, 896)
    wx = wx.at[:, 0:3].set(r["se1_w1"].T)
    wx = wx.at[:, 128:].set(wg)
    wx = wx.astype(jnp.bfloat16)

    wmid = jnp.zeros((128, 128 + HPAD), jnp.float32)             # (128, 384)
    wmid = wmid.at[0:3, 0:50].set(r["se1_w2"].T)
    wmid = wmid.at[0:9, 128:128 + HID].set(r["se2_w2"].T)
    wmid = wmid.astype(jnp.bfloat16)

    wh = jnp.zeros((HPAD, 128 + 512), jnp.float32)               # (256, 640)
    wh = wh.at[0:HID, 0:9].set(r["se2_w1"].T)
    wh = wh.at[0:HID, 128:128 + 500].set(r["wd"].T)
    wh = wh.astype(jnp.bfloat16)

    bias = jnp.zeros((1, 128 + 3 * HPAD + 512), jnp.float32)     # (1, 1408)
    bias = bias.at[0, 0:50].set(b2f)
    bias = bias.at[0, 128:128 + 3 * HPAD].set(bg)
    bias = bias.at[0, 896:896 + 500].set(r["bd"])

    return dict(w1f=w1f, b1f=b1f, w2=w2p, wx=wx, wmid=wmid, wh=wh, bias=bias)


if __name__ == "__main__":
    key = jax.random.PRNGKey(0)
    k_x, k_p = jax.random.split(key)
    # Input spatial size must be (20, 10): 3x3 conv then (18, 8) conv -> 1x1,
    # which the Se.view(...) in the reference model requires.
    B, Cin, H, W = 2, 4, 20, 10
    x = jax.random.normal(k_x, (B, Cin, H, W), jnp.float32)
    params = pack_params(init_raw_params(k_p, Cin))

    out = jax.jit(cnn_lstm_forward)(x, params)
    jax.block_until_ready(out)
    assert out.shape == (B, 500) and out.dtype == jnp.float32
    assert bool(jnp.all(jnp.isfinite(out)))
    print("KERNEL_OK")
</pallas_src>

<mosaic_0001>
module attributes {stable_mosaic.version = 11 : i64} {
  func.func @conv1_kernel(%arg0: memref<288x36xf32, #tpu.memory_space<vmem>>, %arg1: memref<36x100xf32, #tpu.memory_space<vmem>>, %arg2: memref<1x100xf32, #tpu.memory_space<vmem>>, %arg3: memref<288x100xbf16, #tpu.memory_space<vmem>>) attributes {dimension_semantics = [], scalar_prefetch = 0 : i64, scratch_operands = 0 : i64, tpu.core_type = #tpu.core_type<tc>} {
    %c0 = arith.constant 0 : index
    %c0_0 = arith.constant 0 : index
    %0 = vector.load %arg0[%c0, %c0_0] : memref<288x36xf32, #tpu.memory_space<vmem>>, vector<288x36xf32>
    %c0_1 = arith.constant 0 : index
    %c0_2 = arith.constant 0 : index
    %1 = vector.load %arg1[%c0_1, %c0_2] : memref<36x100xf32, #tpu.memory_space<vmem>>, vector<36x100xf32>
    %cst = arith.constant dense<0.000000e+00> : vector<288x100xf32>
    %2 = tpu.matmul %0, %1, %cst {dimension_numbers = #tpu.dot_dimension_numbers<[1], [0], [0], [1], [0, 0, 1, 1], [], []>} : vector<288x36xf32>, vector<36x100xf32>, vector<288x100xf32> -> vector<288x100xf32>
    %c0_3 = arith.constant 0 : index
    %c0_4 = arith.constant 0 : index
    %3 = vector.load %arg2[%c0_3, %c0_4] : memref<1x100xf32, #tpu.memory_space<vmem>>, vector<1x100xf32>
    %4 = vector.broadcast %3 : vector<1x100xf32> to vector<288x100xf32>
    %5 = arith.addf %2, %4 : vector<288x100xf32>
    %cst_5 = arith.constant 0.000000e+00 : f32
    %6 = vector.broadcast %cst_5 : f32 to vector<288x100xf32>
    %7 = arith.maximumf %5, %6 : vector<288x100xf32>
    %8 = arith.truncf %7 : vector<288x100xf32> to vector<288x100xbf16>
    %c0_6 = arith.constant 0 : index
    %c0_7 = arith.constant 0 : index
    %9 = vector.load %arg3[%c0_6, %c0_7] : memref<288x100xbf16, #tpu.memory_space<vmem>>, vector<288x100xbf16>
    tpu.vector_store %arg3[%c0_6, %c0_7], %8 {strides = array<i32>} : memref<288x100xbf16, #tpu.memory_space<vmem>>, vector<288x100xbf16>,
    return
  }
}

module attributes {stable_mosaic.version = 11 : i64} {
  func.func @conv2_head_kernel(%arg0: i32, %arg1: memref<1x2x3600xbf16, #tpu.memory_space<vmem>>, %arg2: memref<1x3600x50xbf16, #tpu.memory_space<vmem>>, %arg3: memref<50x896xbf16, #tpu.memory_space<vmem>>, %arg4: memref<128x384xbf16, #tpu.memory_space<vmem>>, %arg5: memref<256x640xbf16, #tpu.memory_space<vmem>>, %arg6: memref<1x1408xf32, #tpu.memory_space<vmem>>, %arg7: memref<2x512xf32, #tpu.memory_space<vmem>>, %arg8: memref<2x50xf32, #tpu.memory_space<vmem>>) attributes {dimension_semantics = [#tpu.dimension_semantics<arbitrary>], iteration_bounds = array<i64: 4>, scalar_prefetch = 0 : i64, scratch_operands = 1 : i64, tpu.core_type = #tpu.core_type<tc>, window_params = [{transform_indices = @transform_0, window_bounds = array<i64: 1, 2, 3600>}, {transform_indices = @transform_1, window_bounds = array<i64: 1, 3600, 50>}, {pipeline_mode = #tpu.pipeline_mode<synchronous>, transform_indices = @transform_2, window_bounds = array<i64: 50, 896>}, {pipeline_mode = #tpu.pipeline_mode<synchronous>, transform_indices = @transform_3, window_bounds = array<i64: 128, 384>}, {pipeline_mode = #tpu.pipeline_mode<synchronous>, transform_indices = @transform_4, window_bounds = array<i64: 256, 640>}, {pipeline_mode = #tpu.pipeline_mode<synchronous>, transform_indices = @transform_5, window_bounds = array<i64: 1, 1408>}, {pipeline_mode = #tpu.pipeline_mode<synchronous>, transform_indices = @transform_6, window_bounds = array<i64: 2, 512>}]} {
    %c0_i32 = arith.constant 0 : i32
    %0 = arith.cmpi eq, %arg0, %c0_i32 : i32
    %1 = arith.extui %0 : i1 to i32
    %c0_i32_0 = arith.constant 0 : i32
    %2 = arith.cmpi ne, %1, %c0_i32_0 : i32
    scf.if %2 {
      %cst_11 = arith.constant 0.000000e+00 : f32
      %14 = vector.broadcast %cst_11 : f32 to vector<2x50xf32>
      %c0_12 = arith.constant 0 : index
      %c0_13 = arith.constant 0 : index
      %15 = vector.load %arg8[%c0_12, %c0_13] : memref<2x50xf32, #tpu.memory_space<vmem>>, vector<2x50xf32>
      tpu.vector_store %arg8[%c0_12, %c0_13], %14 {strides = array<i32>} : memref<2x50xf32, #tpu.memory_space<vmem>>, vector<2x50xf32>,
    } else {
    }
    %c0 = arith.constant 0 : index
    %c0_1 = arith.constant 0 : index
    %3 = vector.load %arg8[%c0, %c0_1] : memref<2x50xf32, #tpu.memory_space<vmem>>, vector<2x50xf32>
    %c0_2 = arith.constant 0 : index
    %c0_3 = arith.constant 0 : index
    %c0_4 = arith.constant 0 : index
    %4 = vector.load %arg1[%c0_2, %c0_3, %c0_4] : memref<1x2x3600xbf16, #tpu.memory_space<vmem>>, vector<1x2x3600xbf16>
    %5 = vector.shape_cast %4 : vector<1x2x3600xbf16> to vector<2x3600xbf16>
    %c0_5 = arith.constant 0 : index
    %c0_6 = arith.constant 0 : index
    %c0_7 = arith.constant 0 : index
    %6 = vector.load %arg2[%c0_5, %c0_6, %c0_7] : memref<1x3600x50xbf16, #tpu.memory_space<vmem>>, vector<1x3600x50xbf16>
    %7 = vector.shape_cast %6 : vector<1x3600x50xbf16> to vector<3600x50xbf16>
    %cst = arith.constant dense<0.000000e+00> : vector<2x50xf32>
    %8 = tpu.matmul %5, %7, %cst {dimension_numbers = #tpu.dot_dimension_numbers<[1], [0], [0], [1], [0, 0, 1, 1], [], []>} : vector<2x3600xbf16>, vector<3600x50xbf16>, vector<2x50xf32> -> vector<2x50xf32>
    %9 = arith.addf %3, %8 : vector<2x50xf32>
    %c0_8 = arith.constant 0 : index
    %c0_9 = arith.constant 0 : index
    %10 = vector.load %arg8[%c0_8, %c0_9] : memref<2x50xf32, #tpu.memory_space<vmem>>, vector<2x50xf32>
    tpu.vector_store %arg8[%c0_8, %c0_9], %9 {strides = array<i32>} : memref<2x50xf32, #tpu.memory_space<vmem>>, vector<2x50xf32>,
    %c3_i32 = arith.constant 3 : i32
    %11 = arith.cmpi eq, %arg0, %c3_i32 : i32
    %12 = arith.extui %11 : i1 to i32
    %c0_i32_10 = arith.constant 0 : i32
    %13 = arith.cmpi ne, %12, %c0_i32_10 : i32
    scf.if %13 {
      %c0_11 = arith.constant 0 : index
      %c0_12 = arith.constant 0 : index
      %14 = vector.load %arg8[%c0_11, %c0_12] : memref<2x50xf32, #tpu.memory_space<vmem>>, vector<2x50xf32>
      %c0_13 = arith.constant 0 : index
      %c0_14 = arith.constant 0 : index
      %15 = vector.load %arg6[%c0_13, %c0_14] : memref<1x1408xf32, #tpu.memory_space<vmem>>, vector<1x50xf32>
      %16 = vector.broadcast %15 : vector<1x50xf32> to vector<2x50xf32>
      %17 = arith.addf %14, %16 : vector<2x50xf32>
      %cst_15 = arith.constant 0.000000e+00 : f32
      %18 = vector.broadcast %cst_15 : f32 to vector<2x50xf32>
      %19 = arith.maximumf %17, %18 : vector<2x50xf32>
      %20 = arith.truncf %19 : vector<2x50xf32> to vector<2x50xbf16>
      %c0_16 = arith.constant 0 : index
      %c0_17 = arith.constant 0 : index
      %21 = vector.load %arg3[%c0_16, %c0_17] : memref<50x896xbf16, #tpu.memory_space<vmem>>, vector<50x128xbf16>
      %cst_18 = arith.constant dense<0.000000e+00> : vector<2x128xf32>
      %22 = tpu.matmul %20, %21, %cst_18 {dimension_numbers = #tpu.dot_dimension_numbers<[1], [0], [0], [1], [0, 0, 1, 1], [], []>} : vector<2x50xbf16>, vector<50x128xbf16>, vector<2x128xf32> -> vector<2x128xf32>
      %cst_19 = arith.constant 0.000000e+00 : f32
      %23 = vector.broadcast %cst_19 : f32 to vector<2x128xf32>
      %24 = arith.maximumf %22, %23 : vector<2x128xf32>
      %25 = arith.truncf %24 : vector<2x128xf32> to vector<2x128xbf16>
      %c0_20 = arith.constant 0 : index
      %c0_21 = arith.constant 0 : index
      %26 = vector.load %arg4[%c0_20, %c0_21] : memref<128x384xbf16, #tpu.memory_space<vmem>>, vector<128x50xbf16>
      %cst_22 = arith.constant dense<0.000000e+00> : vector<2x50xf32>
      %27 = tpu.matmul %25, %26, %cst_22 {dimension_numbers = #tpu.dot_dimension_numbers<[1], [0], [0], [1], [0, 0, 1, 1], [], []>} : vector<2x128xbf16>, vector<128x50xbf16>, vector<2x50xf32> -> vector<2x50xf32>
      %28 = arith.negf %27 : vector<2x50xf32>
      %29 = math.exp %28 : vector<2x50xf32>
      %cst_23 = arith.constant 1.000000e+00 : f32
      %30 = vector.broadcast %cst_23 : f32 to vector<2x50xf32>
      %31 = arith.addf %30, %29 : vector<2x50xf32>
      %32 = arith.divf %30, %31 : vector<2x50xf32>
      %33 = arith.mulf %32, %19 : vector<2x50xf32>
      %34 = arith.truncf %33 : vector<2x50xf32> to vector<2x50xbf16>
      %c0_24 = arith.constant 0 : index
      %c128 = arith.constant 128 : index
      %35 = vector.load %arg3[%c0_24, %c128] : memref<50x896xbf16, #tpu.memory_space<vmem>>, vector<50x768xbf16>
      %cst_25 = arith.constant dense<0.000000e+00> : vector<2x768xf32>
      %36 = tpu.matmul %34, %35, %cst_25 {dimension_numbers = #tpu.dot_dimension_numbers<[1], [0], [0], [1], [0, 0, 1, 1], [], []>} : vector<2x50xbf16>, vector<50x768xbf16>, vector<2x768xf32> -> vector<2x768xf32>
      %c0_26 = arith.constant 0 : index
      %c128_27 = arith.constant 128 : index
      %37 = vector.load %arg6[%c0_26, %c128_27] : memref<1x1408xf32, #tpu.memory_space<vmem>>, vector<1x768xf32>
      %38 = vector.broadcast %37 : vector<1x768xf32> to vector<2x768xf32>
      %39 = arith.addf %36, %38 : vector<2x768xf32>
      %40 = vector.extract_strided_slice %39 {offsets = [0, 0], sizes = [2, 256], strides = [1, 1]} : vector<2x768xf32> to vector<2x256xf32>
      %41 = arith.negf %40 : vector<2x256xf32>
      %42 = math.exp %41 : vector<2x256xf32>
      %cst_28 = arith.constant 1.000000e+00 : f32
      %43 = vector.broadcast %cst_28 : f32 to vector<2x256xf32>
      %44 = arith.addf %43, %42 : vector<2x256xf32>
      %45 = arith.divf %43, %44 : vector<2x256xf32>
      %46 = vector.extract_strided_slice %39 {offsets = [0, 256], sizes = [2, 256], strides = [1, 1]} : vector<2x768xf32> to vector<2x256xf32>
      %47 = math.tanh %46 : vector<2x256xf32>
      %48 = vector.extract_strided_slice %39 {offsets = [0, 512], sizes = [2, 256], strides = [1, 1]} : vector<2x768xf32> to vector<2x256xf32>
      %49 = arith.negf %48 : vector<2x256xf32>
      %50 = math.exp %49 : vector<2x256xf32>
      %cst_29 = arith.constant 1.000000e+00 : f32
      %51 = vector.broadcast %cst_29 : f32 to vector<2x256xf32>
      %52 = arith.addf %51, %50 : vector<2x256xf32>
      %53 = arith.divf %51, %52 : vector<2x256xf32>
      %54 = arith.mulf %45, %47 : vector<2x256xf32>
      %55 = math.tanh %54 : vector<2x256xf32>
      %56 = arith.mulf %53, %55 : vector<2x256xf32>
      %57 = arith.truncf %56 : vector<2x256xf32> to vector<2x256xbf16>
      %c0_30 = arith.constant 0 : index
      %c0_31 = arith.constant 0 : index
      %58 = vector.load %arg5[%c0_30, %c0_31] : memref<256x640xbf16, #tpu.memory_space<vmem>>, vector<256x128xbf16>
      %cst_32 = arith.constant dense<0.000000e+00> : vector<2x128xf32>
      %59 = tpu.matmul %57, %58, %cst_32 {dimension_numbers = #tpu.dot_dimension_numbers<[1], [0], [0], [1], [0, 0, 1, 1], [], []>} : vector<2x256xbf16>, vector<256x128xbf16>, vector<2x128xf32> -> vector<2x128xf32>
      %cst_33 = arith.constant 0.000000e+00 : f32
      %60 = vector.broadcast %cst_33 : f32 to vector<2x128xf32>
      %61 = arith.maximumf %59, %60 : vector<2x128xf32>
      %62 = arith.truncf %61 : vector<2x128xf32> to vector<2x128xbf16>
      %c0_34 = arith.constant 0 : index
      %c128_35 = arith.constant 128 : index
      %63 = vector.load %arg4[%c0_34, %c128_35] : memref<128x384xbf16, #tpu.memory_space<vmem>>, vector<128x256xbf16>
      %cst_36 = arith.constant dense<0.000000e+00> : vector<2x256xf32>
      %64 = tpu.matmul %62, %63, %cst_36 {dimension_numbers = #tpu.dot_dimension_numbers<[1], [0], [0], [1], [0, 0, 1, 1], [], []>} : vector<2x128xbf16>, vector<128x256xbf16>, vector<2x256xf32> -> vector<2x256xf32>
      %65 = arith.negf %64 : vector<2x256xf32>
      %66 = math.exp %65 : vector<2x256xf32>
      %cst_37 = arith.constant 1.000000e+00 : f32
      %67 = vector.broadcast %cst_37 : f32 to vector<2x256xf32>
      %68 = arith.addf %67, %66 : vector<2x256xf32>
      %69 = arith.divf %67, %68 : vector<2x256xf32>
      %70 = arith.mulf %69, %56 : vector<2x256xf32>
      %71 = arith.truncf %70 : vector<2x256xf32> to vector<2x256xbf16>
      %c0_38 = arith.constant 0 : index
      %c128_39 = arith.constant 128 : index
      %72 = vector.load %arg5[%c0_38, %c128_39] : memref<256x640xbf16, #tpu.memory_space<vmem>>, vector<256x512xbf16>
      %cst_40 = arith.constant dense<0.000000e+00> : vector<2x512xf32>
      %73 = tpu.matmul %71, %72, %cst_40 {dimension_numbers = #tpu.dot_dimension_numbers<[1], [0], [0], [1], [0, 0, 1, 1], [], []>} : vector<2x256xbf16>, vector<256x512xbf16>, vector<2x512xf32> -> vector<2x512xf32>
      %c0_41 = arith.constant 0 : index
      %c896 = arith.constant 896 : index
      %74 = vector.load %arg6[%c0_41, %c896] : memref<1x1408xf32, #tpu.memory_space<vmem>>, vector<1x512xf32>
      %75 = vector.broadcast %74 : vector<1x512xf32> to vector<2x512xf32>
      %76 = arith.addf %73, %75 : vector<2x512xf32>
      %77 = arith.negf %76 : vector<2x512xf32>
      %78 = math.exp %77 : vector<2x512xf32>
      %cst_42 = arith.constant 1.000000e+00 : f32
      %79 = vector.broadcast %cst_42 : f32 to vector<2x512xf32>
      %80 = arith.addf %79, %78 : vector<2x512xf32>
      %81 = arith.divf %79, %80 : vector<2x512xf32>
      %c0_43 = arith.constant 0 : index
      %c0_44 = arith.constant 0 : index
      %82 = vector.load %arg7[%c0_43, %c0_44] : memref<2x512xf32, #tpu.memory_space<vmem>>, vector<2x512xf32>
      tpu.vector_store %arg7[%c0_43, %c0_44], %81 {strides = array<i32>} : memref<2x512xf32, #tpu.memory_space<vmem>>, vector<2x512xf32>,
    } else {
    }
    return
  }
  func.func @transform_0(%arg0: i32) -> (i32, i32, i32) {
    %c0_i32 = arith.constant 0 : i32
    %c0_i32_0 = arith.constant 0 : i32
    %c0_i32_1 = arith.constant 0 : i32
    return %arg0, %c0_i32, %c0_i32_0 : i32, i32, i32
  }
  func.func @transform_1(%arg0: i32) -> (i32, i32, i32) {
    %c0_i32 = arith.constant 0 : i32
    %c0_i32_0 = arith.constant 0 : i32
    %c0_i32_1 = arith.constant 0 : i32
    return %arg0, %c0_i32, %c0_i32_0 : i32, i32, i32
  }
  func.func @transform_2(%arg0: i32) -> (i32, i32) {
    %c0_i32 = arith.constant 0 : i32
    %c0_i32_0 = arith.constant 0 : i32
    %c0_i32_1 = arith.constant 0 : i32
    return %c0_i32, %c0_i32_0 : i32, i32
  }
  func.func @transform_3(%arg0: i32) -> (i32, i32) {
    %c0_i32 = arith.constant 0 : i32
    %c0_i32_0 = arith.constant 0 : i32
    %c0_i32_1 = arith.constant 0 : i32
    return %c0_i32, %c0_i32_0 : i32, i32
  }
  func.func @transform_4(%arg0: i32) -> (i32, i32) {
    %c0_i32 = arith.constant 0 : i32
    %c0_i32_0 = arith.constant 0 : i32
    %c0_i32_1 = arith.constant 0 : i32
    return %c0_i32, %c0_i32_0 : i32, i32
  }
  func.func @transform_5(%arg0: i32) -> (i32, i32) {
    %c0_i32 = arith.constant 0 : i32
    %c0_i32_0 = arith.constant 0 : i32
    %c0_i32_1 = arith.constant 0 : i32
    return %c0_i32, %c0_i32_0 : i32, i32
  }
  func.func @transform_6(%arg0: i32) -> (i32, i32) {
    %c0_i32 = arith.constant 0 : i32
    %c0_i32_0 = arith.constant 0 : i32
    %c0_i32_1 = arith.constant 0 : i32
    return %c0_i32, %c0_i32_0 : i32, i32
  }
}

</mosaic_0001>

<llo_original>
// kernel: cnn_lstm_forward.2
$region0: #{cnn_lstm_forward.2}
  #allocation0 [shape = 'u32[]', space=smem, size = 0x4, offset = 0x4, fixed_abs, tag = 'smem constant byte address 0x4 - core index']
  #allocation1 [shape = 'u32[144,128]{1,0:T(1,128)}', space=vmem, size = 0x12000, scoped, tag = 'internal scratch']
  %s0 = inlined_call_operand.vmem [shape: f32[288,36], index: 0, kind: input, shape index: {}]
  %s1 = inlined_call_operand.hbm [shape: f32[36,100], index: 1, kind: input, shape index: {}]
  %s2 = inlined_call_operand.hbm [shape: f32[1,100], index: 2, kind: input, shape index: {}]
  %s3 = inlined_call_operand.vmem [shape: bf16[288,100], index: 3, kind: output, shape index: {}]
  %s4 = sld [smem:[#allocation0]]
  $region30: #{cnn_lstm_forward.2} parent=0
    _
  %s6 = ssub.s32 1, %s4
  %s7 = scalar_select 0, %s6, %s4
  $region1: #{cnn_lstm_forward.2} parent=0
    #allocation2 [shape = 'u8[20480]{0}', space=vmem, size = 0x5000, scoped, tag = 'input window, operand 1, single buffered']
    #allocation3 [shape = 's32[1]{0}', space=sflag, size = 0x4, scoped, tag = 'scoped memory for cnn_lstm_forward.2']
    #allocation4 [shape = 'u8[512]{0}', space=vmem, size = 0x400, scoped, tag = 'input window, operand 2, single buffered']
    #allocation5 [shape = 's32[1]{0}', space=sflag, size = 0x4, scoped, tag = 'scoped memory for cnn_lstm_forward.2']
    %8 = vsyncpa [#allocation3], 0
    %9 = vsyncpa [#allocation5], 0
    // Predicated region
    $region2: #{cnn_lstm_forward.2} parent=1 // pred_check
      _
    $region3: #{cnn_lstm_forward.2} parent=1 // pred_check_branch
      %11 = sbr.rel (0) target = $region5
    $region4: #{cnn_lstm_forward.2} parent=1 // pred_region
      _
    $region5: #{cnn_lstm_forward.2} parent=1 // pred_fallthru
      _
    // Predicated region
    $region6: #{cnn_lstm_forward.2} parent=1 // pred_check
      _
    $region7: #{cnn_lstm_forward.2} parent=1 // pred_check_branch
      %13 = sbr.rel (0) target = $region9
    $region8: #{cnn_lstm_forward.2} parent=1 // pred_region
      %s15 = ssub.s32 640, 640
      %16 = vsyncadd [#allocation3], %s15
      %s17 = sshll.u32 [#allocation2], 4
      %s18 = int_to_ptr.vmem [resolvable:$true] %s17
      %23 = dma.hbm_to_vmem [thread:$0]  %s1, 640, %s18, [#allocation3], 128, 128, 8
    $region9: #{cnn_lstm_forward.2} parent=1 // pred_fallthru
      _
    // Predicated region
    $region10: #{cnn_lstm_forward.2} parent=1 // pred_check
      _
    $region11: #{cnn_lstm_forward.2} parent=1 // pred_check_branch
      %25 = sbr.rel (0) target = $region13
    $region12: #{cnn_lstm_forward.2} parent=1 // pred_region
      %s27 = ssub.s32 16, 16
      %28 = vsyncadd [#allocation5], %s27
      %s30 = sshll.u32 [#allocation4], 4
      %s31 = int_to_ptr.vmem [resolvable:$true] %s30
      %33 = dma.hbm_to_vmem [thread:$0]  %s2, 16, %s31, [#allocation5]
    $region13: #{cnn_lstm_forward.2} parent=1 // pred_fallthru
      _
    // Predicated region
    $region14: #{cnn_lstm_forward.2} parent=1 // pred_check
      _
    $region15: #{cnn_lstm_forward.2} parent=1 // pred_check_branch
      %35 = sbr.rel (0) target = $region17
    $region16: #{cnn_lstm_forward.2} parent=1 // pred_region
      %36 = dma.done [#allocation3], 640
    $region17: #{cnn_lstm_forward.2} parent=1 // pred_fallthru
      _
    // Predicated region
    $region18: #{cnn_lstm_forward.2} parent=1 // pred_check
      _
    $region19: #{cnn_lstm_forward.2} parent=1 // pred_check_branch
      %38 = sbr.rel (0) target = $region21
    $region20: #{cnn_lstm_forward.2} parent=1 // pred_region
      %39 = dma.done [#allocation5], 16
    $region21: #{cnn_lstm_forward.2} parent=1 // pred_fallthru
      _
    %v40 = vld [vmem:[%s0] sm:$0xff]
    %v41 = vld [vmem:[%s0 + $0x8] sm:$0xff]
    %v42 = vld [vmem:[%s0 + $0x10] sm:$0xff]
    %v43 = vld [vmem:[%s0 + $0x18] sm:$0xff]
    %v44 = vld [vmem:[%s0 + $0x20] sm:$0xff]
    %v45 = vld [vmem:[%s0 + $0x28] sm:$0xff]
    %v46 = vld [vmem:[%s0 + $0x30] sm:$0xff]
    %v47 = vld [vmem:[%s0 + $0x38] sm:$0xff]
    %v48 = vld [vmem:[%s0 + $0x40] sm:$0xff]
    %v49 = vld [vmem:[%s0 + $0x48] sm:$0xff]
    %v50 = vld [vmem:[%s0 + $0x50] sm:$0xff]
    %v51 = vld [vmem:[%s0 + $0x58] sm:$0xff]
    %v52 = vld [vmem:[%s0 + $0x60] sm:$0xff]
    %v53 = vld [vmem:[%s0 + $0x68] sm:$0xff]
    %v54 = vld [vmem:[%s0 + $0x70] sm:$0xff]
    %v55 = vld [vmem:[%s0 + $0x78] sm:$0xff]
    %v56 = vld [vmem:[%s0 + $0x80] sm:$0xff]
    %v57 = vld [vmem:[%s0 + $0x88] sm:$0xff]
    %v58 = vld [vmem:[%s0 + $0x90] sm:$0xff]
    %v59 = vld [vmem:[%s0 + $0x98] sm:$0xff]
    %v60 = vld [vmem:[%s0 + $0xa0] sm:$0xff]
    %v61 = vld [vmem:[%s0 + $0xa8] sm:$0xff]
    %v62 = vld [vmem:[%s0 + $0xb0] sm:$0xff]
    %v63 = vld [vmem:[%s0 + $0xb8] sm:$0xff]
    %v64 = vld [vmem:[%s0 + $0xc0] sm:$0xff]
    %v65 = vld [vmem:[%s0 + $0xc8] sm:$0xff]
    %v66 = vld [vmem:[%s0 + $0xd0] sm:$0xff]
    %v67 = vld [vmem:[%s0 + $0xd8] sm:$0xff]
    %v68 = vld [vmem:[%s0 + $0xe0] sm:$0xff]
    %v69 = vld [vmem:[%s0 + $0xe8] sm:$0xff]
    %v70 = vld [vmem:[%s0 + $0xf0] sm:$0xff]
    %v71 = vld [vmem:[%s0 + $0xf8] sm:$0xff]
    %v72 = vld [vmem:[%s0 + $0x100] sm:$0xff]
    %v73 = vld [vmem:[%s0 + $0x108] sm:$0xff]
    %v74 = vld [vmem:[%s0 + $0x110] sm:$0xff]
    %v75 = vld [vmem:[%s0 + $0x118] sm:$0xff]
    %v76 = vld [vmem:[#allocation2] sm:$0xff]
    %v77 = vld [vmem:[#allocation2 + $0x8] sm:$0xff]
    %v78 = vld [vmem:[#allocation2 + $0x10] sm:$0xff]
    %v79 = vld [vmem:[#allocation2 + $0x18] sm:$0xff]
    %v80 = vld [vmem:[#allocation2 + $0x20] sm:$0xf]
    %v81 = vld [vmem:[#allocation4] sm:$0x1]
    %v83 = vlaneseq
    %v84 = vshrl.u32 %v83, 7
    %v85 = vsub.s32 0, %v84
    %v86 = vrot.slane %v81, %v85
    %vm88 = vcmask 293888
    %v90 = vsel %vm88, %v40, 0
    %v93 = vsel %vm88, %v41, 0
    %v96 = vsel %vm88, %v42, 0
    %v99 = vsel %vm88, %v43, 0
    %v102 = vsel %vm88, %v44, 0
    %v105 = vsel %vm88, %v45, 0
    %v108 = vsel %vm88, %v46, 0
    %v111 = vsel %vm88, %v47, 0
    %v114 = vsel %vm88, %v48, 0
    %v117 = vsel %vm88, %v49, 0
    %v120 = vsel %vm88, %v50, 0
    %v123 = vsel %vm88, %v51, 0
    %v126 = vsel %vm88, %v52, 0
    %v129 = vsel %vm88, %v53, 0
    %v132 = vsel %vm88, %v54, 0
    %v135 = vsel %vm88, %v55, 0
    %v138 = vsel %vm88, %v56, 0
    %v141 = vsel %vm88, %v57, 0
    %v144 = vsel %vm88, %v58, 0
    %v147 = vsel %vm88, %v59, 0
    %v150 = vsel %vm88, %v60, 0
    %v153 = vsel %vm88, %v61, 0
    %v156 = vsel %vm88, %v62, 0
    %v159 = vsel %vm88, %v63, 0
    %v162 = vsel %vm88, %v64, 0
    %v165 = vsel %vm88, %v65, 0
    %v168 = vsel %vm88, %v66, 0
    %v171 = vsel %vm88, %v67, 0
    %v174 = vsel %vm88, %v68, 0
    %v177 = vsel %vm88, %v69, 0
    %v180 = vsel %vm88, %v70, 0
    %v183 = vsel %vm88, %v71, 0
    %v186 = vsel %vm88, %v72, 0
    %v189 = vsel %vm88, %v73, 0
    %v192 = vsel %vm88, %v74, 0
    %v195 = vsel %vm88, %v75, 0
    %vm197 = vcmask 1043456
    %v199 = vsel %vm197, %v80, 0
    %201 = vmatprep.subr.mxu0 0.0
    %202 = vmatpush1.msra.mxu0 0.0
    %203 = vmatprep.subr.mxu0 0.0
    %204 = vmatpush1.msra.mxu0 0.0
    %205 = vmatprep.subr.mxu0 0.0
    %206 = vmatpush1.msra.mxu0 0.0
    %207 = vmatprep.subr.mxu0 0.0
    %208 = vmatpush1.msra.mxu0 0.0
    %209 = vmatprep.subr.mxu0 0.0
    %210 = vmatpush1.msra.mxu0 0.0
    %211 = vmatprep.subr.mxu0 0.0
    %212 = vmatpush1.msra.mxu0 0.0
    %213 = vmatprep.subr.mxu0 0.0
    %214 = vmatpush1.msra.mxu0 0.0
    %215 = vmatprep.subr.mxu0 0.0
    %216 = vmatpush1.msra.mxu0 0.0
    %217 = vmatprep.subr.mxu0 0.0
    %218 = vmatpush1.msra.mxu0 0.0
    %219 = vmatprep.subr.mxu0 0.0
    %220 = vmatpush1.msra.mxu0 0.0
    %221 = vmatprep.subr.mxu0 0.0
    %222 = vmatpush1.msra.mxu0 0.0
    %223 = vmatprep.subr.mxu0 0.0
    %224 = vmatpush1.msra.mxu0 %v199
    %225 = vmatprep.subr.mxu0 0.0
    %226 = vmatpush1.msra.mxu0 %v79
    %227 = vmatprep.subr.mxu0 0.0
    %228 = vmatpush1.msra.mxu0 %v78
    %229 = vmatprep.subr.mxu0 0.0
    %230 = vmatpush1.msra.mxu0 %v77
    %231 = vmatprep.subr.mxu0 0.0
    %232 = vmatpush1.msra.mxu0 %v76
    %233 = vmatprep.subr.mxu0 0.0
    %234 = vmatpush2.msra.mxu0 0.0
    %235 = vmatprep.subr.mxu0 0.0
    %236 = vmatpush2.msra.mxu0 0.0
    %237 = vmatprep.subr.mxu0 0.0
    %238 = vmatpush2.msra.mxu0 0.0
    %239 = vmatprep.subr.mxu0 0.0
    %240 = vmatpush2.msra.mxu0 0.0
    %241 = vmatprep.subr.mxu0 0.0
    %242 = vmatpush2.msra.mxu0 0.0
    %243 = vmatprep.subr.mxu0 0.0
    %244 = vmatpush2.msra.mxu0 0.0
    %245 = vmatprep.subr.mxu0 0.0
    %246 = vmatpush2.msra.mxu0 0.0
    %247 = vmatprep.subr.mxu0 0.0
    %248 = vmatpush2.msra.mxu0 0.0
    %249 = vmatprep.subr.mxu0 0.0
    %250 = vmatpush2.msra.mxu0 0.0
    %251 = vmatprep.subr.mxu0 0.0
    %252 = vmatpush2.msra.mxu0 0.0
    %253 = vmatprep.subr.mxu0 0.0
    %254 = vmatpush2.msra.mxu0 0.0
    %255 = vmatprep.subr.mxu0 0.0
    %256 = vmatpush2.msra.mxu0 0.0
    %257 = vmatprep.subr.mxu0 0.0
    %258 = vmatpush2.msra.mxu0 0.0
    %259 = vmatprep.subr.mxu0 0.0
    %260 = vmatpush2.msra.mxu0 0.0
    %261 = vmatprep.subr.mxu0 0.0
    %262 = vmatpush2.msra.mxu0 0.0
    %263 = vmatprep.subr.mxu0 0.0
    %264 = vmatpush2.msra.mxu0 0.0
    %265 = vmatprep.mubr.f32.mxu0 0.0
    %266 = vmatmul.mubr.f32.gmra.mxu0 %v90
    %v267 = vpop.f32.mrf.mxu0
    %v268 = vadd.f32 %v86, %v267
    %v269 = vpop.f32.mrf.mxu0
    %270 = vmatprep.mubr.f32.mxu0 0.0
    %271 = vmatmul.mubr.f32.gmra.mxu0 %v93
    %v272 = vpop.f32.mrf.mxu0
    %v273 = vadd.f32 %v86, %v272
    %v274 = vpop.f32.mrf.mxu0
    %275 = vmatprep.mubr.f32.mxu0 0.0
    %276 = vmatmul.mubr.f32.gmra.mxu0 %v96
    %v277 = vpop.f32.mrf.mxu0
    %v278 = vadd.f32 %v86, %v277
    %v279 = vpop.f32.mrf.mxu0
    %280 = vmatprep.mubr.f32.mxu0 0.0
    %281 = vmatmul.mubr.f32.gmra.mxu0 %v99
    %v282 = vpop.f32.mrf.mxu0
    %v283 = vadd.f32 %v86, %v282
    %v284 = vpop.f32.mrf.mxu0
    %285 = vmatprep.mubr.f32.mxu0 0.0
    %286 = vmatmul.mubr.f32.gmra.mxu0 %v102
    %v287 = vpop.f32.mrf.mxu0
    %v288 = vadd.f32 %v86, %v287
    %v289 = vpop.f32.mrf.mxu0
    %290 = vmatprep.mubr.f32.mxu0 0.0
    %291 = vmatmul.mubr.f32.gmra.mxu0 %v105
    %v292 = vpop.f32.mrf.mxu0
    %v293 = vadd.f32 %v86, %v292
    %v294 = vpop.f32.mrf.mxu0
    %295 = vmatprep.mubr.f32.mxu0 0.0
    %296 = vmatmul.mubr.f32.gmra.mxu0 %v108
    %v297 = vpop.f32.mrf.mxu0
    %v298 = vadd.f32 %v86, %v297
    %v299 = vpop.f32.mrf.mxu0
    %300 = vmatprep.mubr.f32.mxu0 0.0
    %301 = vmatmul.mubr.f32.gmra.mxu0 %v111
    %v302 = vpop.f32.mrf.mxu0
    %v303 = vadd.f32 %v86, %v302
    %v304 = vpop.f32.mrf.mxu0
    %305 = vmatprep.mubr.f32.mxu0 0.0
    %306 = vmatmul.mubr.f32.gmra.mxu0 %v114
    %v307 = vpop.f32.mrf.mxu0
    %v308 = vadd.f32 %v86, %v307
    %v309 = vpop.f32.mrf.mxu0
    %310 = vmatprep.mubr.f32.mxu0 0.0
    %311 = vmatmul.mubr.f32.gmra.mxu0 %v117
    %v312 = vpop.f32.mrf.mxu0
    %v313 = vadd.f32 %v86, %v312
    %v314 = vpop.f32.mrf.mxu0
    %315 = vmatprep.mubr.f32.mxu0 0.0
    %316 = vmatmul.mubr.f32.gmra.mxu0 %v120
    %v317 = vpop.f32.mrf.mxu0
    %v318 = vadd.f32 %v86, %v317
    %v319 = vpop.f32.mrf.mxu0
    %320 = vmatprep.mubr.f32.mxu0 0.0
    %321 = vmatmul.mubr.f32.gmra.mxu0 %v123
    %v322 = vpop.f32.mrf.mxu0
    %v323 = vadd.f32 %v86, %v322
    %v324 = vpop.f32.mrf.mxu0
    %325 = vmatprep.mubr.f32.mxu0 0.0
    %326 = vmatmul.mubr.f32.gmra.mxu0 %v126
    %v327 = vpop.f32.mrf.mxu0
    %v328 = vadd.f32 %v86, %v327
    %v329 = vpop.f32.mrf.mxu0
    %330 = vmatprep.mubr.f32.mxu0 0.0
    %331 = vmatmul.mubr.f32.gmra.mxu0 %v129
    %v332 = vpop.f32.mrf.mxu0
    %v333 = vadd.f32 %v86, %v332
    %v334 = vpop.f32.mrf.mxu0
    %335 = vmatprep.mubr.f32.mxu0 0.0
    %336 = vmatmul.mubr.f32.gmra.mxu0 %v132
    %v337 = vpop.f32.mrf.mxu0
    %v338 = vadd.f32 %v86, %v337
    %v339 = vpop.f32.mrf.mxu0
    %340 = vmatprep.mubr.f32.mxu0 0.0
    %341 = vmatmul.mubr.f32.gmra.mxu0 %v135
    %v342 = vpop.f32.mrf.mxu0
    %v343 = vadd.f32 %v86, %v342
    %v344 = vpop.f32.mrf.mxu0
    %345 = vmatprep.mubr.f32.mxu0 0.0
    %346 = vmatmul.mubr.f32.gmra.mxu0 %v138
    %v347 = vpop.f32.mrf.mxu0
    %v348 = vadd.f32 %v86, %v347
    %v349 = vpop.f32.mrf.mxu0
    %350 = vmatprep.mubr.f32.mxu0 0.0
    %351 = vmatmul.mubr.f32.gmra.mxu0 %v141
    %v352 = vpop.f32.mrf.mxu0
    %v353 = vadd.f32 %v86, %v352
    %v354 = vpop.f32.mrf.mxu0
    %355 = vmatprep.mubr.f32.mxu0 0.0
    %356 = vmatmul.mubr.f32.gmra.mxu0 %v144
    %v357 = vpop.f32.mrf.mxu0
    %v358 = vadd.f32 %v86, %v357
    %v359 = vpop.f32.mrf.mxu0
    %360 = vmatprep.mubr.f32.mxu0 0.0
    %361 = vmatmul.mubr.f32.gmra.mxu0 %v147
    %v362 = vpop.f32.mrf.mxu0
    %v363 = vadd.f32 %v86, %v362
    %v364 = vpop.f32.mrf.mxu0
    %365 = vmatprep.mubr.f32.mxu0 0.0
    %366 = vmatmul.mubr.f32.gmra.mxu0 %v150
    %v367 = vpop.f32.mrf.mxu0
    %v368 = vadd.f32 %v86, %v367
    %v369 = vpop.f32.mrf.mxu0
    %370 = vmatprep.mubr.f32.mxu0 0.0
    %371 = vmatmul.mubr.f32.gmra.mxu0 %v153
    %v372 = vpop.f32.mrf.mxu0
    %v373 = vadd.f32 %v86, %v372
    %v374 = vpop.f32.mrf.mxu0
    %375 = vmatprep.mubr.f32.mxu0 0.0
    %376 = vmatmul.mubr.f32.gmra.mxu0 %v156
    %v377 = vpop.f32.mrf.mxu0
    %v378 = vadd.f32 %v86, %v377
    %v379 = vpop.f32.mrf.mxu0
    %380 = vmatprep.mubr.f32.mxu0 0.0
    %381 = vmatmul.mubr.f32.gmra.mxu0 %v159
    %v382 = vpop.f32.mrf.mxu0
    %v383 = vadd.f32 %v86, %v382
    %v384 = vpop.f32.mrf.mxu0
    %385 = vmatprep.mubr.f32.mxu0 0.0
    %386 = vmatmul.mubr.f32.gmra.mxu0 %v162
    %v387 = vpop.f32.mrf.mxu0
    %v388 = vadd.f32 %v86, %v387
    %v389 = vpop.f32.mrf.mxu0
    %390 = vmatprep.mubr.f32.mxu0 0.0
    %391 = vmatmul.mubr.f32.gmra.mxu0 %v165
    %v392 = vpop.f32.mrf.mxu0
    %v393 = vadd.f32 %v86, %v392
    %v394 = vpop.f32.mrf.mxu0
    %395 = vmatprep.mubr.f32.mxu0 0.0
    %396 = vmatmul.mubr.f32.gmra.mxu0 %v168
    %v397 = vpop.f32.mrf.mxu0
    %v398 = vadd.f32 %v86, %v397
    %v399 = vpop.f32.mrf.mxu0
    %400 = vmatprep.mubr.f32.mxu0 0.0
    %401 = vmatmul.mubr.f32.gmra.mxu0 %v171
    %v402 = vpop.f32.mrf.mxu0
    %v403 = vadd.f32 %v86, %v402
    %v404 = vpop.f32.mrf.mxu0
    %405 = vmatprep.mubr.f32.mxu0 0.0
    %406 = vmatmul.mubr.f32.gmra.mxu0 %v174
    %v407 = vpop.f32.mrf.mxu0
    %v408 = vadd.f32 %v86, %v407
    %v409 = vpop.f32.mrf.mxu0
    %410 = vmatprep.mubr.f32.mxu0 0.0
    %411 = vmatmul.mubr.f32.gmra.mxu0 %v177
    %v412 = vpop.f32.mrf.mxu0
    %v413 = vadd.f32 %v86, %v412
    %v414 = vpop.f32.mrf.mxu0
    %415 = vmatprep.mubr.f32.mxu0 0.0
    %416 = vmatmul.mubr.f32.gmra.mxu0 %v180
    %v417 = vpop.f32.mrf.mxu0
    %v418 = vadd.f32 %v86, %v417
    %v419 = vpop.f32.mrf.mxu0
    %420 = vmatprep.mubr.f32.mxu0 0.0
    %421 = vmatmul.mubr.f32.gmra.mxu0 %v183
    %v422 = vpop.f32.mrf.mxu0
    %v423 = vadd.f32 %v86, %v422
    %v424 = vpop.f32.mrf.mxu0
    %425 = vmatprep.mubr.f32.mxu0 0.0
    %426 = vmatmul.mubr.f32.gmra.mxu0 %v186
    %v427 = vpop.f32.mrf.mxu0
    %v428 = vadd.f32 %v86, %v427
    %v429 = vpop.f32.mrf.mxu0
    %430 = vmatprep.mubr.f32.mxu0 0.0
    %431 = vmatmul.mubr.f32.gmra.mxu0 %v189
    %v432 = vpop.f32.mrf.mxu0
    %v433 = vadd.f32 %v86, %v432
    %v434 = vpop.f32.mrf.mxu0
    %435 = vmatprep.mubr.f32.mxu0 0.0
    %436 = vmatmul.mubr.f32.gmra.mxu0 %v192
    %v437 = vpop.f32.mrf.mxu0
    %v438 = vadd.f32 %v86, %v437
    %v439 = vpop.f32.mrf.mxu0
    %440 = vmatprep.mubr.f32.mxu0 0.0
    %441 = vmatmul.mubr.f32.gmra.mxu0 %v195
    %v442 = vpop.f32.mrf.mxu0
    %v443 = vadd.f32 %v86, %v442
    %v444 = vpop.f32.mrf.mxu0
    %445 = vdwg.mxu0
    %v446 = vmax.f32 %v268, 0.0
    %v447 = vmax.f32 %v273, 0.0
    %v448 = vmax.f32 %v278, 0.0
    %v449 = vmax.f32 %v283, 0.0
    %v450 = vmax.f32 %v288, 0.0
    %v451 = vmax.f32 %v293, 0.0
    %v452 = vmax.f32 %v298, 0.0
    %v453 = vmax.f32 %v303, 0.0
    %v454 = vmax.f32 %v308, 0.0
    %v455 = vmax.f32 %v313, 0.0
    %v456 = vmax.f32 %v318, 0.0
    %v457 = vmax.f32 %v323, 0.0
    %v458 = vmax.f32 %v328, 0.0
    %v459 = vmax.f32 %v333, 0.0
    %v460 = vmax.f32 %v338, 0.0
    %v461 = vmax.f32 %v343, 0.0
    %v462 = vmax.f32 %v348, 0.0
    %v463 = vmax.f32 %v353, 0.0
    %v464 = vmax.f32 %v358, 0.0
    %v465 = vmax.f32 %v363, 0.0
    %v466 = vmax.f32 %v368, 0.0
    %v467 = vmax.f32 %v373, 0.0
    %v468 = vmax.f32 %v378, 0.0
    %v469 = vmax.f32 %v383, 0.0
    %v470 = vmax.f32 %v388, 0.0
    %v471 = vmax.f32 %v393, 0.0
    %v472 = vmax.f32 %v398, 0.0
    %v473 = vmax.f32 %v403, 0.0
    %v474 = vmax.f32 %v408, 0.0
    %v475 = vmax.f32 %v413, 0.0
    %v476 = vmax.f32 %v418, 0.0
    %v477 = vmax.f32 %v423, 0.0
    %v478 = vmax.f32 %v428, 0.0
    %v479 = vmax.f32 %v433, 0.0
    %v480 = vmax.f32 %v438, 0.0
    %v481 = vmax.f32 %v443, 0.0
    %v482 = vpack.c.bf16 %v447, %v446
    %v483 = vpack.c.bf16 %v449, %v448
    %v484 = vpack.c.bf16 %v451, %v450
    %v485 = vpack.c.bf16 %v453, %v452
    %v486 = vpack.c.bf16 %v455, %v454
    %v487 = vpack.c.bf16 %v457, %v456
    %v488 = vpack.c.bf16 %v459, %v458
    %v489 = vpack.c.bf16 %v461, %v460
    %v490 = vpack.c.bf16 %v463, %v462
    %v491 = vpack.c.bf16 %v465, %v464
    %v492 = vpack.c.bf16 %v467, %v466
    %v493 = vpack.c.bf16 %v469, %v468
    %v494 = vpack.c.bf16 %v471, %v470
    %v495 = vpack.c.bf16 %v473, %v472
    %v496 = vpack.c.bf16 %v475, %v474
    %v497 = vpack.c.bf16 %v477, %v476
    %v498 = vpack.c.bf16 %v479, %v478
    %v499 = vpack.c.bf16 %v481, %v480
    %v518 = vunpack.c.l.b16 %v482
    %v519 = vunpack.c.h.b16 %v482
    %v520 = vunpack.c.l.b16 %v483
    %v521 = vunpack.c.h.b16 %v483
    %v522 = vunpack.c.l.b16 %v484
    %v523 = vunpack.c.h.b16 %v484
    %v524 = vunpack.c.l.b16 %v485
    %v525 = vunpack.c.h.b16 %v485
    %v526 = vunpack.c.l.b16 %v486
    %v527 = vunpack.c.h.b16 %v486
    %v528 = vunpack.c.l.b16 %v487
    %v529 = vunpack.c.h.b16 %v487
    %v530 = vunpack.c.l.b16 %v488
    %v531 = vunpack.c.h.b16 %v488
    %v532 = vunpack.c.l.b16 %v489
    %v533 = vunpack.c.h.b16 %v489
    %v534 = vunpack.c.l.b16 %v490
    %v535 = vunpack.c.h.b16 %v490
    %v536 = vunpack.c.l.b16 %v491
    %v537 = vunpack.c.h.b16 %v491
    %v538 = vunpack.c.l.b16 %v492
    %v539 = vunpack.c.h.b16 %v492
    %v540 = vunpack.c.l.b16 %v493
    %v541 = vunpack.c.h.b16 %v493
    %v542 = vunpack.c.l.b16 %v494
    %v543 = vunpack.c.h.b16 %v494
    %v544 = vunpack.c.l.b16 %v495
    %v545 = vunpack.c.h.b16 %v495
    %v546 = vunpack.c.l.b16 %v496
    %v547 = vunpack.c.h.b16 %v496
    %v548 = vunpack.c.l.b16 %v497
    %v549 = vunpack.c.h.b16 %v497
    %v550 = vunpack.c.l.b16 %v498
    %v551 = vunpack.c.h.b16 %v498
    %v552 = vunpack.c.l.b16 %v499
    %v553 = vunpack.c.h.b16 %v499
    %v554 = vpack.c.b16 %v518, %v518
    %v555 = vpack.c.b16 %v519, %v519
    %v556 = vpack.c.b16 %v520, %v520
    %v557 = vpack.c.b16 %v521, %v521
    %v558 = vpack.c.b16 %v522, %v522
    %v559 = vpack.c.b16 %v523, %v523
    %v560 = vpack.c.b16 %v524, %v524
    %v561 = vpack.c.b16 %v525, %v525
    %v562 = vpack.c.b16 %v526, %v526
    %v563 = vpack.c.b16 %v527, %v527
    %v564 = vpack.c.b16 %v528, %v528
    %v565 = vpack.c.b16 %v529, %v529
    %v566 = vpack.c.b16 %v530, %v530
    %v567 = vpack.c.b16 %v531, %v531
    %v568 = vpack.c.b16 %v532, %v532
    %v569 = vpack.c.b16 %v533, %v533
    %v570 = vpack.c.b16 %v534, %v534
    %v571 = vpack.c.b16 %v535, %v535
    %v572 = vpack.c.b16 %v536, %v536
    %v573 = vpack.c.b16 %v537, %v537
    %v574 = vpack.c.b16 %v538, %v538
    %v575 = vpack.c.b16 %v539, %v539
    %v576 = vpack.c.b16 %v540, %v540
    %v577 = vpack.c.b16 %v541, %v541
    %v578 = vpack.c.b16 %v542, %v542
    %v579 = vpack.c.b16 %v543, %v543
    %v580 = vpack.c.b16 %v544, %v544
    %v581 = vpack.c.b16 %v545, %v545
    %v582 = vpack.c.b16 %v546, %v546
    %v583 = vpack.c.b16 %v547, %v547
    %v584 = vpack.c.b16 %v548, %v548
    %v585 = vpack.c.b16 %v549, %v549
    %v586 = vpack.c.b16 %v550, %v550
    %v587 = vpack.c.b16 %v551, %v551
    %v588 = vpack.c.b16 %v552, %v552
    %v589 = vpack.c.b16 %v553, %v553
    %vm626 = vcmask 814080
    %627 = vst.msk [vmem:[%s3] sm:$0xf] %vm626, %v554
    %628 = vst.msk [vmem:[%s3 + $0x4] sm:$0xf] %vm626, %v555
    %629 = vst.msk [vmem:[%s3 + $0x8] sm:$0xf] %vm626, %v556
    %630 = vst.msk [vmem:[%s3 + $0xc] sm:$0xf] %vm626, %v557
    %631 = vst.msk [vmem:[%s3 + $0x10] sm:$0xf] %vm626, %v558
    %632 = vst.msk [vmem:[%s3 + $0x14] sm:$0xf] %vm626, %v559
    %633 = vst.msk [vmem:[%s3 + $0x18] sm:$0xf] %vm626, %v560
    %634 = vst.msk [vmem:[%s3 + $0x1c] sm:$0xf] %vm626, %v561
    %635 = vst.msk [vmem:[%s3 + $0x20] sm:$0xf] %vm626, %v562
    %636 = vst.msk [vmem:[%s3 + $0x24] sm:$0xf] %vm626, %v563
    %637 = vst.msk [vmem:[%s3 + $0x28] sm:$0xf] %vm626, %v564
    %638 = vst.msk [vmem:[%s3 + $0x2c] sm:$0xf] %vm626, %v565
    %639 = vst.msk [vmem:[%s3 + $0x30] sm:$0xf] %vm626, %v566
    %640 = vst.msk [vmem:[%s3 + $0x34] sm:$0xf] %vm626, %v567
    %641 = vst.msk [vmem:[%s3 + $0x38] sm:$0xf] %vm626, %v568
    %642 = vst.msk [vmem:[%s3 + $0x3c] sm:$0xf] %vm626, %v569
    %643 = vst.msk [vmem:[%s3 + $0x40] sm:$0xf] %vm626, %v570
    %644 = vst.msk [vmem:[%s3 + $0x44] sm:$0xf] %vm626, %v571
    %645 = vst.msk [vmem:[%s3 + $0x48] sm:$0xf] %vm626, %v572
    %646 = vst.msk [vmem:[%s3 + $0x4c] sm:$0xf] %vm626, %v573
    %647 = vst.msk [vmem:[%s3 + $0x50] sm:$0xf] %vm626, %v574
    %648 = vst.msk [vmem:[%s3 + $0x54] sm:$0xf] %vm626, %v575
    %649 = vst.msk [vmem:[%s3 + $0x58] sm:$0xf] %vm626, %v576
    %650 = vst.msk [vmem:[%s3 + $0x5c] sm:$0xf] %vm626, %v577
    %651 = vst.msk [vmem:[%s3 + $0x60] sm:$0xf] %vm626, %v578
    %652 = vst.msk [vmem:[%s3 + $0x64] sm:$0xf] %vm626, %v579
    %653 = vst.msk [vmem:[%s3 + $0x68] sm:$0xf] %vm626, %v580
    %654 = vst.msk [vmem:[%s3 + $0x6c] sm:$0xf] %vm626, %v581
    %655 = vst.msk [vmem:[%s3 + $0x70] sm:$0xf] %vm626, %v582
    %656 = vst.msk [vmem:[%s3 + $0x74] sm:$0xf] %vm626, %v583
    %657 = vst.msk [vmem:[%s3 + $0x78] sm:$0xf] %vm626, %v584
    %658 = vst.msk [vmem:[%s3 + $0x7c] sm:$0xf] %vm626, %v585
    %659 = vst.msk [vmem:[%s3 + $0x80] sm:$0xf] %vm626, %v586
    %660 = vst.msk [vmem:[%s3 + $0x84] sm:$0xf] %vm626, %v587
    %661 = vst.msk [vmem:[%s3 + $0x88] sm:$0xf] %vm626, %v588
    %662 = vst.msk [vmem:[%s3 + $0x8c] sm:$0xf] %vm626, %v589
    // Predicated region
    $region22: #{cnn_lstm_forward.2} parent=1 // pred_check
      _
    $region23: #{cnn_lstm_forward.2} parent=1 // pred_check_branch
      %664 = sbr.rel (0) target = $region25
    $region24: #{cnn_lstm_forward.2} parent=1 // pred_region
      _
    $region25: #{cnn_lstm_forward.2} parent=1 // pred_fallthru
      _
    // Predicated region
    $region26: #{cnn_lstm_forward.2} parent=1 // pred_check
      _
    $region27: #{cnn_lstm_forward.2} parent=1 // pred_check_branch
      %666 = sbr.rel (0) target = $region29
    $region28: #{cnn_lstm_forward.2} parent=1 // pred_region
      _
    $region29: #{cnn_lstm_forward.2} parent=1 // pred_fallthru
      _
    %667 = vsyncpa [#allocation3], 1
    %668 = vsyncpa [#allocation5], 1

// kernel: cnn_lstm_forward.3
$region0: #{cnn_lstm_forward.3}
  #allocation0 [shape = 'u32[]', space=smem, size = 0x4, offset = 0x4, fixed_abs, tag = 'smem constant byte address 0x4 - core index']
  #allocation1 [shape = 'u32[144,128]{1,0:T(1,128)}', space=vmem, size = 0x12000, scoped, tag = 'internal scratch']
  #allocation2 [shape = 'f32[2,50]{1,0:T(2,128)}', space=vmem, size = 0x400, scoped, tag = 'scratch operand']
  %s0 = inlined_call_operand.vmem [shape: bf16[4,2,3600], index: 0, kind: input, shape index: {}]
  %s1 = inlined_call_operand.vmem [shape: bf16[4,3600,50], index: 1, kind: input, shape index: {}]
  %s2 = inlined_call_operand.vmem [shape: bf16[50,896], index: 2, kind: input, shape index: {}]
  %s3 = inlined_call_operand.vmem [shape: bf16[128,384], index: 3, kind: input, shape index: {}]
  %s4 = inlined_call_operand.vmem [shape: bf16[256,640], index: 4, kind: input, shape index: {}]
  %s5 = inlined_call_operand.vmem [shape: f32[1,1408], index: 5, kind: input, shape index: {}]
  %s6 = inlined_call_operand.hbm [shape: f32[2,512], index: 6, kind: output, shape index: {}]
  %s7 = sld [smem:[#allocation0]]
  $region65: #{cnn_lstm_forward.3} parent=0
    _
  %s9 = ssub.s32 1, %s7
  %s10 = scalar_select 0, %s9, %s7
  $region1: #{cnn_lstm_forward.3} parent=0
    #allocation3 [shape = 'u8[4096]{0}', space=vmem, size = 0x1000, scoped, tag = 'output window, operand 0, single buffered']
    #allocation4 [shape = 's32[2]{0}', space=sflag, size = 0x8, scoped, tag = 'scoped memory for cnn_lstm_forward.3']
    %11 = vsyncpa [#allocation4], 0
    loop: start=0, step=1, limit=6
    $region2: #{cnn_lstm_forward.3} parent=1 // loop_pre_header
      _
    $region3: #{cnn_lstm_forward.3} parent=1 // loop_header
      %s13 = sphi 0, %s17
      %p14 = scmp.ge.s32.totalorder %s13, 6
      %s23 = sphi 0, %s25
      %s26 = sphi 0, %s23
      %s27 = sphi 0, %s26
      %s43 = sphi 0, %s27
      %s49 = sphi 0, %s51
      %s52 = sphi 0, %s49
      %s53 = sphi 0, %s52
      %s69 = sphi 0, %s53
      %s73 = sphi 0, %s73
      %s75 = sphi 0, %s73
      %s76 = sphi 0, %s75
      %s90 = sphi 0, %s76
      %s94 = sphi 0, %s94
      %s96 = sphi 0, %s94
      %s97 = sphi 0, %s96
      %s111 = sphi 0, %s97
      %s115 = sphi 0, %s115
      %s117 = sphi 0, %s115
      %s118 = sphi 0, %s117
      %s132 = sphi 0, %s118
      %s136 = sphi 0, %s136
      %s138 = sphi 0, %s136
      %s139 = sphi 0, %s138
      %s153 = sphi 0, %s139
      %s157 = sphi 0, %s157
      %s159 = sphi 0, %s157
      %s160 = sphi 0, %s159
      %s174 = sphi 0, %s160
    $region4: #{cnn_lstm_forward.3} parent=1 // loop_header_branch
      %16 = sbr.rel (%p14) target = $region8
    $region5: #{cnn_lstm_forward.3} parent=1 // loop_body
      %s18 = ssub.s32 %s13, 1
      %s19 = ssub.s32 %s13, 2
      %s20 = sadd.s32 %s13, 1
      %s21 = ssub.s32 %s13, %s20
      %p22 = scmp.eq.s32.totalorder %s21, 0
      %s24 = sadd.s32 %s23, 1
      %s25 = scalar_select %p22, %s23, %s24
      %p28 = pneg %p22
      %p29 = scmp.eq.s32.totalorder %s13, 3
      %p30 = por %p28, %p29
      %p31 = scmp.ne.s32.totalorder %s23, %s26
      %p32 = scmp.eq.s32.totalorder %s13, 0
      %p33 = por %p31, %p32
      %p34 = scmp.ne.s32.totalorder %s23, %s26
      %p35 = scmp.eq.s32.totalorder %s18, 3
      %p36 = por %p34, %p35
      %p37 = scmp.ne.s32.totalorder %s26, %s27
      %p38 = scmp.eq.s32.totalorder %s18, 0
      %p39 = por %p37, %p38
      %p40 = scmp.ne.s32.totalorder %s26, %s27
      %p41 = scmp.eq.s32.totalorder %s19, 3
      %p42 = por %p40, %p41
      %p44 = scmp.ne.s32.totalorder %s27, %s43
      %p45 = scmp.eq.s32.totalorder %s19, 0
      %p46 = por %p44, %p45
      %s47 = ssub.s32 %s13, %s20
      %p48 = scmp.eq.s32.totalorder %s47, 0
      %s50 = sadd.s32 %s49, 1
      %s51 = scalar_select %p48, %s49, %s50
      %p54 = pneg %p48
      %p55 = scmp.eq.s32.totalorder %s13, 3
      %p56 = por %p54, %p55
      %p57 = scmp.ne.s32.totalorder %s49, %s52
      %p58 = scmp.eq.s32.totalorder %s13, 0
      %p59 = por %p57, %p58
      %p60 = scmp.ne.s32.totalorder %s49, %s52
      %p61 = scmp.eq.s32.totalorder %s18, 3
      %p62 = por %p60, %p61
      %p63 = scmp.ne.s32.totalorder %s52, %s53
      %p64 = scmp.eq.s32.totalorder %s18, 0
      %p65 = por %p63, %p64
      %p66 = scmp.ne.s32.totalorder %s52, %s53
      %p67 = scmp.eq.s32.totalorder %s19, 3
      %p68 = por %p66, %p67
      %p70 = scmp.ne.s32.totalorder %s53, %s69
      %p71 = scmp.eq.s32.totalorder %s19, 0
      %p72 = por %p70, %p71
      %s74 = sadd.s32 %s73, 1
      %p77 = scmp.eq.s32.totalorder %s13, 3
      %p78 = scmp.ne.s32.totalorder %s73, %s75
      %p79 = scmp.eq.s32.totalorder %s13, 0
      %p80 = por %p78, %p79
      %p81 = scmp.ne.s32.totalorder %s73, %s75
      %p82 = scmp.eq.s32.totalorder %s18, 3
      %p83 = por %p81, %p82
      %p84 = scmp.ne.s32.totalorder %s75, %s76
      %p85 = scmp.eq.s32.totalorder %s18, 0
      %p86 = por %p84, %p85
      %p87 = scmp.ne.s32.totalorder %s75, %s76
      %p88 = scmp.eq.s32.totalorder %s19, 3
      %p89 = por %p87, %p88
      %p91 = scmp.ne.s32.totalorder %s76, %s90
      %p92 = scmp.eq.s32.totalorder %s19, 0
      %p93 = por %p91, %p92
      %s95 = sadd.s32 %s94, 1
      %p98 = scmp.eq.s32.totalorder %s13, 3
      %p99 = scmp.ne.s32.totalorder %s94, %s96
      %p100 = scmp.eq.s32.totalorder %s13, 0
      %p101 = por %p99, %p100
      %p102 = scmp.ne.s32.totalorder %s94, %s96
      %p103 = scmp.eq.s32.totalorder %s18, 3
      %p104 = por %p102, %p103
      %p105 = scmp.ne.s32.totalorder %s96, %s97
      %p106 = scmp.eq.s32.totalorder %s18, 0
      %p107 = por %p105, %p106
      %p108 = scmp.ne.s32.totalorder %s96, %s97
      %p109 = scmp.eq.s32.totalorder %s19, 3
      %p110 = por %p108, %p109
      %p112 = scmp.ne.s32.totalorder %s97, %s111
      %p113 = scmp.eq.s32.totalorder %s19, 0
      %p114 = por %p112, %p113
      %s116 = sadd.s32 %s115, 1
      %p119 = scmp.eq.s32.totalorder %s13, 3
      %p120 = scmp.ne.s32.totalorder %s115, %s117
      %p121 = scmp.eq.s32.totalorder %s13, 0
      %p122 = por %p120, %p121
      %p123 = scmp.ne.s32.totalorder %s115, %s117
      %p124 = scmp.eq.s32.totalorder %s18, 3
      %p125 = por %p123, %p124
      %p126 = scmp.ne.s32.totalorder %s117, %s118
      %p127 = scmp.eq.s32.totalorder %s18, 0
      %p128 = por %p126, %p127
      %p129 = scmp.ne.s32.totalorder %s117, %s118
      %p130 = scmp.eq.s32.totalorder %s19, 3
      %p131 = por %p129, %p130
      %p133 = scmp.ne.s32.totalorder %s118, %s132
      %p134 = scmp.eq.s32.totalorder %s19, 0
      %p135 = por %p133, %p134
      %s137 = sadd.s32 %s136, 1
      %p140 = scmp.eq.s32.totalorder %s13, 3
      %p141 = scmp.ne.s32.totalorder %s136, %s138
      %p142 = scmp.eq.s32.totalorder %s13, 0
      %p143 = por %p141, %p142
      %p144 = scmp.ne.s32.totalorder %s136, %s138
      %p145 = scmp.eq.s32.totalorder %s18, 3
      %p146 = por %p144, %p145
      %p147 = scmp.ne.s32.totalorder %s138, %s139
      %p148 = scmp.eq.s32.totalorder %s18, 0
      %p149 = por %p147, %p148
      %p150 = scmp.ne.s32.totalorder %s138, %s139
      %p151 = scmp.eq.s32.totalorder %s19, 3
      %p152 = por %p150, %p151
      %p154 = scmp.ne.s32.totalorder %s139, %s153
      %p155 = scmp.eq.s32.totalorder %s19, 0
      %p156 = por %p154, %p155
      %s158 = sadd.s32 %s157, 1
      %p161 = scmp.eq.s32.totalorder %s13, 3
      %p162 = scmp.ne.s32.totalorder %s157, %s159
      %p163 = scmp.eq.s32.totalorder %s13, 0
      %p164 = por %p162, %p163
      %p165 = scmp.ne.s32.totalorder %s157, %s159
      %p166 = scmp.eq.s32.totalorder %s18, 3
      %p167 = por %p165, %p166
      %p168 = scmp.ne.s32.totalorder %s159, %s160
      %p169 = scmp.eq.s32.totalorder %s18, 0
      %p170 = por %p168, %p169
      %p171 = scmp.ne.s32.totalorder %s159, %s160
      %p172 = scmp.eq.s32.totalorder %s19, 3
      %p173 = por %p171, %p172
      %p175 = scmp.ne.s32.totalorder %s160, %s174
      %p176 = scmp.eq.s32.totalorder %s19, 0
      %p177 = por %p175, %p176
      %p178 = scmp.le.s32.totalorder 1, %s13
      %p179 = scmp.lt.s32.totalorder %s13, 5
      %p180 = pnand %p178, %p179
      %p181 = pneg %p180
      // Predicated region
      $region9: #{cnn_lstm_forward.3} parent=5 // pred_check
        _
      $region10: #{cnn_lstm_forward.3} parent=5 // pred_check_branch
        %183 = sbr.rel (%p180) target = $region12
      $region11: #{cnn_lstm_forward.3} parent=5 // pred_region
        %s184 = ssub.s32 %s13, 1
        // Predicated region
        $region13: #{cnn_lstm_forward.3} parent=11 // pred_check
          %p185 = pneg %p86
        $region14: #{cnn_lstm_forward.3} parent=11 // pred_check_branch
          %187 = sbr.rel (%p185) target = $region16
        $region15: #{cnn_lstm_forward.3} parent=11 // pred_region
          _
        $region16: #{cnn_lstm_forward.3} parent=11 // pred_fallthru
          _
        // Predicated region
        $region17: #{cnn_lstm_forward.3} parent=11 // pred_check
          %p188 = pneg %p107
        $region18: #{cnn_lstm_forward.3} parent=11 // pred_check_branch
          %190 = sbr.rel (%p188) target = $region20
        $region19: #{cnn_lstm_forward.3} parent=11 // pred_region
          _
        $region20: #{cnn_lstm_forward.3} parent=11 // pred_fallthru
          _
        // Predicated region
        $region21: #{cnn_lstm_forward.3} parent=11 // pred_check
          %p191 = pneg %p128
        $region22: #{cnn_lstm_forward.3} parent=11 // pred_check_branch
          %193 = sbr.rel (%p191) target = $region24
        $region23: #{cnn_lstm_forward.3} parent=11 // pred_region
          _
        $region24: #{cnn_lstm_forward.3} parent=11 // pred_fallthru
          _
        // Predicated region
        $region25: #{cnn_lstm_forward.3} parent=11 // pred_check
          %p194 = pneg %p149
        $region26: #{cnn_lstm_forward.3} parent=11 // pred_check_branch
          %196 = sbr.rel (%p194) target = $region28
        $region27: #{cnn_lstm_forward.3} parent=11 // pred_region
          _
        $region28: #{cnn_lstm_forward.3} parent=11 // pred_fallthru
          _
      $region12: #{cnn_lstm_forward.3} parent=5 // pred_fallthru
        _
      %p197 = scmp.lt.s32.totalorder %s13, 4
      // Predicated region
      $region29: #{cnn_lstm_forward.3} parent=5 // pred_check
        %p198 = pneg %p197
      $region30: #{cnn_lstm_forward.3} parent=5 // pred_check_branch
        %200 = sbr.rel (%p198) target = $region32
      $region31: #{cnn_lstm_forward.3} parent=5 // pred_region
        // Predicated region
        $region33: #{cnn_lstm_forward.3} parent=31 // pred_check
          %p201 = pneg %p33
        $region34: #{cnn_lstm_forward.3} parent=31 // pred_check_branch
          %203 = sbr.rel (%p201) target = $region36
        $region35: #{cnn_lstm_forward.3} parent=31 // pred_region
          %p204 = scmp.lt.s32.totalorder %s13, 3
          %s205 = scalar_select %p204, %s13, 3
          %s206 = smul.addr %s205, 29
          %s207 = scalar_lea.vmem %s0, %s206
        $region36: #{cnn_lstm_forward.3} parent=31 // pred_fallthru
          _
        // Predicated region
        $region37: #{cnn_lstm_forward.3} parent=31 // pred_check
          %p208 = pneg %p59
        $region38: #{cnn_lstm_forward.3} parent=31 // pred_check_branch
          %210 = sbr.rel (%p208) target = $region40
        $region39: #{cnn_lstm_forward.3} parent=31 // pred_region
          %p211 = scmp.lt.s32.totalorder %s13, 3
          %s212 = scalar_select %p211, %s13, 3
          %s213 = smul.addr %s212, 450
          %s214 = smul.addr %s213, 4
          %s215 = scalar_lea.vmem %s1, %s214
        $region40: #{cnn_lstm_forward.3} parent=31 // pred_fallthru
          _
      $region32: #{cnn_lstm_forward.3} parent=5 // pred_fallthru
        _
      %p216 = scmp.le.s32.totalorder 1, %s13
      %p217 = scmp.lt.s32.totalorder %s13, 5
      %p218 = pnand %p216, %p217
      %p219 = pneg %p218
      // Predicated region
      $region41: #{cnn_lstm_forward.3} parent=5 // pred_check
        _
      $region42: #{cnn_lstm_forward.3} parent=5 // pred_check_branch
        %221 = sbr.rel (%p218) target = $region44
      $region43: #{cnn_lstm_forward.3} parent=5 // pred_region
        %s222 = ssub.s32 %s13, 1
        %p223 = scmp.lt.s32.totalorder %s18, 3
        %s224 = scalar_select %p223, %s18, 3
        %s225 = smul.addr %s224, 29
        %s226 = scalar_lea.vmem %s0, %s225
        %p227 = pneg %p39
        %p228 = pneg %p36
        %p229 = scmp.lt.s32.totalorder %s18, 3
        %s230 = scalar_select %p229, %s18, 3
        %s231 = smul.addr %s230, 450
        %s232 = smul.addr %s231, 4
        %s233 = scalar_lea.vmem %s1, %s232
        %p234 = pneg %p65
        %p235 = pneg %p62
        %p236 = pneg %p86
        %p237 = pneg %p83
        %p238 = pneg %p107
        %p239 = pneg %p104
        %p240 = pneg %p128
        %p241 = pneg %p125
        %p242 = pneg %p149
        %p243 = pneg %p146
        %p244 = pneg %p170
        %p245 = pneg %p167
        %p246 = scmp.lt.s32.totalorder %s18, 3
        %s247 = scalar_select %p246, %s18, 3
        %s248 = smul.addr %s247, 29
        %s249 = scalar_lea.vmem %s0, %s248
        %p250 = scmp.lt.s32.totalorder %s18, 3
        %s251 = scalar_select %p250, %s18, 3
        %s252 = smul.addr %s251, 450
        %s253 = smul.addr %s252, 4
        %s254 = scalar_lea.vmem %s1, %s253
        %p256 = scmp.eq.s32.totalorder %s18, 0
        // Predicated region
        $region45: #{cnn_lstm_forward.3} parent=43 // pred_check
          %p257 = pneg %p256
        $region46: #{cnn_lstm_forward.3} parent=43 // pred_check_branch
          %259 = sbr.rel (%p257) target = $region48
        $region47: #{cnn_lstm_forward.3} parent=43 // pred_region
          %vm260 = vcmask 402432
          %261 = vst.msk [vmem:[#allocation2] sm:$0x3] %vm260, 0.0
        $region48: #{cnn_lstm_forward.3} parent=43 // pred_fallthru
          _
        %v262 = vld [vmem:[#allocation2] sm:$0x3]
        %v263 = vld [vmem:[%s249] sm:$0xff]
        %v264 = vld [vmem:[%s249 + $0x8] sm:$0xff]
        %v265 = vld [vmem:[%s249 + $0x10] sm:$0xff]
        %v266 = vld [vmem:[%s249 + $0x18] sm:$0x1f]
        %v267 = vld [vmem:[%s254] sm:$0xf]
        %v268 = vld [vmem:[%s254 + $0x4] sm:$0xf]
        %v269 = vld [vmem:[%s254 + $0x8] sm:$0xf]
        %v270 = vld [vmem:[%s254 + $0xc] sm:$0xf]
        %v271 = vld [vmem:[%s254 + $0x10] sm:$0xf]
        %v272 = vld [vmem:[%s254 + $0x14] sm:$0xf]
        %v273 = vld [vmem:[%s254 + $0x18] sm:$0xf]
        %v274 = vld [vmem:[%s254 + $0x1c] sm:$0xf]
        %v275 = vld [vmem:[%s254 + $0x20] sm:$0xf]
        %v276 = vld [vmem:[%s254 + $0x24] sm:$0xf]
        %v277 = vld [vmem:[%s254 + $0x28] sm:$0xf]
        %v278 = vld [vmem:[%s254 + $0x2c] sm:$0xf]
        %v279 = vld [vmem:[%s254 + $0x30] sm:$0xf]
        %v280 = vld [vmem:[%s254 + $0x34] sm:$0xf]
        %v281 = vld [vmem:[%s254 + $0x38] sm:$0xf]
        %v282 = vld [vmem:[%s254 + $0x3c] sm:$0xf]
        %v283 = vld [vmem:[%s254 + $0x40] sm:$0xf]
        %v284 = vld [vmem:[%s254 + $0x44] sm:$0xf]
        %v285 = vld [vmem:[%s254 + $0x48] sm:$0xf]
        %v286 = vld [vmem:[%s254 + $0x4c] sm:$0xf]
        %v287 = vld [vmem:[%s254 + $0x50] sm:$0xf]
        %v288 = vld [vmem:[%s254 + $0x54] sm:$0xf]
        %v289 = vld [vmem:[%s254 + $0x58] sm:$0xf]
        %v290 = vld [vmem:[%s254 + $0x5c] sm:$0xf]
        %v291 = vld [vmem:[%s254 + $0x60] sm:$0xf]
        %v292 = vld [vmem:[%s254 + $0x64] sm:$0xf]
        %v293 = vld [vmem:[%s254 + $0x68] sm:$0xf]
        %v294 = vld [vmem:[%s254 + $0x6c] sm:$0xf]
        %v295 = vld [vmem:[%s254 + $0x70] sm:$0xf]
        %v296 = vld [vmem:[%s254 + $0x74] sm:$0xf]
        %v297 = vld [vmem:[%s254 + $0x78] sm:$0xf]
        %v298 = vld [vmem:[%s254 + $0x7c] sm:$0xf]
        %v299 = vld [vmem:[%s254 + $0x80] sm:$0xf]
        %v300 = vld [vmem:[%s254 + $0x84] sm:$0xf]
        %v301 = vld [vmem:[%s254 + $0x88] sm:$0xf]
        %v302 = vld [vmem:[%s254 + $0x8c] sm:$0xf]
        %v303 = vld [vmem:[%s254 + $0x90] sm:$0xf]
        %v304 = vld [vmem:[%s254 + $0x94] sm:$0xf]
        %v305 = vld [vmem:[%s254 + $0x98] sm:$0xf]
        %v306 = vld [vmem:[%s254 + $0x9c] sm:$0xf]
        %v307 = vld [vmem:[%s254 + $0xa0] sm:$0xf]
        %v308 = vld [vmem:[%s254 + $0xa4] sm:$0xf]
        %v309 = vld [vmem:[%s254 + $0xa8] sm:$0xf]
        %v310 = vld [vmem:[%s254 + $0xac] sm:$0xf]
        %v311 = vld [vmem:[%s254 + $0xb0] sm:$0xf]
        %v312 = vld [vmem:[%s254 + $0xb4] sm:$0xf]
        %v313 = vld [vmem:[%s254 + $0xb8] sm:$0xf]
        %v314 = vld [vmem:[%s254 + $0xbc] sm:$0xf]
        %v315 = vld [vmem:[%s254 + $0xc0] sm:$0xf]
        %v316 = vld [vmem:[%s254 + $0xc4] sm:$0xf]
        %v317 = vld [vmem:[%s254 + $0xc8] sm:$0xf]
        %v318 = vld [vmem:[%s254 + $0xcc] sm:$0xf]
        %v319 = vld [vmem:[%s254 + $0xd0] sm:$0xf]
        %v320 = vld [vmem:[%s254 + $0xd4] sm:$0xf]
        %v321 = vld [vmem:[%s254 + $0xd8] sm:$0xf]
        %v322 = vld [vmem:[%s254 + $0xdc] sm:$0xf]
        %v323 = vld [vmem:[%s254 + $0xe0] sm:$0xf]
        %v324 = vld [vmem:[%s254 + $0xe4] sm:$0xf]
        %v325 = vld [vmem:[%s254 + $0xe8] sm:$0xf]
        %v326 = vld [vmem:[%s254 + $0xec] sm:$0xf]
        %v327 = vld [vmem:[%s254 + $0xf0] sm:$0xf]
        %v328 = vld [vmem:[%s254 + $0xf4] sm:$0xf]
        %v329 = vld [vmem:[%s254 + $0xf8] sm:$0xf]
        %v330 = vld [vmem:[%s254 + $0xfc] sm:$0xf]
        %v331 = vld [vmem:[%s254 + $0x100] sm:$0xf]
        %v332 = vld [vmem:[%s254 + $0x104] sm:$0xf]
        %v333 = vld [vmem:[%s254 + $0x108] sm:$0xf]
        %v334 = vld [vmem:[%s254 + $0x10c] sm:$0xf]
        %v335 = vld [vmem:[%s254 + $0x110] sm:$0xf]
        %v336 = vld [vmem:[%s254 + $0x114] sm:$0xf]
        %v337 = vld [vmem:[%s254 + $0x118] sm:$0xf]
        %v338 = vld [vmem:[%s254 + $0x11c] sm:$0xf]
        %v339 = vld [vmem:[%s254 + $0x120] sm:$0xf]
        %v340 = vld [vmem:[%s254 + $0x124] sm:$0xf]
        %v341 = vld [vmem:[%s254 + $0x128] sm:$0xf]
        %v342 = vld [vmem:[%s254 + $0x12c] sm:$0xf]
        %v343 = vld [vmem:[%s254 + $0x130] sm:$0xf]
        %v344 = vld [vmem:[%s254 + $0x134] sm:$0xf]
        %v345 = vld [vmem:[%s254 + $0x138] sm:$0xf]
        %v346 = vld [vmem:[%s254 + $0x13c] sm:$0xf]
        %v347 = vld [vmem:[%s254 + $0x140] sm:$0xf]
        %v348 = vld [vmem:[%s254 + $0x144] sm:$0xf]
        %v349 = vld [vmem:[%s254 + $0x148] sm:$0xf]
        %v350 = vld [vmem:[%s254 + $0x14c] sm:$0xf]
        %v351 = vld [vmem:[%s254 + $0x150] sm:$0xf]
        %v352 = vld [vmem:[%s254 + $0x154] sm:$0xf]
        %v353 = vld [vmem:[%s254 + $0x158] sm:$0xf]
        %v354 = vld [vmem:[%s254 + $0x15c] sm:$0xf]
        %v355 = vld [vmem:[%s254 + $0x160] sm:$0xf]
        %v356 = vld [vmem:[%s254 + $0x164] sm:$0xf]
        %v357 = vld [vmem:[%s254 + $0x168] sm:$0xf]
        %v358 = vld [vmem:[%s254 + $0x16c] sm:$0xf]
        %v359 = vld [vmem:[%s254 + $0x170] sm:$0xf]
        %v360 = vld [vmem:[%s254 + $0x174] sm:$0xf]
        %v361 = vld [vmem:[%s254 + $0x178] sm:$0xf]
        %v362 = vld [vmem:[%s254 + $0x17c] sm:$0xf]
        %v363 = vld [vmem:[%s254 + $0x180] sm:$0xf]
        %v364 = vld [vmem:[%s254 + $0x184] sm:$0xf]
        %v365 = vld [vmem:[%s254 + $0x188] sm:$0xf]
        %v366 = vld [vmem:[%s254 + $0x18c] sm:$0xf]
        %v367 = vld [vmem:[%s254 + $0x190] sm:$0xf]
        %v368 = vld [vmem:[%s254 + $0x194] sm:$0xf]
        %v369 = vld [vmem:[%s254 + $0x198] sm:$0xf]
        %v370 = vld [vmem:[%s254 + $0x19c] sm:$0xf]
        %v371 = vld [vmem:[%s254 + $0x1a0] sm:$0xf]
        %v372 = vld [vmem:[%s254 + $0x1a4] sm:$0xf]
        %v373 = vld [vmem:[%s254 + $0x1a8] sm:$0xf]
        %v374 = vld [vmem:[%s254 + $0x1ac] sm:$0xf]
        %v375 = vld [vmem:[%s254 + $0x1b0] sm:$0xf]
        %v376 = vld [vmem:[%s254 + $0x1b4] sm:$0xf]
        %v377 = vld [vmem:[%s254 + $0x1b8] sm:$0xf]
        %v378 = vld [vmem:[%s254 + $0x1bc] sm:$0xf]
        %v379 = vld [vmem:[%s254 + $0x1c0] sm:$0xf]
        %v380 = vld [vmem:[%s254 + $0x1c4] sm:$0xf]
        %v381 = vld [vmem:[%s254 + $0x1c8] sm:$0xf]
        %v382 = vld [vmem:[%s254 + $0x1cc] sm:$0xf]
        %v383 = vld [vmem:[%s254 + $0x1d0] sm:$0xf]
        %v384 = vld [vmem:[%s254 + $0x1d4] sm:$0xf]
        %v385 = vld [vmem:[%s254 + $0x1d8] sm:$0xf]
        %v386 = vld [vmem:[%s254 + $0x1dc] sm:$0xf]
        %v387 = vld [vmem:[%s254 + $0x1e0] sm:$0xf]
        %v388 = vld [vmem:[%s254 + $0x1e4] sm:$0xf]
        %v389 = vld [vmem:[%s254 + $0x1e8] sm:$0xf]
        %v390 = vld [vmem:[%s254 + $0x1ec] sm:$0xf]
        %v391 = vld [vmem:[%s254 + $0x1f0] sm:$0xf]
        %v392 = vld [vmem:[%s254 + $0x1f4] sm:$0xf]
        %v393 = vld [vmem:[%s254 + $0x1f8] sm:$0xf]
        %v394 = vld [vmem:[%s254 + $0x1fc] sm:$0xf]
        %v395 = vld [vmem:[%s254 + $0x200] sm:$0xf]
        %v396 = vld [vmem:[%s254 + $0x204] sm:$0xf]
        %v397 = vld [vmem:[%s254 + $0x208] sm:$0xf]
        %v398 = vld [vmem:[%s254 + $0x20c] sm:$0xf]
        %v399 = vld [vmem:[%s254 + $0x210] sm:$0xf]
        %v400 = vld [vmem:[%s254 + $0x214] sm:$0xf]
        %v401 = vld [vmem:[%s254 + $0x218] sm:$0xf]
        %v402 = vld [vmem:[%s254 + $0x21c] sm:$0xf]
        %v403 = vld [vmem:[%s254 + $0x220] sm:$0xf]
        %v404 = vld [vmem:[%s254 + $0x224] sm:$0xf]
        %v405 = vld [vmem:[%s254 + $0x228] sm:$0xf]
        %v406 = vld [vmem:[%s254 + $0x22c] sm:$0xf]
        %v407 = vld [vmem:[%s254 + $0x230] sm:$0xf]
        %v408 = vld [vmem:[%s254 + $0x234] sm:$0xf]
        %v409 = vld [vmem:[%s254 + $0x238] sm:$0xf]
        %v410 = vld [vmem:[%s254 + $0x23c] sm:$0xf]
        %v411 = vld [vmem:[%s254 + $0x240] sm:$0xf]
        %v412 = vld [vmem:[%s254 + $0x244] sm:$0xf]
        %v413 = vld [vmem:[%s254 + $0x248] sm:$0xf]
        %v414 = vld [vmem:[%s254 + $0x24c] sm:$0xf]
        %v415 = vld [vmem:[%s254 + $0x250] sm:$0xf]
        %v416 = vld [vmem:[%s254 + $0x254] sm:$0xf]
        %v417 = vld [vmem:[%s254 + $0x258] sm:$0xf]
        %v418 = vld [vmem:[%s254 + $0x25c] sm:$0xf]
        %v419 = vld [vmem:[%s254 + $0x260] sm:$0xf]
        %v420 = vld [vmem:[%s254 + $0x264] sm:$0xf]
        %v421 = vld [vmem:[%s254 + $0x268] sm:$0xf]
        %v422 = vld [vmem:[%s254 + $0x26c] sm:$0xf]
        %v423 = vld [vmem:[%s254 + $0x270] sm:$0xf]
        %v424 = vld [vmem:[%s254 + $0x274] sm:$0xf]
        %v425 = vld [vmem:[%s254 + $0x278] sm:$0xf]
        %v426 = vld [vmem:[%s254 + $0x27c] sm:$0xf]
        %v427 = vld [vmem:[%s254 + $0x280] sm:$0xf]
        %v428 = vld [vmem:[%s254 + $0x284] sm:$0xf]
        %v429 = vld [vmem:[%s254 + $0x288] sm:$0xf]
        %v430 = vld [vmem:[%s254 + $0x28c] sm:$0xf]
        %v431 = vld [vmem:[%s254 + $0x290] sm:$0xf]
        %v432 = vld [vmem:[%s254 + $0x294] sm:$0xf]
        %v433 = vld [vmem:[%s254 + $0x298] sm:$0xf]
        %v434 = vld [vmem:[%s254 + $0x29c] sm:$0xf]
        %v435 = vld [vmem:[%s254 + $0x2a0] sm:$0xf]
        %v436 = vld [vmem:[%s254 + $0x2a4] sm:$0xf]
        %v437 = vld [vmem:[%s254 + $0x2a8] sm:$0xf]
        %v438 = vld [vmem:[%s254 + $0x2ac] sm:$0xf]
        %v439 = vld [vmem:[%s254 + $0x2b0] sm:$0xf]
        %v440 = vld [vmem:[%s254 + $0x2b4] sm:$0xf]
        %v441 = vld [vmem:[%s254 + $0x2b8] sm:$0xf]
        %v442 = vld [vmem:[%s254 + $0x2bc] sm:$0xf]
        %v443 = vld [vmem:[%s254 + $0x2c0] sm:$0xf]
        %v444 = vld [vmem:[%s254 + $0x2c4] sm:$0xf]
        %v445 = vld [vmem:[%s254 + $0x2c8] sm:$0xf]
        %v446 = vld [vmem:[%s254 + $0x2cc] sm:$0xf]
        %v447 = vld [vmem:[%s254 + $0x2d0] sm:$0xf]
        %v448 = vld [vmem:[%s254 + $0x2d4] sm:$0xf]
        %v449 = vld [vmem:[%s254 + $0x2d8] sm:$0xf]
        %v450 = vld [vmem:[%s254 + $0x2dc] sm:$0xf]
        %v451 = vld [vmem:[%s254 + $0x2e0] sm:$0xf]
        %v452 = vld [vmem:[%s254 + $0x2e4] sm:$0xf]
        %v453 = vld [vmem:[%s254 + $0x2e8] sm:$0xf]
        %v454 = vld [vmem:[%s254 + $0x2ec] sm:$0xf]
        %v455 = vld [vmem:[%s254 + $0x2f0] sm:$0xf]
        %v456 = vld [vmem:[%s254 + $0x2f4] sm:$0xf]
        %v457 = vld [vmem:[%s254 + $0x2f8] sm:$0xf]
        %v458 = vld [vmem:[%s254 + $0x2fc] sm:$0xf]
        %v459 = vld [vmem:[%s254 + $0x300] sm:$0xf]
        %v460 = vld [vmem:[%s254 + $0x304] sm:$0xf]
        %v461 = vld [vmem:[%s254 + $0x308] sm:$0xf]
        %v462 = vld [vmem:[%s254 + $0x30c] sm:$0xf]
        %v463 = vld [vmem:[%s254 + $0x310] sm:$0xf]
        %v464 = vld [vmem:[%s254 + $0x314] sm:$0xf]
        %v465 = vld [vmem:[%s254 + $0x318] sm:$0xf]
        %v466 = vld [vmem:[%s254 + $0x31c] sm:$0xf]
        %v467 = vld [vmem:[%s254 + $0x320] sm:$0xf]
        %v468 = vld [vmem:[%s254 + $0x324] sm:$0xf]
        %v469 = vld [vmem:[%s254 + $0x328] sm:$0xf]
        %v470 = vld [vmem:[%s254 + $0x32c] sm:$0xf]
        %v471 = vld [vmem:[%s254 + $0x330] sm:$0xf]
        %v472 = vld [vmem:[%s254 + $0x334] sm:$0xf]
        %v473 = vld [vmem:[%s254 + $0x338] sm:$0xf]
        %v474 = vld [vmem:[%s254 + $0x33c] sm:$0xf]
        %v475 = vld [vmem:[%s254 + $0x340] sm:$0xf]
        %v476 = vld [vmem:[%s254 + $0x344] sm:$0xf]
        %v477 = vld [vmem:[%s254 + $0x348] sm:$0xf]
        %v478 = vld [vmem:[%s254 + $0x34c] sm:$0xf]
        %v479 = vld [vmem:[%s254 + $0x350] sm:$0xf]
        %v480 = vld [vmem:[%s254 + $0x354] sm:$0xf]
        %v481 = vld [vmem:[%s254 + $0x358] sm:$0xf]
        %v482 = vld [vmem:[%s254 + $0x35c] sm:$0xf]
        %v483 = vld [vmem:[%s254 + $0x360] sm:$0xf]
        %v484 = vld [vmem:[%s254 + $0x364] sm:$0xf]
        %v485 = vld [vmem:[%s254 + $0x368] sm:$0xf]
        %v486 = vld [vmem:[%s254 + $0x36c] sm:$0xf]
        %v487 = vld [vmem:[%s254 + $0x370] sm:$0xf]
        %v488 = vld [vmem:[%s254 + $0x374] sm:$0xf]
        %v489 = vld [vmem:[%s254 + $0x378] sm:$0xf]
        %v490 = vld [vmem:[%s254 + $0x37c] sm:$0xf]
        %v491 = vld [vmem:[%s254 + $0x380] sm:$0xf]
        %v492 = vld [vmem:[%s254 + $0x384] sm:$0xf]
        %v493 = vld [vmem:[%s254 + $0x388] sm:$0xf]
        %v494 = vld [vmem:[%s254 + $0x38c] sm:$0xf]
        %v495 = vld [vmem:[%s254 + $0x390] sm:$0xf]
        %v496 = vld [vmem:[%s254 + $0x394] sm:$0xf]
        %v497 = vld [vmem:[%s254 + $0x398] sm:$0xf]
        %v498 = vld [vmem:[%s254 + $0x39c] sm:$0xf]
        %v499 = vld [vmem:[%s254 + $0x3a0] sm:$0xf]
        %v500 = vld [vmem:[%s254 + $0x3a4] sm:$0xf]
        %v501 = vld [vmem:[%s254 + $0x3a8] sm:$0xf]
        %v502 = vld [vmem:[%s254 + $0x3ac] sm:$0xf]
        %v503 = vld [vmem:[%s254 + $0x3b0] sm:$0xf]
        %v504 = vld [vmem:[%s254 + $0x3b4] sm:$0xf]
        %v505 = vld [vmem:[%s254 + $0x3b8] sm:$0xf]
        %v506 = vld [vmem:[%s254 + $0x3bc] sm:$0xf]
        %v507 = vld [vmem:[%s254 + $0x3c0] sm:$0xf]
        %v508 = vld [vmem:[%s254 + $0x3c4] sm:$0xf]
        %v509 = vld [vmem:[%s254 + $0x3c8] sm:$0xf]
        %v510 = vld [vmem:[%s254 + $0x3cc] sm:$0xf]
        %v511 = vld [vmem:[%s254 + $0x3d0] sm:$0xf]
        %v512 = vld [vmem:[%s254 + $0x3d4] sm:$0xf]
        %v513 = vld [vmem:[%s254 + $0x3d8] sm:$0xf]
        %v514 = vld [vmem:[%s254 + $0x3dc] sm:$0xf]
        %v515 = vld [vmem:[%s254 + $0x3e0] sm:$0xf]
        %v516 = vld [vmem:[%s254 + $0x3e4] sm:$0xf]
        %v517 = vld [vmem:[%s254 + $0x3e8] sm:$0xf]
        %v518 = vld [vmem:[%s254 + $0x3ec] sm:$0xf]
        %v519 = vld [vmem:[%s254 + $0x3f0] sm:$0xf]
        %v520 = vld [vmem:[%s254 + $0x3f4] sm:$0xf]
        %v521 = vld [vmem:[%s254 + $0x3f8] sm:$0xf]
        %v522 = vld [vmem:[%s254 + $0x3fc] sm:$0xf]
        %v523 = vld [vmem:[%s254 + $0x400] sm:$0xf]
        %v524 = vld [vmem:[%s254 + $0x404] sm:$0xf]
        %v525 = vld [vmem:[%s254 + $0x408] sm:$0xf]
        %v526 = vld [vmem:[%s254 + $0x40c] sm:$0xf]
        %v527 = vld [vmem:[%s254 + $0x410] sm:$0xf]
        %v528 = vld [vmem:[%s254 + $0x414] sm:$0xf]
        %v529 = vld [vmem:[%s254 + $0x418] sm:$0xf]
        %v530 = vld [vmem:[%s254 + $0x41c] sm:$0xf]
        %v531 = vld [vmem:[%s254 + $0x420] sm:$0xf]
        %v532 = vld [vmem:[%s254 + $0x424] sm:$0xf]
        %v533 = vld [vmem:[%s254 + $0x428] sm:$0xf]
        %v534 = vld [vmem:[%s254 + $0x42c] sm:$0xf]
        %v535 = vld [vmem:[%s254 + $0x430] sm:$0xf]
        %v536 = vld [vmem:[%s254 + $0x434] sm:$0xf]
        %v537 = vld [vmem:[%s254 + $0x438] sm:$0xf]
        %v538 = vld [vmem:[%s254 + $0x43c] sm:$0xf]
        %v539 = vld [vmem:[%s254 + $0x440] sm:$0xf]
        %v540 = vld [vmem:[%s254 + $0x444] sm:$0xf]
        %v541 = vld [vmem:[%s254 + $0x448] sm:$0xf]
        %v542 = vld [vmem:[%s254 + $0x44c] sm:$0xf]
        %v543 = vld [vmem:[%s254 + $0x450] sm:$0xf]
        %v544 = vld [vmem:[%s254 + $0x454] sm:$0xf]
        %v545 = vld [vmem:[%s254 + $0x458] sm:$0xf]
        %v546 = vld [vmem:[%s254 + $0x45c] sm:$0xf]
        %v547 = vld [vmem:[%s254 + $0x460] sm:$0xf]
        %v548 = vld [vmem:[%s254 + $0x464] sm:$0xf]
        %v549 = vld [vmem:[%s254 + $0x468] sm:$0xf]
        %v550 = vld [vmem:[%s254 + $0x46c] sm:$0xf]
        %v551 = vld [vmem:[%s254 + $0x470] sm:$0xf]
        %v552 = vld [vmem:[%s254 + $0x474] sm:$0xf]
        %v553 = vld [vmem:[%s254 + $0x478] sm:$0xf]
        %v554 = vld [vmem:[%s254 + $0x47c] sm:$0xf]
        %v555 = vld [vmem:[%s254 + $0x480] sm:$0xf]
        %v556 = vld [vmem:[%s254 + $0x484] sm:$0xf]
        %v557 = vld [vmem:[%s254 + $0x488] sm:$0xf]
        %v558 = vld [vmem:[%s254 + $0x48c] sm:$0xf]
        %v559 = vld [vmem:[%s254 + $0x490] sm:$0xf]
        %v560 = vld [vmem:[%s254 + $0x494] sm:$0xf]
        %v561 = vld [vmem:[%s254 + $0x498] sm:$0xf]
        %v562 = vld [vmem:[%s254 + $0x49c] sm:$0xf]
        %v563 = vld [vmem:[%s254 + $0x4a0] sm:$0xf]
        %v564 = vld [vmem:[%s254 + $0x4a4] sm:$0xf]
        %v565 = vld [vmem:[%s254 + $0x4a8] sm:$0xf]
        %v566 = vld [vmem:[%s254 + $0x4ac] sm:$0xf]
        %v567 = vld [vmem:[%s254 + $0x4b0] sm:$0xf]
        %v568 = vld [vmem:[%s254 + $0x4b4] sm:$0xf]
        %v569 = vld [vmem:[%s254 + $0x4b8] sm:$0xf]
        %v570 = vld [vmem:[%s254 + $0x4bc] sm:$0xf]
        %v571 = vld [vmem:[%s254 + $0x4c0] sm:$0xf]
        %v572 = vld [vmem:[%s254 + $0x4c4] sm:$0xf]
        %v573 = vld [vmem:[%s254 + $0x4c8] sm:$0xf]
        %v574 = vld [vmem:[%s254 + $0x4cc] sm:$0xf]
        %v575 = vld [vmem:[%s254 + $0x4d0] sm:$0xf]
        %v576 = vld [vmem:[%s254 + $0x4d4] sm:$0xf]
        %v577 = vld [vmem:[%s254 + $0x4d8] sm:$0xf]
        %v578 = vld [vmem:[%s254 + $0x4dc] sm:$0xf]
        %v579 = vld [vmem:[%s254 + $0x4e0] sm:$0xf]
        %v580 = vld [vmem:[%s254 + $0x4e4] sm:$0xf]
        %v581 = vld [vmem:[%s254 + $0x4e8] sm:$0xf]
        %v582 = vld [vmem:[%s254 + $0x4ec] sm:$0xf]
        %v583 = vld [vmem:[%s254 + $0x4f0] sm:$0xf]
        %v584 = vld [vmem:[%s254 + $0x4f4] sm:$0xf]
        %v585 = vld [vmem:[%s254 + $0x4f8] sm:$0xf]
        %v586 = vld [vmem:[%s254 + $0x4fc] sm:$0xf]
        %v587 = vld [vmem:[%s254 + $0x500] sm:$0xf]
        %v588 = vld [vmem:[%s254 + $0x504] sm:$0xf]
        %v589 = vld [vmem:[%s254 + $0x508] sm:$0xf]
        %v590 = vld [vmem:[%s254 + $0x50c] sm:$0xf]
        %v591 = vld [vmem:[%s254 + $0x510] sm:$0xf]
        %v592 = vld [vmem:[%s254 + $0x514] sm:$0xf]
        %v593 = vld [vmem:[%s254 + $0x518] sm:$0xf]
        %v594 = vld [vmem:[%s254 + $0x51c] sm:$0xf]
        %v595 = vld [vmem:[%s254 + $0x520] sm:$0xf]
        %v596 = vld [vmem:[%s254 + $0x524] sm:$0xf]
        %v597 = vld [vmem:[%s254 + $0x528] sm:$0xf]
        %v598 = vld [vmem:[%s254 + $0x52c] sm:$0xf]
        %v599 = vld [vmem:[%s254 + $0x530] sm:$0xf]
        %v600 = vld [vmem:[%s254 + $0x534] sm:$0xf]
        %v601 = vld [vmem:[%s254 + $0x538] sm:$0xf]
        %v602 = vld [vmem:[%s254 + $0x53c] sm:$0xf]
        %v603 = vld [vmem:[%s254 + $0x540] sm:$0xf]
        %v604 = vld [vmem:[%s254 + $0x544] sm:$0xf]
        %v605 = vld [vmem:[%s254 + $0x548] sm:$0xf]
        %v606 = vld [vmem:[%s254 + $0x54c] sm:$0xf]
        %v607 = vld [vmem:[%s254 + $0x550] sm:$0xf]
        %v608 = vld [vmem:[%s254 + $0x554] sm:$0xf]
        %v609 = vld [vmem:[%s254 + $0x558] sm:$0xf]
        %v610 = vld [vmem:[%s254 + $0x55c] sm:$0xf]
        %v611 = vld [vmem:[%s254 + $0x560] sm:$0xf]
        %v612 = vld [vmem:[%s254 + $0x564] sm:$0xf]
        %v613 = vld [vmem:[%s254 + $0x568] sm:$0xf]
        %v614 = vld [vmem:[%s254 + $0x56c] sm:$0xf]
        %v615 = vld [vmem:[%s254 + $0x570] sm:$0xf]
        %v616 = vld [vmem:[%s254 + $0x574] sm:$0xf]
        %v617 = vld [vmem:[%s254 + $0x578] sm:$0xf]
        %v618 = vld [vmem:[%s254 + $0x57c] sm:$0xf]
        %v619 = vld [vmem:[%s254 + $0x580] sm:$0xf]
        %v620 = vld [vmem:[%s254 + $0x584] sm:$0xf]
        %v621 = vld [vmem:[%s254 + $0x588] sm:$0xf]
        %v622 = vld [vmem:[%s254 + $0x58c] sm:$0xf]
        %v623 = vld [vmem:[%s254 + $0x590] sm:$0xf]
        %v624 = vld [vmem:[%s254 + $0x594] sm:$0xf]
        %v625 = vld [vmem:[%s254 + $0x598] sm:$0xf]
        %v626 = vld [vmem:[%s254 + $0x59c] sm:$0xf]
        %v627 = vld [vmem:[%s254 + $0x5a0] sm:$0xf]
        %v628 = vld [vmem:[%s254 + $0x5a4] sm:$0xf]
        %v629 = vld [vmem:[%s254 + $0x5a8] sm:$0xf]
        %v630 = vld [vmem:[%s254 + $0x5ac] sm:$0xf]
        %v631 = vld [vmem:[%s254 + $0x5b0] sm:$0xf]
        %v632 = vld [vmem:[%s254 + $0x5b4] sm:$0xf]
        %v633 = vld [vmem:[%s254 + $0x5b8] sm:$0xf]
        %v634 = vld [vmem:[%s254 + $0x5bc] sm:$0xf]
        %v635 = vld [vmem:[%s254 + $0x5c0] sm:$0xf]
        %v636 = vld [vmem:[%s254 + $0x5c4] sm:$0xf]
        %v637 = vld [vmem:[%s254 + $0x5c8] sm:$0xf]
        %v638 = vld [vmem:[%s254 + $0x5cc] sm:$0xf]
        %v639 = vld [vmem:[%s254 + $0x5d0] sm:$0xf]
        %v640 = vld [vmem:[%s254 + $0x5d4] sm:$0xf]
        %v641 = vld [vmem:[%s254 + $0x5d8] sm:$0xf]
        %v642 = vld [vmem:[%s254 + $0x5dc] sm:$0xf]
        %v643 = vld [vmem:[%s254 + $0x5e0] sm:$0xf]
        %v644 = vld [vmem:[%s254 + $0x5e4] sm:$0xf]
        %v645 = vld [vmem:[%s254 + $0x5e8] sm:$0xf]
        %v646 = vld [vmem:[%s254 + $0x5ec] sm:$0xf]
        %v647 = vld [vmem:[%s254 + $0x5f0] sm:$0xf]
        %v648 = vld [vmem:[%s254 + $0x5f4] sm:$0xf]
        %v649 = vld [vmem:[%s254 + $0x5f8] sm:$0xf]
        %v650 = vld [vmem:[%s254 + $0x5fc] sm:$0xf]
        %v651 = vld [vmem:[%s254 + $0x600] sm:$0xf]
        %v652 = vld [vmem:[%s254 + $0x604] sm:$0xf]
        %v653 = vld [vmem:[%s254 + $0x608] sm:$0xf]
        %v654 = vld [vmem:[%s254 + $0x60c] sm:$0xf]
        %v655 = vld [vmem:[%s254 + $0x610] sm:$0xf]
        %v656 = vld [vmem:[%s254 + $0x614] sm:$0xf]
        %v657 = vld [vmem:[%s254 + $0x618] sm:$0xf]
        %v658 = vld [vmem:[%s254 + $0x61c] sm:$0xf]
        %v659 = vld [vmem:[%s254 + $0x620] sm:$0xf]
        %v660 = vld [vmem:[%s254 + $0x624] sm:$0xf]
        %v661 = vld [vmem:[%s254 + $0x628] sm:$0xf]
        %v662 = vld [vmem:[%s254 + $0x62c] sm:$0xf]
        %v663 = vld [vmem:[%s254 + $0x630] sm:$0xf]
        %v664 = vld [vmem:[%s254 + $0x634] sm:$0xf]
        %v665 = vld [vmem:[%s254 + $0x638] sm:$0xf]
        %v666 = vld [vmem:[%s254 + $0x63c] sm:$0xf]
        %v667 = vld [vmem:[%s254 + $0x640] sm:$0xf]
        %v668 = vld [vmem:[%s254 + $0x644] sm:$0xf]
        %v669 = vld [vmem:[%s254 + $0x648] sm:$0xf]
        %v670 = vld [vmem:[%s254 + $0x64c] sm:$0xf]
        %v671 = vld [vmem:[%s254 + $0x650] sm:$0xf]
        %v672 = vld [vmem:[%s254 + $0x654] sm:$0xf]
        %v673 = vld [vmem:[%s254 + $0x658] sm:$0xf]
        %v674 = vld [vmem:[%s254 + $0x65c] sm:$0xf]
        %v675 = vld [vmem:[%s254 + $0x660] sm:$0xf]
        %v676 = vld [vmem:[%s254 + $0x664] sm:$0xf]
        %v677 = vld [vmem:[%s254 + $0x668] sm:$0xf]
        %v678 = vld [vmem:[%s254 + $0x66c] sm:$0xf]
        %v679 = vld [vmem:[%s254 + $0x670] sm:$0xf]
        %v680 = vld [vmem:[%s254 + $0x674] sm:$0xf]
        %v681 = vld [vmem:[%s254 + $0x678] sm:$0xf]
        %v682 = vld [vmem:[%s254 + $0x67c] sm:$0xf]
        %v683 = vld [vmem:[%s254 + $0x680] sm:$0xf]
        %v684 = vld [vmem:[%s254 + $0x684] sm:$0xf]
        %v685 = vld [vmem:[%s254 + $0x688] sm:$0xf]
        %v686 = vld [vmem:[%s254 + $0x68c] sm:$0xf]
        %v687 = vld [vmem:[%s254 + $0x690] sm:$0xf]
        %v688 = vld [vmem:[%s254 + $0x694] sm:$0xf]
        %v689 = vld [vmem:[%s254 + $0x698] sm:$0xf]
        %v690 = vld [vmem:[%s254 + $0x69c] sm:$0xf]
        %v691 = vld [vmem:[%s254 + $0x6a0] sm:$0xf]
        %v692 = vld [vmem:[%s254 + $0x6a4] sm:$0xf]
        %v693 = vld [vmem:[%s254 + $0x6a8] sm:$0xf]
        %v694 = vld [vmem:[%s254 + $0x6ac] sm:$0xf]
        %v695 = vld [vmem:[%s254 + $0x6b0] sm:$0xf]
        %v696 = vld [vmem:[%s254 + $0x6b4] sm:$0xf]
        %v697 = vld [vmem:[%s254 + $0x6b8] sm:$0xf]
        %v698 = vld [vmem:[%s254 + $0x6bc] sm:$0xf]
        %v699 = vld [vmem:[%s254 + $0x6c0] sm:$0xf]
        %v700 = vld [vmem:[%s254 + $0x6c4] sm:$0xf]
        %v701 = vld [vmem:[%s254 + $0x6c8] sm:$0xf]
        %v702 = vld [vmem:[%s254 + $0x6cc] sm:$0xf]
        %v703 = vld [vmem:[%s254 + $0x6d0] sm:$0xf]
        %v704 = vld [vmem:[%s254 + $0x6d4] sm:$0xf]
        %v705 = vld [vmem:[%s254 + $0x6d8] sm:$0xf]
        %v706 = vld [vmem:[%s254 + $0x6dc] sm:$0xf]
        %v707 = vld [vmem:[%s254 + $0x6e0] sm:$0xf]
        %v708 = vld [vmem:[%s254 + $0x6e4] sm:$0xf]
        %v709 = vld [vmem:[%s254 + $0x6e8] sm:$0xf]
        %v710 = vld [vmem:[%s254 + $0x6ec] sm:$0xf]
        %v711 = vld [vmem:[%s254 + $0x6f0] sm:$0xf]
        %v712 = vld [vmem:[%s254 + $0x6f4] sm:$0xf]
        %v713 = vld [vmem:[%s254 + $0x6f8] sm:$0xf]
        %v714 = vld [vmem:[%s254 + $0x6fc] sm:$0xf]
        %v715 = vld [vmem:[%s254 + $0x700] sm:$0xf]
        %v716 = vld [vmem:[%s254 + $0x704] sm:$0xf]
        %v721 = vcombine.high %v263, %v263
        %v723 = vunpack.c.l.s4 1966171168
        %v724 = vunpack.c.0.s8 %v723
        %v725 = vlaneseq
        %v726 = vshrl.u32 %v725, 7
        %v727 = vsub.s32 %v724, %v726
        %v728 = vrot.slane %v263, %v727
        %v730 = vunpack.c.l.s4 1966171168
        %v731 = vunpack.c.0.s8 %v730
        %v732 = vlaneseq
        %v733 = vshrl.u32 %v732, 7
        %v734 = vsub.s32 %v731, %v733
        %v735 = vrot.slane %v721, %v734
        %v736 = vcombine.high %v728, %v728
        %v737 = vcombine.high %v735, %v735
        %v739 = vunpack.c.l.s4 1966171168
        %v740 = vunpack.c.0.s8 %v739
        %v741 = vlaneseq
        %v742 = vshrl.u32 %v741, 7
        %v743 = vsub.s32 %v740, %v742
        %v744 = vrot.slane %v728, %v743
        %v746 = vunpack.c.l.s4 1966171168
        %v747 = vunpack.c.0.s8 %v746
        %v748 = vlaneseq
        %v749 = vshrl.u32 %v748, 7
        %v750 = vsub.s32 %v747, %v749
        %v751 = vrot.slane %v735, %v750
        %v753 = vunpack.c.l.s4 1966171168
        %v754 = vunpack.c.0.s8 %v753
        %v755 = vlaneseq
        %v756 = vshrl.u32 %v755, 7
        %v757 = vsub.s32 %v754, %v756
        %v758 = vrot.slane %v736, %v757
        %v760 = vunpack.c.l.s4 1966171168
        %v761 = vunpack.c.0.s8 %v760
        %v762 = vlaneseq
        %v763 = vshrl.u32 %v762, 7
        %v764 = vsub.s32 %v761, %v763
        %v765 = vrot.slane %v737, %v764
        %v766 = vcombine.high %v744, %v744
        %v767 = vcombine.high %v751, %v751
        %v768 = vcombine.high %v758, %v758
        %v769 = vcombine.high %v765, %v765
        %v770 = vcombine.high %v264, %v264
        %v772 = vunpack.c.l.s4 1966171168
        %v773 = vunpack.c.0.s8 %v772
        %v774 = vlaneseq
        %v775 = vshrl.u32 %v774, 7
        %v776 = vsub.s32 %v773, %v775
        %v777 = vrot.slane %v264, %v776
        %v779 = vunpack.c.l.s4 1966171168
        %v780 = vunpack.c.0.s8 %v779
        %v781 = vlaneseq
        %v782 = vshrl.u32 %v781, 7
        %v783 = vsub.s32 %v780, %v782
        %v784 = vrot.slane %v770, %v783
        %v785 = vcombine.high %v777, %v777
        %v786 = vcombine.high %v784, %v784
        %v788 = vunpack.c.l.s4 1966171168
        %v789 = vunpack.c.0.s8 %v788
        %v790 = vlaneseq
        %v791 = vshrl.u32 %v790, 7
        %v792 = vsub.s32 %v789, %v791
        %v793 = vrot.slane %v777, %v792
        %v795 = vunpack.c.l.s4 1966171168
        %v796 = vunpack.c.0.s8 %v795
        %v797 = vlaneseq
        %v798 = vshrl.u32 %v797, 7
        %v799 = vsub.s32 %v796, %v798
        %v800 = vrot.slane %v784, %v799
        %v802 = vunpack.c.l.s4 1966171168
        %v803 = vunpack.c.0.s8 %v802
        %v804 = vlaneseq
        %v805 = vshrl.u32 %v804, 7
        %v806 = vsub.s32 %v803, %v805
        %v807 = vrot.slane %v785, %v806
        %v809 = vunpack.c.l.s4 1966171168
        %v810 = vunpack.c.0.s8 %v809
        %v811 = vlaneseq
        %v812 = vshrl.u32 %v811, 7
        %v813 = vsub.s32 %v810, %v812
        %v814 = vrot.slane %v786, %v813
        %v815 = vcombine.high %v793, %v793
        %v816 = vcombine.high %v800, %v800
        %v817 = vcombine.high %v807, %v807
        %v818 = vcombine.high %v814, %v814
        %v819 = vcombine.high %v265, %v265
        %v821 = vunpack.c.l.s4 1966171168
        %v822 = vunpack.c.0.s8 %v821
        %v823 = vlaneseq
        %v824 = vshrl.u32 %v823, 7
        %v825 = vsub.s32 %v822, %v824
        %v826 = vrot.slane %v265, %v825
        %v828 = vunpack.c.l.s4 1966171168
        %v829 = vunpack.c.0.s8 %v828
        %v830 = vlaneseq
        %v831 = vshrl.u32 %v830, 7
        %v832 = vsub.s32 %v829, %v831
        %v833 = vrot.slane %v819, %v832
        %v834 = vcombine.high %v826, %v826
        %v835 = vcombine.high %v833, %v833
        %v837 = vunpack.c.l.s4 1966171168
        %v838 = vunpack.c.0.s8 %v837
        %v839 = vlaneseq
        %v840 = vshrl.u32 %v839, 7
        %v841 = vsub.s32 %v838, %v840
        %v842 = vrot.slane %v826, %v841
        %v844 = vunpack.c.l.s4 1966171168
        %v845 = vunpack.c.0.s8 %v844
        %v846 = vlaneseq
        %v847 = vshrl.u32 %v846, 7
        %v848 = vsub.s32 %v845, %v847
        %v849 = vrot.slane %v833, %v848
        %v851 = vunpack.c.l.s4 1966171168
        %v852 = vunpack.c.0.s8 %v851
        %v853 = vlaneseq
        %v854 = vshrl.u32 %v853, 7
        %v855 = vsub.s32 %v852, %v854
        %v856 = vrot.slane %v834, %v855
        %v858 = vunpack.c.l.s4 1966171168
        %v859 = vunpack.c.0.s8 %v858
        %v860 = vlaneseq
        %v861 = vshrl.u32 %v860, 7
        %v862 = vsub.s32 %v859, %v861
        %v863 = vrot.slane %v835, %v862
        %v864 = vcombine.high %v842, %v842
        %v865 = vcombine.high %v849, %v849
        %v866 = vcombine.high %v856, %v856
        %v867 = vcombine.high %v863, %v863
        %v868 = vcombine.high %v266, %v266
        %v870 = vunpack.c.l.s4 1966171168
        %v871 = vunpack.c.0.s8 %v870
        %v872 = vlaneseq
        %v873 = vshrl.u32 %v872, 7
        %v874 = vsub.s32 %v871, %v873
        %v875 = vrot.slane %v266, %v874
        %v877 = vunpack.c.l.s4 1966171168
        %v878 = vunpack.c.0.s8 %v877
        %v879 = vlaneseq
        %v880 = vshrl.u32 %v879, 7
        %v881 = vsub.s32 %v878, %v880
        %v882 = vrot.slane %v868, %v881
        %v883 = vcombine.high %v875, %v875
        %v885 = vunpack.c.l.s4 1966171168
        %v886 = vunpack.c.0.s8 %v885
        %v887 = vlaneseq
        %v888 = vshrl.u32 %v887, 7
        %v889 = vsub.s32 %v886, %v888
        %v890 = vrot.slane %v875, %v889
        %v892 = vunpack.c.l.s4 1966171168
        %v893 = vunpack.c.0.s8 %v892
        %v894 = vlaneseq
        %v895 = vshrl.u32 %v894, 7
        %v896 = vsub.s32 %v893, %v895
        %v897 = vrot.slane %v882, %v896
        %v899 = vunpack.c.l.s4 1966171168
        %v900 = vunpack.c.0.s8 %v899
        %v901 = vlaneseq
        %v902 = vshrl.u32 %v901, 7
        %v903 = vsub.s32 %v900, %v902
        %v904 = vrot.slane %v883, %v903
        %v905 = vcombine.high %v890, %v890
        %v906 = vcombine.high %v904, %v904
        %v1385 = vunpack.c.l.b16 %v267
        %v1386 = vunpack.c.l.b16 %v268
        %v1387 = vunpack.c.l.b16 %v269
        %v1388 = vunpack.c.l.b16 %v270
        %v1389 = vunpack.c.l.b16 %v271
        %v1390 = vunpack.c.l.b16 %v272
        %v1391 = vunpack.c.l.b16 %v273
        %v1392 = vunpack.c.l.b16 %v274
        %v1393 = vunpack.c.l.b16 %v275
        %v1394 = vunpack.c.l.b16 %v276
        %v1395 = vunpack.c.l.b16 %v277
        %v1396 = vunpack.c.l.b16 %v278
        %v1397 = vunpack.c.l.b16 %v279
        %v1398 = vunpack.c.l.b16 %v280
        %v1399 = vunpack.c.l.b16 %v281
        %v1400 = vunpack.c.l.b16 %v282
        %v1401 = vunpack.c.l.b16 %v283
        %v1402 = vunpack.c.l.b16 %v284
        %v1403 = vunpack.c.l.b16 %v285
        %v1404 = vunpack.c.l.b16 %v286
        %v1405 = vunpack.c.l.b16 %v287
        %v1406 = vunpack.c.l.b16 %v288
        %v1407 = vunpack.c.l.b16 %v289
        %v1408 = vunpack.c.l.b16 %v290
        %v1409 = vunpack.c.l.b16 %v291
        %v1410 = vunpack.c.l.b16 %v292
        %v1411 = vunpack.c.l.b16 %v293
        %v1412 = vunpack.c.l.b16 %v294
        %v1413 = vunpack.c.l.b16 %v295
        %v1414 = vunpack.c.l.b16 %v296
        %v1415 = vunpack.c.l.b16 %v297
        %v1416 = vunpack.c.l.b16 %v298
        %v1417 = vunpack.c.l.b16 %v299
        %v1418 = vunpack.c.l.b16 %v300
        %v1419 = vunpack.c.l.b16 %v301
        %v1420 = vunpack.c.l.b16 %v302
        %v1421 = vunpack.c.l.b16 %v303
        %v1422 = vunpack.c.l.b16 %v304
        %v1423 = vunpack.c.l.b16 %v305
        %v1424 = vunpack.c.l.b16 %v306
        %v1425 = vunpack.c.l.b16 %v307
        %v1426 = vunpack.c.l.b16 %v308
        %v1427 = vunpack.c.l.b16 %v309
        %v1428 = vunpack.c.l.b16 %v310
        %v1429 = vunpack.c.l.b16 %v311
        %v1430 = vunpack.c.l.b16 %v312
        %v1431 = vunpack.c.l.b16 %v313
        %v1432 = vunpack.c.l.b16 %v314
        %v1433 = vunpack.c.l.b16 %v315
        %v1434 = vunpack.c.l.b16 %v316
        %v1435 = vunpack.c.l.b16 %v317
        %v1436 = vunpack.c.l.b16 %v318
        %v1437 = vunpack.c.l.b16 %v319
        %v1438 = vunpack.c.l.b16 %v320
        %v1439 = vunpack.c.l.b16 %v321
        %v1440 = vunpack.c.l.b16 %v322
        %v1441 = vunpack.c.l.b16 %v323
        %v1442 = vunpack.c.l.b16 %v324
        %v1443 = vunpack.c.l.b16 %v325
        %v1444 = vunpack.c.l.b16 %v326
        %v1445 = vunpack.c.l.b16 %v327
        %v1446 = vunpack.c.l.b16 %v328
        %v1447 = vunpack.c.l.b16 %v329
        %v1448 = vunpack.c.l.b16 %v330
        %v1449 = vunpack.c.l.b16 %v331
        %v1450 = vunpack.c.l.b16 %v332
        %v1451 = vunpack.c.l.b16 %v333
        %v1452 = vunpack.c.l.b16 %v334
        %v1453 = vunpack.c.l.b16 %v335
        %v1454 = vunpack.c.l.b16 %v336
        %v1455 = vunpack.c.l.b16 %v337
        %v1456 = vunpack.c.l.b16 %v338
        %v1457 = vunpack.c.l.b16 %v339
        %v1458 = vunpack.c.l.b16 %v340
        %v1459 = vunpack.c.l.b16 %v341
        %v1460 = vunpack.c.l.b16 %v342
        %v1461 = vunpack.c.l.b16 %v343
        %v1462 = vunpack.c.l.b16 %v344
        %v1463 = vunpack.c.l.b16 %v345
        %v1464 = vunpack.c.l.b16 %v346
        %v1465 = vunpack.c.l.b16 %v347
        %v1466 = vunpack.c.l.b16 %v348
        %v1467 = vunpack.c.l.b16 %v349
        %v1468 = vunpack.c.l.b16 %v350
        %v1469 = vunpack.c.l.b16 %v351
        %v1470 = vunpack.c.l.b16 %v352
        %v1471 = vunpack.c.l.b16 %v353
        %v1472 = vunpack.c.l.b16 %v354
        %v1473 = vunpack.c.l.b16 %v355
        %v1474 = vunpack.c.l.b16 %v356
        %v1475 = vunpack.c.l.b16 %v357
        %v1476 = vunpack.c.l.b16 %v358
        %v1477 = vunpack.c.l.b16 %v359
        %v1478 = vunpack.c.l.b16 %v360
        %v1479 = vunpack.c.l.b16 %v361
        %v1480 = vunpack.c.l.b16 %v362
        %v1481 = vunpack.c.l.b16 %v363
        %v1482 = vunpack.c.l.b16 %v364
        %v1483 = vunpack.c.l.b16 %v365
        %v1484 = vunpack.c.l.b16 %v366
        %v1485 = vunpack.c.l.b16 %v367
        %v1486 = vunpack.c.l.b16 %v368
        %v1487 = vunpack.c.l.b16 %v369
        %v1488 = vunpack.c.l.b16 %v370
        %v1489 = vunpack.c.l.b16 %v371
        %v1490 = vunpack.c.l.b16 %v372
        %v1491 = vunpack.c.l.b16 %v373
        %v1492 = vunpack.c.l.b16 %v374
        %v1493 = vunpack.c.l.b16 %v375
        %v1494 = vunpack.c.l.b16 %v376
        %v1495 = vunpack.c.l.b16 %v377
        %v1496 = vunpack.c.l.b16 %v378
        %v1497 = vunpack.c.l.b16 %v379
        %v1498 = vunpack.c.l.b16 %v380
        %v1499 = vunpack.c.l.b16 %v381
        %v1500 = vunpack.c.l.b16 %v382
        %v1501 = vunpack.c.l.b16 %v383
        %v1502 = vunpack.c.l.b16 %v384
        %v1503 = vunpack.c.l.b16 %v385
        %v1504 = vunpack.c.l.b16 %v386
        %v1505 = vunpack.c.l.b16 %v387
        %v1506 = vunpack.c.l.b16 %v388
        %v1507 = vunpack.c.l.b16 %v389
        %v1508 = vunpack.c.l.b16 %v390
        %v1509 = vunpack.c.l.b16 %v391
        %v1510 = vunpack.c.l.b16 %v392
        %v1511 = vunpack.c.l.b16 %v393
        %v1512 = vunpack.c.l.b16 %v394
        %v1513 = vunpack.c.l.b16 %v395
        %v1514 = vunpack.c.l.b16 %v396
        %v1515 = vunpack.c.l.b16 %v397
        %v1516 = vunpack.c.l.b16 %v398
        %v1517 = vunpack.c.l.b16 %v399
        %v1518 = vunpack.c.l.b16 %v400
        %v1519 = vunpack.c.l.b16 %v401
        %v1520 = vunpack.c.l.b16 %v402
        %v1521 = vunpack.c.l.b16 %v403
        %v1522 = vunpack.c.l.b16 %v404
        %v1523 = vunpack.c.l.b16 %v405
        %v1524 = vunpack.c.l.b16 %v406
        %v1525 = vunpack.c.l.b16 %v407
        %v1526 = vunpack.c.l.b16 %v408
        %v1527 = vunpack.c.l.b16 %v409
        %v1528 = vunpack.c.l.b16 %v410
        %v1529 = vunpack.c.l.b16 %v411
        %v1530 = vunpack.c.l.b16 %v412
        %v1531 = vunpack.c.l.b16 %v413
        %v1532 = vunpack.c.l.b16 %v414
        %v1533 = vunpack.c.l.b16 %v415
        %v1534 = vunpack.c.l.b16 %v416
        %v1535 = vunpack.c.l.b16 %v417
        %v1536 = vunpack.c.l.b16 %v418
        %v1537 = vunpack.c.l.b16 %v419
        %v1538 = vunpack.c.l.b16 %v420
        %v1539 = vunpack.c.l.b16 %v421
        %v1540 = vunpack.c.l.b16 %v422
        %v1541 = vunpack.c.l.b16 %v423
        %v1542 = vunpack.c.l.b16 %v424
        %v1543 = vunpack.c.l.b16 %v425
        %v1544 = vunpack.c.l.b16 %v426
        %v1545 = vunpack.c.l.b16 %v427
        %v1546 = vunpack.c.l.b16 %v428
        %v1547 = vunpack.c.l.b16 %v429
        %v1548 = vunpack.c.l.b16 %v430
        %v1549 = vunpack.c.l.b16 %v431
        %v1550 = vunpack.c.l.b16 %v432
        %v1551 = vunpack.c.l.b16 %v433
        %v1552 = vunpack.c.l.b16 %v434
        %v1553 = vunpack.c.l.b16 %v435
        %v1554 = vunpack.c.l.b16 %v436
        %v1555 = vunpack.c.l.b16 %v437
        %v1556 = vunpack.c.l.b16 %v438
        %v1557 = vunpack.c.l.b16 %v439
        %v1558 = vunpack.c.l.b16 %v440
        %v1559 = vunpack.c.l.b16 %v441
        %v1560 = vunpack.c.l.b16 %v442
        %v1561 = vunpack.c.l.b16 %v443
        %v1562 = vunpack.c.l.b16 %v444
        %v1563 = vunpack.c.l.b16 %v445
        %v1564 = vunpack.c.l.b16 %v446
        %v1565 = vunpack.c.l.b16 %v447
        %v1566 = vunpack.c.l.b16 %v448
        %v1567 = vunpack.c.l.b16 %v449
        %v1568 = vunpack.c.l.b16 %v450
        %v1569 = vunpack.c.l.b16 %v451
        %v1570 = vunpack.c.l.b16 %v452
        %v1571 = vunpack.c.l.b16 %v453
        %v1572 = vunpack.c.l.b16 %v454
        %v1573 = vunpack.c.l.b16 %v455
        %v1574 = vunpack.c.l.b16 %v456
        %v1575 = vunpack.c.l.b16 %v457
        %v1576 = vunpack.c.l.b16 %v458
        %v1577 = vunpack.c.l.b16 %v459
        %v1578 = vunpack.c.l.b16 %v460
        %v1579 = vunpack.c.l.b16 %v461
        %v1580 = vunpack.c.l.b16 %v462
        %v1581 = vunpack.c.l.b16 %v463
        %v1582 = vunpack.c.l.b16 %v464
        %v1583 = vunpack.c.l.b16 %v465
        %v1584 = vunpack.c.l.b16 %v466
        %v1585 = vunpack.c.l.b16 %v467
        %v1586 = vunpack.c.l.b16 %v468
        %v1587 = vunpack.c.l.b16 %v469
        %v1588 = vunpack.c.l.b16 %v470
        %v1589 = vunpack.c.l.b16 %v471
        %v1590 = vunpack.c.l.b16 %v472
        %v1591 = vunpack.c.l.b16 %v473
        %v1592 = vunpack.c.l.b16 %v474
        %v1593 = vunpack.c.l.b16 %v475
        %v1594 = vunpack.c.l.b16 %v476
        %v1595 = vunpack.c.l.b16 %v477
        %v1596 = vunpack.c.l.b16 %v478
        %v1597 = vunpack.c.l.b16 %v479
        %v1598 = vunpack.c.l.b16 %v480
        %v1599 = vunpack.c.l.b16 %v481
        %v1600 = vunpack.c.l.b16 %v482
        %v1601 = vunpack.c.l.b16 %v483
        %v1602 = vunpack.c.l.b16 %v484
        %v1603 = vunpack.c.l.b16 %v485
        %v1604 = vunpack.c.l.b16 %v486
        %v1605 = vunpack.c.l.b16 %v487
        %v1606 = vunpack.c.l.b16 %v488
        %v1607 = vunpack.c.l.b16 %v489
        %v1608 = vunpack.c.l.b16 %v490
        %v1609 = vunpack.c.l.b16 %v491
        %v1610 = vunpack.c.l.b16 %v492
        %v1611 = vunpack.c.l.b16 %v493
        %v1612 = vunpack.c.l.b16 %v494
        %v1613 = vunpack.c.l.b16 %v495
        %v1614 = vunpack.c.l.b16 %v496
        %v1615 = vunpack.c.l.b16 %v497
        %v1616 = vunpack.c.l.b16 %v498
        %v1617 = vunpack.c.l.b16 %v499
        %v1618 = vunpack.c.l.b16 %v500
        %v1619 = vunpack.c.l.b16 %v501
        %v1620 = vunpack.c.l.b16 %v502
        %v1621 = vunpack.c.l.b16 %v503
        %v1622 = vunpack.c.l.b16 %v504
        %v1623 = vunpack.c.l.b16 %v505
        %v1624 = vunpack.c.l.b16 %v506
        %v1625 = vunpack.c.l.b16 %v507
        %v1626 = vunpack.c.l.b16 %v508
        %v1627 = vunpack.c.l.b16 %v509
        %v1628 = vunpack.c.l.b16 %v510
        %v1629 = vunpack.c.l.b16 %v511
        %v1630 = vunpack.c.l.b16 %v512
        %v1631 = vunpack.c.l.b16 %v513
        %v1632 = vunpack.c.l.b16 %v514
        %v1633 = vunpack.c.l.b16 %v515
        %v1634 = vunpack.c.l.b16 %v516
        %v1635 = vunpack.c.l.b16 %v517
        %v1636 = vunpack.c.l.b16 %v518
        %v1637 = vunpack.c.l.b16 %v519
        %v1638 = vunpack.c.l.b16 %v520
        %v1639 = vunpack.c.l.b16 %v521
        %v1640 = vunpack.c.l.b16 %v522
        %v1641 = vunpack.c.l.b16 %v523
        %v1642 = vunpack.c.l.b16 %v524
        %v1643 = vunpack.c.l.b16 %v525
        %v1644 = vunpack.c.l.b16 %v526
        %v1645 = vunpack.c.l.b16 %v527
        %v1646 = vunpack.c.l.b16 %v528
        %v1647 = vunpack.c.l.b16 %v529
        %v1648 = vunpack.c.l.b16 %v530
        %v1649 = vunpack.c.l.b16 %v531
        %v1650 = vunpack.c.l.b16 %v532
        %v1651 = vunpack.c.l.b16 %v533
        %v1652 = vunpack.c.l.b16 %v534
        %v1653 = vunpack.c.l.b16 %v535
        %v1654 = vunpack.c.l.b16 %v536
        %v1655 = vunpack.c.l.b16 %v537
        %v1656 = vunpack.c.l.b16 %v538
        %v1657 = vunpack.c.l.b16 %v539
        %v1658 = vunpack.c.l.b16 %v540
        %v1659 = vunpack.c.l.b16 %v541
        %v1660 = vunpack.c.l.b16 %v542
        %v1661 = vunpack.c.l.b16 %v543
        %v1662 = vunpack.c.l.b16 %v544
        %v1663 = vunpack.c.l.b16 %v545
        %v1664 = vunpack.c.l.b16 %v546
        %v1665 = vunpack.c.l.b16 %v547
        %v1666 = vunpack.c.l.b16 %v548
        %v1667 = vunpack.c.l.b16 %v549
        %v1668 = vunpack.c.l.b16 %v550
        %v1669 = vunpack.c.l.b16 %v551
        %v1670 = vunpack.c.l.b16 %v552
        %v1671 = vunpack.c.l.b16 %v553
        %v1672 = vunpack.c.l.b16 %v554
        %v1673 = vunpack.c.l.b16 %v555
        %v1674 = vunpack.c.l.b16 %v556
        %v1675 = vunpack.c.l.b16 %v557
        %v1676 = vunpack.c.l.b16 %v558
        %v1677 = vunpack.c.l.b16 %v559
        %v1678 = vunpack.c.l.b16 %v560
        %v1679 = vunpack.c.l.b16 %v561
        %v1680 = vunpack.c.l.b16 %v562
        %v1681 = vunpack.c.l.b16 %v563
        %v1682 = vunpack.c.l.b16 %v564
        %v1683 = vunpack.c.l.b16 %v565
        %v1684 = vunpack.c.l.b16 %v566
        %v1685 = vunpack.c.l.b16 %v567
        %v1686 = vunpack.c.l.b16 %v568
        %v1687 = vunpack.c.l.b16 %v569
        %v1688 = vunpack.c.l.b16 %v570
        %v1689 = vunpack.c.l.b16 %v571
        %v1690 = vunpack.c.l.b16 %v572
        %v1691 = vunpack.c.l.b16 %v573
        %v1692 = vunpack.c.l.b16 %v574
        %v1693 = vunpack.c.l.b16 %v575
        %v1694 = vunpack.c.l.b16 %v576
        %v1695 = vunpack.c.l.b16 %v577
        %v1696 = vunpack.c.l.b16 %v578
        %v1697 = vunpack.c.l.b16 %v579
        %v1698 = vunpack.c.l.b16 %v580
        %v1699 = vunpack.c.l.b16 %v581
        %v1700 = vunpack.c.l.b16 %v582
        %v1701 = vunpack.c.l.b16 %v583
        %v1702 = vunpack.c.l.b16 %v584
        %v1703 = vunpack.c.l.b16 %v585
        %v1704 = vunpack.c.l.b16 %v586
        %v1705 = vunpack.c.l.b16 %v587
        %v1706 = vunpack.c.l.b16 %v588
        %v1707 = vunpack.c.l.b16 %v589
        %v1708 = vunpack.c.l.b16 %v590
        %v1709 = vunpack.c.l.b16 %v591
        %v1710 = vunpack.c.l.b16 %v592
        %v1711 = vunpack.c.l.b16 %v593
        %v1712 = vunpack.c.l.b16 %v594
        %v1713 = vunpack.c.l.b16 %v595
        %v1714 = vunpack.c.l.b16 %v596
        %v1715 = vunpack.c.l.b16 %v597
        %v1716 = vunpack.c.l.b16 %v598
        %v1717 = vunpack.c.l.b16 %v599
        %v1718 = vunpack.c.l.b16 %v600
        %v1719 = vunpack.c.l.b16 %v601
        %v1720 = vunpack.c.l.b16 %v602
        %v1721 = vunpack.c.l.b16 %v603
        %v1722 = vunpack.c.l.b16 %v604
        %v1723 = vunpack.c.l.b16 %v605
        %v1724 = vunpack.c.l.b16 %v606
        %v1725 = vunpack.c.l.b16 %v607
        %v1726 = vunpack.c.l.b16 %v608
        %v1727 = vunpack.c.l.b16 %v609
        %v1728 = vunpack.c.l.b16 %v610
        %v1729 = vunpack.c.l.b16 %v611
        %v1730 = vunpack.c.l.b16 %v612
        %v1731 = vunpack.c.l.b16 %v613
        %v1732 = vunpack.c.l.b16 %v614
        %v1733 = vunpack.c.l.b16 %v615
        %v1734 = vunpack.c.l.b16 %v616
        %v1735 = vunpack.c.l.b16 %v617
        %v1736 = vunpack.c.l.b16 %v618
        %v1737 = vunpack.c.l.b16 %v619
        %v1738 = vunpack.c.l.b16 %v620
        %v1739 = vunpack.c.l.b16 %v621
        %v1740 = vunpack.c.l.b16 %v622
        %v1741 = vunpack.c.l.b16 %v623
        %v1742 = vunpack.c.l.b16 %v624
        %v1743 = vunpack.c.l.b16 %v625
        %v1744 = vunpack.c.l.b16 %v626
        %v1745 = vunpack.c.l.b16 %v627
        %v1746 = vunpack.c.l.b16 %v628
        %v1747 = vunpack.c.l.b16 %v629
        %v1748 = vunpack.c.l.b16 %v630
        %v1749 = vunpack.c.l.b16 %v631
        %v1750 = vunpack.c.l.b16 %v632
        %v1751 = vunpack.c.l.b16 %v633
        %v1752 = vunpack.c.l.b16 %v634
        %v1753 = vunpack.c.l.b16 %v635
        %v1754 = vunpack.c.l.b16 %v636
        %v1755 = vunpack.c.l.b16 %v637
        %v1756 = vunpack.c.l.b16 %v638
        %v1757 = vunpack.c.l.b16 %v639
        %v1758 = vunpack.c.l.b16 %v640
        %v1759 = vunpack.c.l.b16 %v641
        %v1760 = vunpack.c.l.b16 %v642
        %v1761 = vunpack.c.l.b16 %v643
        %v1762 = vunpack.c.l.b16 %v644
        %v1763 = vunpack.c.l.b16 %v645
        %v1764 = vunpack.c.l.b16 %v646
        %v1765 = vunpack.c.l.b16 %v647
        %v1766 = vunpack.c.l.b16 %v648
        %v1767 = vunpack.c.l.b16 %v649
        %v1768 = vunpack.c.l.b16 %v650
        %v1769 = vunpack.c.l.b16 %v651
        %v1770 = vunpack.c.l.b16 %v652
        %v1771 = vunpack.c.l.b16 %v653
        %v1772 = vunpack.c.l.b16 %v654
        %v1773 = vunpack.c.l.b16 %v655
        %v1774 = vunpack.c.l.b16 %v656
        %v1775 = vunpack.c.l.b16 %v657
        %v1776 = vunpack.c.l.b16 %v658
        %v1777 = vunpack.c.l.b16 %v659
        %v1778 = vunpack.c.l.b16 %v660
        %v1779 = vunpack.c.l.b16 %v661
        %v1780 = vunpack.c.l.b16 %v662
        %v1781 = vunpack.c.l.b16 %v663
        %v1782 = vunpack.c.l.b16 %v664
        %v1783 = vunpack.c.l.b16 %v665
        %v1784 = vunpack.c.l.b16 %v666
        %v1785 = vunpack.c.l.b16 %v667
        %v1786 = vunpack.c.l.b16 %v668
        %v1787 = vunpack.c.l.b16 %v669
        %v1788 = vunpack.c.l.b16 %v670
        %v1789 = vunpack.c.l.b16 %v671
        %v1790 = vunpack.c.l.b16 %v672
        %v1791 = vunpack.c.l.b16 %v673
        %v1792 = vunpack.c.l.b16 %v674
        %v1793 = vunpack.c.l.b16 %v675
        %v1794 = vunpack.c.l.b16 %v676
        %v1795 = vunpack.c.l.b16 %v677
        %v1796 = vunpack.c.l.b16 %v678
        %v1797 = vunpack.c.l.b16 %v679
        %v1798 = vunpack.c.l.b16 %v680
        %v1799 = vunpack.c.l.b16 %v681
        %v1800 = vunpack.c.l.b16 %v682
        %v1801 = vunpack.c.l.b16 %v683
        %v1802 = vunpack.c.l.b16 %v684
        %v1803 = vunpack.c.l.b16 %v685
        %v1804 = vunpack.c.l.b16 %v686
        %v1805 = vunpack.c.l.b16 %v687
        %v1806 = vunpack.c.l.b16 %v688
        %v1807 = vunpack.c.l.b16 %v689
        %v1808 = vunpack.c.l.b16 %v690
        %v1809 = vunpack.c.l.b16 %v691
        %v1810 = vunpack.c.l.b16 %v692
        %v1811 = vunpack.c.l.b16 %v693
        %v1812 = vunpack.c.l.b16 %v694
        %v1813 = vunpack.c.l.b16 %v695
        %v1814 = vunpack.c.l.b16 %v696
        %v1815 = vunpack.c.l.b16 %v697
        %v1816 = vunpack.c.l.b16 %v698
        %v1817 = vunpack.c.l.b16 %v699
        %v1818 = vunpack.c.l.b16 %v700
        %v1819 = vunpack.c.l.b16 %v701
        %v1820 = vunpack.c.l.b16 %v702
        %v1821 = vunpack.c.l.b16 %v703
        %v1822 = vunpack.c.l.b16 %v704
        %v1823 = vunpack.c.l.b16 %v705
        %v1824 = vunpack.c.l.b16 %v706
        %v1825 = vunpack.c.l.b16 %v707
        %v1826 = vunpack.c.l.b16 %v708
        %v1827 = vunpack.c.l.b16 %v709
        %v1828 = vunpack.c.l.b16 %v710
        %v1829 = vunpack.c.l.b16 %v711
        %v1830 = vunpack.c.l.b16 %v712
        %v1831 = vunpack.c.l.b16 %v713
        %v1832 = vunpack.c.l.b16 %v714
        %v1833 = vunpack.c.l.b16 %v715
        %v1834 = vunpack.c.l.b16 %v716
        %v1835 = vpack.c.b16 %v1386, %v1385
        %v1836 = vpack.c.b16 %v1388, %v1387
        %v1837 = vpack.c.b16 %v1390, %v1389
        %v1838 = vpack.c.b16 %v1392, %v1391
        %v1839 = vpack.c.b16 %v1394, %v1393
        %v1840 = vpack.c.b16 %v1396, %v1395
        %v1841 = vpack.c.b16 %v1398, %v1397
        %v1842 = vpack.c.b16 %v1400, %v1399
        %v1843 = vpack.c.b16 %v1402, %v1401
        %v1844 = vpack.c.b16 %v1404, %v1403
        %v1845 = vpack.c.b16 %v1406, %v1405
        %v1846 = vpack.c.b16 %v1408, %v1407
        %v1847 = vpack.c.b16 %v1410, %v1409
        %v1848 = vpack.c.b16 %v1412, %v1411
        %v1849 = vpack.c.b16 %v1414, %v1413
        %v1850 = vpack.c.b16 %v1416, %v1415
        %v1851 = vpack.c.b16 %v1418, %v1417
        %v1852 = vpack.c.b16 %v1420, %v1419
        %v1853 = vpack.c.b16 %v1422, %v1421
        %v1854 = vpack.c.b16 %v1424, %v1423
        %v1855 = vpack.c.b16 %v1426, %v1425
        %v1856 = vpack.c.b16 %v1428, %v1427
        %v1857 = vpack.c.b16 %v1430, %v1429
        %v1858 = vpack.c.b16 %v1432, %v1431
        %v1859 = vpack.c.b16 %v1434, %v1433
        %v1860 = vpack.c.b16 %v1436, %v1435
        %v1861 = vpack.c.b16 %v1438, %v1437
        %v1862 = vpack.c.b16 %v1440, %v1439
        %v1863 = vpack.c.b16 %v1442, %v1441
        %v1864 = vpack.c.b16 %v1444, %v1443
        %v1865 = vpack.c.b16 %v1446, %v1445
        %v1866 = vpack.c.b16 %v1448, %v1447
        %v1867 = vpack.c.b16 %v1450, %v1449
        %v1868 = vpack.c.b16 %v1452, %v1451
        %v1869 = vpack.c.b16 %v1454, %v1453
        %v1870 = vpack.c.b16 %v1456, %v1455
        %v1871 = vpack.c.b16 %v1458, %v1457
        %v1872 = vpack.c.b16 %v1460, %v1459
        %v1873 = vpack.c.b16 %v1462, %v1461
        %v1874 = vpack.c.b16 %v1464, %v1463
        %v1875 = vpack.c.b16 %v1466, %v1465
        %v1876 = vpack.c.b16 %v1468, %v1467
        %v1877 = vpack.c.b16 %v1470, %v1469
        %v1878 = vpack.c.b16 %v1472, %v1471
        %v1879 = vpack.c.b16 %v1474, %v1473
        %v1880 = vpack.c.b16 %v1476, %v1475
        %v1881 = vpack.c.b16 %v1478, %v1477
        %v1882 = vpack.c.b16 %v1480, %v1479
        %v1883 = vpack.c.b16 %v1482, %v1481
        %v1884 = vpack.c.b16 %v1484, %v1483
        %v1885 = vpack.c.b16 %v1486, %v1485
        %v1886 = vpack.c.b16 %v1488, %v1487
        %v1887 = vpack.c.b16 %v1490, %v1489
        %v1888 = vpack.c.b16 %v1492, %v1491
        %v1889 = vpack.c.b16 %v1494, %v1493
        %v1890 = vpack.c.b16 %v1496, %v1495
        %v1891 = vpack.c.b16 %v1498, %v1497
        %v1892 = vpack.c.b16 %v1500, %v1499
        %v1893 = vpack.c.b16 %v1502, %v1501
        %v1894 = vpack.c.b16 %v1504, %v1503
        %v1895 = vpack.c.b16 %v1506, %v1505
        %v1896 = vpack.c.b16 %v1508, %v1507
        %v1897 = vpack.c.b16 %v1510, %v1509
        %v1898 = vpack.c.b16 %v1512, %v1511
        %v1899 = vpack.c.b16 %v1514, %v1513
        %v1900 = vpack.c.b16 %v1516, %v1515
        %v1901 = vpack.c.b16 %v1518, %v1517
        %v1902 = vpack.c.b16 %v1520, %v1519
        %v1903 = vpack.c.b16 %v1522, %v1521
        %v1904 = vpack.c.b16 %v1524, %v1523
        %v1905 = vpack.c.b16 %v1526, %v1525
        %v1906 = vpack.c.b16 %v1528, %v1527
        %v1907 = vpack.c.b16 %v1530, %v1529
        %v1908 = vpack.c.b16 %v1532, %v1531
        %v1909 = vpack.c.b16 %v1534, %v1533
        %v1910 = vpack.c.b16 %v1536, %v1535
        %v1911 = vpack.c.b16 %v1538, %v1537
        %v1912 = vpack.c.b16 %v1540, %v1539
        %v1913 = vpack.c.b16 %v1542, %v1541
        %v1914 = vpack.c.b16 %v1544, %v1543
        %v1915 = vpack.c.b16 %v1546, %v1545
        %v1916 = vpack.c.b16 %v1548, %v1547
        %v1917 = vpack.c.b16 %v1550, %v1549
        %v1918 = vpack.c.b16 %v1552, %v1551
        %v1919 = vpack.c.b16 %v1554, %v1553
        %v1920 = vpack.c.b16 %v1556, %v1555
        %v1921 = vpack.c.b16 %v1558, %v1557
        %v1922 = vpack.c.b16 %v1560, %v1559
        %v1923 = vpack.c.b16 %v1562, %v1561
        %v1924 = vpack.c.b16 %v1564, %v1563
        %v1925 = vpack.c.b16 %v1566, %v1565
        %v1926 = vpack.c.b16 %v1568, %v1567
        %v1927 = vpack.c.b16 %v1570, %v1569
        %v1928 = vpack.c.b16 %v1572, %v1571
        %v1929 = vpack.c.b16 %v1574, %v1573
        %v1930 = vpack.c.b16 %v1576, %v1575
        %v1931 = vpack.c.b16 %v1578, %v1577
        %v1932 = vpack.c.b16 %v1580, %v1579
        %v1933 = vpack.c.b16 %v1582, %v1581
        %v1934 = vpack.c.b16 %v1584, %v1583
        %v1935 = vpack.c.b16 %v1586, %v1585
        %v1936 = vpack.c.b16 %v1588, %v1587
        %v1937 = vpack.c.b16 %v1590, %v1589
        %v1938 = vpack.c.b16 %v1592, %v1591
        %v1939 = vpack.c.b16 %v1594, %v1593
        %v1940 = vpack.c.b16 %v1596, %v1595
        %v1941 = vpack.c.b16 %v1598, %v1597
        %v1942 = vpack.c.b16 %v1600, %v1599
        %v1943 = vpack.c.b16 %v1602, %v1601
        %v1944 = vpack.c.b16 %v1604, %v1603
        %v1945 = vpack.c.b16 %v1606, %v1605
        %v1946 = vpack.c.b16 %v1608, %v1607
        %v1947 = vpack.c.b16 %v1610, %v1609
        %v1948 = vpack.c.b16 %v1612, %v1611
        %v1949 = vpack.c.b16 %v1614, %v1613
        %v1950 = vpack.c.b16 %v1616, %v1615
        %v1951 = vpack.c.b16 %v1618, %v1617
        %v1952 = vpack.c.b16 %v1620, %v1619
        %v1953 = vpack.c.b16 %v1622, %v1621
        %v1954 = vpack.c.b16 %v1624, %v1623
        %v1955 = vpack.c.b16 %v1626, %v1625
        %v1956 = vpack.c.b16 %v1628, %v1627
        %v1957 = vpack.c.b16 %v1630, %v1629
        %v1958 = vpack.c.b16 %v1632, %v1631
        %v1959 = vpack.c.b16 %v1634, %v1633
        %v1960 = vpack.c.b16 %v1636, %v1635
        %v1961 = vpack.c.b16 %v1638, %v1637
        %v1962 = vpack.c.b16 %v1640, %v1639
        %v1963 = vpack.c.b16 %v1642, %v1641
        %v1964 = vpack.c.b16 %v1644, %v1643
        %v1965 = vpack.c.b16 %v1646, %v1645
        %v1966 = vpack.c.b16 %v1648, %v1647
        %v1967 = vpack.c.b16 %v1650, %v1649
        %v1968 = vpack.c.b16 %v1652, %v1651
        %v1969 = vpack.c.b16 %v1654, %v1653
        %v1970 = vpack.c.b16 %v1656, %v1655
        %v1971 = vpack.c.b16 %v1658, %v1657
        %v1972 = vpack.c.b16 %v1660, %v1659
        %v1973 = vpack.c.b16 %v1662, %v1661
        %v1974 = vpack.c.b16 %v1664, %v1663
        %v1975 = vpack.c.b16 %v1666, %v1665
        %v1976 = vpack.c.b16 %v1668, %v1667
        %v1977 = vpack.c.b16 %v1670, %v1669
        %v1978 = vpack.c.b16 %v1672, %v1671
        %v1979 = vpack.c.b16 %v1674, %v1673
        %v1980 = vpack.c.b16 %v1676, %v1675
        %v1981 = vpack.c.b16 %v1678, %v1677
        %v1982 = vpack.c.b16 %v1680, %v1679
        %v1983 = vpack.c.b16 %v1682, %v1681
        %v1984 = vpack.c.b16 %v1684, %v1683
        %v1985 = vpack.c.b16 %v1686, %v1685
        %v1986 = vpack.c.b16 %v1688, %v1687
        %v1987 = vpack.c.b16 %v1690, %v1689
        %v1988 = vpack.c.b16 %v1692, %v1691
        %v1989 = vpack.c.b16 %v1694, %v1693
        %v1990 = vpack.c.b16 %v1696, %v1695
        %v1991 = vpack.c.b16 %v1698, %v1697
        %v1992 = vpack.c.b16 %v1700, %v1699
        %v1993 = vpack.c.b16 %v1702, %v1701
        %v1994 = vpack.c.b16 %v1704, %v1703
        %v1995 = vpack.c.b16 %v1706, %v1705
        %v1996 = vpack.c.b16 %v1708, %v1707
        %v1997 = vpack.c.b16 %v1710, %v1709
        %v1998 = vpack.c.b16 %v1712, %v1711
        %v1999 = vpack.c.b16 %v1714, %v1713
        %v2000 = vpack.c.b16 %v1716, %v1715
        %v2001 = vpack.c.b16 %v1718, %v1717
        %v2002 = vpack.c.b16 %v1720, %v1719
        %v2003 = vpack.c.b16 %v1722, %v1721
        %v2004 = vpack.c.b16 %v1724, %v1723
        %v2005 = vpack.c.b16 %v1726, %v1725
        %v2006 = vpack.c.b16 %v1728, %v1727
        %v2007 = vpack.c.b16 %v1730, %v1729
        %v2008 = vpack.c.b16 %v1732, %v1731
        %v2009 = vpack.c.b16 %v1734, %v1733
        %v2010 = vpack.c.b16 %v1736, %v1735
        %v2011 = vpack.c.b16 %v1738, %v1737
        %v2012 = vpack.c.b16 %v1740, %v1739
        %v2013 = vpack.c.b16 %v1742, %v1741
        %v2014 = vpack.c.b16 %v1744, %v1743
        %v2015 = vpack.c.b16 %v1746, %v1745
        %v2016 = vpack.c.b16 %v1748, %v1747
        %v2017 = vpack.c.b16 %v1750, %v1749
        %v2018 = vpack.c.b16 %v1752, %v1751
        %v2019 = vpack.c.b16 %v1754, %v1753
        %v2020 = vpack.c.b16 %v1756, %v1755
        %v2021 = vpack.c.b16 %v1758, %v1757
        %v2022 = vpack.c.b16 %v1760, %v1759
        %v2023 = vpack.c.b16 %v1762, %v1761
        %v2024 = vpack.c.b16 %v1764, %v1763
        %v2025 = vpack.c.b16 %v1766, %v1765
        %v2026 = vpack.c.b16 %v1768, %v1767
        %v2027 = vpack.c.b16 %v1770, %v1769
        %v2028 = vpack.c.b16 %v1772, %v1771
        %v2029 = vpack.c.b16 %v1774, %v1773
        %v2030 = vpack.c.b16 %v1776, %v1775
        %v2031 = vpack.c.b16 %v1778, %v1777
        %v2032 = vpack.c.b16 %v1780, %v1779
        %v2033 = vpack.c.b16 %v1782, %v1781
        %v2034 = vpack.c.b16 %v1784, %v1783
        %v2035 = vpack.c.b16 %v1786, %v1785
        %v2036 = vpack.c.b16 %v1788, %v1787
        %v2037 = vpack.c.b16 %v1790, %v1789
        %v2038 = vpack.c.b16 %v1792, %v1791
        %v2039 = vpack.c.b16 %v1794, %v1793
        %v2040 = vpack.c.b16 %v1796, %v1795
        %v2041 = vpack.c.b16 %v1798, %v1797
        %v2042 = vpack.c.b16 %v1800, %v1799
        %v2043 = vpack.c.b16 %v1802, %v1801
        %v2044 = vpack.c.b16 %v1804, %v1803
        %v2045 = vpack.c.b16 %v1806, %v1805
        %v2046 = vpack.c.b16 %v1808, %v1807
        %v2047 = vpack.c.b16 %v1810, %v1809
        %v2048 = vpack.c.b16 %v1812, %v1811
        %v2049 = vpack.c.b16 %v1814, %v1813
        %v2050 = vpack.c.b16 %v1816, %v1815
        %v2051 = vpack.c.b16 %v1818, %v1817
        %v2052 = vpack.c.b16 %v1820, %v1819
        %v2053 = vpack.c.b16 %v1822, %v1821
        %v2054 = vpack.c.b16 %v1824, %v1823
        %v2055 = vpack.c.b16 %v1826, %v1825
        %v2056 = vpack.c.b16 %v1828, %v1827
        %v2057 = vpack.c.b16 %v1830, %v1829
        %v2058 = vpack.c.b16 %v1832, %v1831
        %v2059 = vpack.c.b16 %v1834, %v1833
        %vm2285 = vcmask 130048
        %v2287 = vsel %vm2285, %v897, 0
        %2289 = vmatprep.subr.bf16.mxu0 0
        %2290 = vmatpush1.bf16.msra.mxu0 %v1842
        %2291 = vmatprep.subr.bf16.mxu0 0
        %2292 = vmatpush1.bf16.msra.mxu0 %v1841
        %2293 = vmatprep.subr.bf16.mxu0 0
        %2294 = vmatpush1.bf16.msra.mxu0 %v1840
        %2295 = vmatprep.subr.bf16.mxu0 0
        %2296 = vmatpush1.bf16.msra.mxu0 %v1839
        %2297 = vmatprep.subr.bf16.mxu0 0
        %2298 = vmatpush1.bf16.msra.mxu0 %v1838
        %2299 = vmatprep.subr.bf16.mxu0 0
        %2300 = vmatpush1.bf16.msra.mxu0 %v1837
        %2301 = vmatprep.subr.bf16.mxu0 0
        %2302 = vmatpush1.bf16.msra.mxu0 %v1836
        %2303 = vmatprep.subr.bf16.mxu0 0
        %2304 = vmatpush1.bf16.msra.mxu0 %v1835
        %2305 = vmatprep.subr.bf16.mxu0 0
        %2306 = vmatpush2.bf16.msra.mxu0 %v1850
        %2307 = vmatprep.subr.bf16.mxu0 0
        %2308 = vmatpush2.bf16.msra.mxu0 %v1849
        %2309 = vmatprep.subr.bf16.mxu0 0
        %2310 = vmatpush2.bf16.msra.mxu0 %v1848
        %2311 = vmatprep.subr.bf16.mxu0 0
        %2312 = vmatpush2.bf16.msra.mxu0 %v1847
        %2313 = vmatprep.subr.bf16.mxu0 0
        %2314 = vmatpush2.bf16.msra.mxu0 %v1846
        %2315 = vmatprep.subr.bf16.mxu0 0
        %2316 = vmatpush2.bf16.msra.mxu0 %v1845
        %2317 = vmatprep.subr.bf16.mxu0 0
        %2318 = vmatpush2.bf16.msra.mxu0 %v1844
        %2319 = vmatprep.subr.bf16.mxu0 0
        %2320 = vmatpush2.bf16.msra.mxu0 %v1843
        %2321 = vmatprep.mubr.bf16.mxu0 %v758
        %2322 = vmatmul.mubr.bf16.gmra.mxu0 %v744
        %v2323 = vpop.f32.mrf.mxu0
        %v2324 = vadd.f32 0.0, %v2323
        %v2325 = vpop.f32.mrf.mxu0
        %v2326 = vpop.f32.mrf.mxu0
        %v2327 = vpop.f32.mrf.mxu0
        %2328 = vdwg.mxu0
        %2329 = vmatprep.subr.bf16.mxu0 0
        %2330 = vmatpush1.bf16.msra.mxu0 %v1858
        %2331 = vmatprep.subr.bf16.mxu0 0
        %2332 = vmatpush1.bf16.msra.mxu0 %v1857
        %2333 = vmatprep.subr.bf16.mxu0 0
        %2334 = vmatpush1.bf16.msra.mxu0 %v1856
        %2335 = vmatprep.subr.bf16.mxu0 0
        %2336 = vmatpush1.bf16.msra.mxu0 %v1855
        %2337 = vmatprep.subr.bf16.mxu0 0
        %2338 = vmatpush1.bf16.msra.mxu0 %v1854
        %2339 = vmatprep.subr.bf16.mxu0 0
        %2340 = vmatpush1.bf16.msra.mxu0 %v1853
        %2341 = vmatprep.subr.bf16.mxu0 0
        %2342 = vmatpush1.bf16.msra.mxu0 %v1852
        %2343 = vmatprep.subr.bf16.mxu0 0
        %2344 = vmatpush1.bf16.msra.mxu0 %v1851
        %2345 = vmatprep.subr.bf16.mxu0 0
        %2346 = vmatpush2.bf16.msra.mxu0 %v1866
        %2347 = vmatprep.subr.bf16.mxu0 0
        %2348 = vmatpush2.bf16.msra.mxu0 %v1865
        %2349 = vmatprep.subr.bf16.mxu0 0
        %2350 = vmatpush2.bf16.msra.mxu0 %v1864
        %2351 = vmatprep.subr.bf16.mxu0 0
        %2352 = vmatpush2.bf16.msra.mxu0 %v1863
        %2353 = vmatprep.subr.bf16.mxu0 0
        %2354 = vmatpush2.bf16.msra.mxu0 %v1862
        %2355 = vmatprep.subr.bf16.mxu0 0
        %2356 = vmatpush2.bf16.msra.mxu0 %v1861
        %2357 = vmatprep.subr.bf16.mxu0 0
        %2358 = vmatpush2.bf16.msra.mxu0 %v1860
        %2359 = vmatprep.subr.bf16.mxu0 0
        %2360 = vmatpush2.bf16.msra.mxu0 %v1859
        %2361 = vmatprep.mubr.bf16.mxu0 %v768
        %2362 = vmatmul.mubr.bf16.gmra.mxu0 %v766
        %v2363 = vpop.f32.mrf.mxu0
        %v2364 = vadd.f32 %v2324, %v2363
        %v2365 = vpop.f32.mrf.mxu0
        %v2366 = vpop.f32.mrf.mxu0
        %v2367 = vpop.f32.mrf.mxu0
        %2368 = vdwg.mxu0
        %2369 = vmatprep.subr.bf16.mxu0 0
        %2370 = vmatpush1.bf16.msra.mxu0 %v1874
        %2371 = vmatprep.subr.bf16.mxu0 0
        %2372 = vmatpush1.bf16.msra.mxu0 %v1873
        %2373 = vmatprep.subr.bf16.mxu0 0
        %2374 = vmatpush1.bf16.msra.mxu0 %v1872
        %2375 = vmatprep.subr.bf16.mxu0 0
        %2376 = vmatpush1.bf16.msra.mxu0 %v1871
        %2377 = vmatprep.subr.bf16.mxu0 0
        %2378 = vmatpush1.bf16.msra.mxu0 %v1870
        %2379 = vmatprep.subr.bf16.mxu0 0
        %2380 = vmatpush1.bf16.msra.mxu0 %v1869
        %2381 = vmatprep.subr.bf16.mxu0 0
        %2382 = vmatpush1.bf16.msra.mxu0 %v1868
        %2383 = vmatprep.subr.bf16.mxu0 0
        %2384 = vmatpush1.bf16.msra.mxu0 %v1867
        %2385 = vmatprep.subr.bf16.mxu0 0
        %2386 = vmatpush2.bf16.msra.mxu0 %v1882
        %2387 = vmatprep.subr.bf16.mxu0 0
        %2388 = vmatpush2.bf16.msra.mxu0 %v1881
        %2389 = vmatprep.subr.bf16.mxu0 0
        %2390 = vmatpush2.bf16.msra.mxu0 %v1880
        %2391 = vmatprep.subr.bf16.mxu0 0
        %2392 = vmatpush2.bf16.msra.mxu0 %v1879
        %2393 = vmatprep.subr.bf16.mxu0 0
        %2394 = vmatpush2.bf16.msra.mxu0 %v1878
        %2395 = vmatprep.subr.bf16.mxu0 0
        %2396 = vmatpush2.bf16.msra.mxu0 %v1877
        %2397 = vmatprep.subr.bf16.mxu0 0
        %2398 = vmatpush2.bf16.msra.mxu0 %v1876
        %2399 = vmatprep.subr.bf16.mxu0 0
        %2400 = vmatpush2.bf16.msra.mxu0 %v1875
        %2401 = vmatprep.mubr.bf16.mxu0 %v765
        %2402 = vmatmul.mubr.bf16.gmra.mxu0 %v751
        %v2403 = vpop.f32.mrf.mxu0
        %v2404 = vadd.f32 %v2364, %v2403
        %v2405 = vpop.f32.mrf.mxu0
        %v2406 = vpop.f32.mrf.mxu0
        %v2407 = vpop.f32.mrf.mxu0
        %2408 = vdwg.mxu0
        %2409 = vmatprep.subr.bf16.mxu0 0
        %2410 = vmatpush1.bf16.msra.mxu0 %v1890
        %2411 = vmatprep.subr.bf16.mxu0 0
        %2412 = vmatpush1.bf16.msra.mxu0 %v1889
        %2413 = vmatprep.subr.bf16.mxu0 0
        %2414 = vmatpush1.bf16.msra.mxu0 %v1888
        %2415 = vmatprep.subr.bf16.mxu0 0
        %2416 = vmatpush1.bf16.msra.mxu0 %v1887
        %2417 = vmatprep.subr.bf16.mxu0 0
        %2418 = vmatpush1.bf16.msra.mxu0 %v1886
        %2419 = vmatprep.subr.bf16.mxu0 0
        %2420 = vmatpush1.bf16.msra.mxu0 %v1885
        %2421 = vmatprep.subr.bf16.mxu0 0
        %2422 = vmatpush1.bf16.msra.mxu0 %v1884
        %2423 = vmatprep.subr.bf16.mxu0 0
        %2424 = vmatpush1.bf16.msra.mxu0 %v1883
        %2425 = vmatprep.subr.bf16.mxu0 0
        %2426 = vmatpush2.bf16.msra.mxu0 %v1898
        %2427 = vmatprep.subr.bf16.mxu0 0
        %2428 = vmatpush2.bf16.msra.mxu0 %v1897
        %2429 = vmatprep.subr.bf16.mxu0 0
        %2430 = vmatpush2.bf16.msra.mxu0 %v1896
        %2431 = vmatprep.subr.bf16.mxu0 0
        %2432 = vmatpush2.bf16.msra.mxu0 %v1895
        %2433 = vmatprep.subr.bf16.mxu0 0
        %2434 = vmatpush2.bf16.msra.mxu0 %v1894
        %2435 = vmatprep.subr.bf16.mxu0 0
        %2436 = vmatpush2.bf16.msra.mxu0 %v1893
        %2437 = vmatprep.subr.bf16.mxu0 0
        %2438 = vmatpush2.bf16.msra.mxu0 %v1892
        %2439 = vmatprep.subr.bf16.mxu0 0
        %2440 = vmatpush2.bf16.msra.mxu0 %v1891
        %2441 = vmatprep.mubr.bf16.mxu0 %v769
        %2442 = vmatmul.mubr.bf16.gmra.mxu0 %v767
        %v2443 = vpop.f32.mrf.mxu0
        %v2444 = vadd.f32 %v2404, %v2443
        %v2445 = vpop.f32.mrf.mxu0
        %v2446 = vpop.f32.mrf.mxu0
        %v2447 = vpop.f32.mrf.mxu0
        %2448 = vdwg.mxu0
        %2449 = vmatprep.subr.bf16.mxu0 0
        %2450 = vmatpush1.bf16.msra.mxu0 %v1906
        %2451 = vmatprep.subr.bf16.mxu0 0
        %2452 = vmatpush1.bf16.msra.mxu0 %v1905
        %2453 = vmatprep.subr.bf16.mxu0 0
        %2454 = vmatpush1.bf16.msra.mxu0 %v1904
        %2455 = vmatprep.subr.bf16.mxu0 0
        %2456 = vmatpush1.bf16.msra.mxu0 %v1903
        %2457 = vmatprep.subr.bf16.mxu0 0
        %2458 = vmatpush1.bf16.msra.mxu0 %v1902
        %2459 = vmatprep.subr.bf16.mxu0 0
        %2460 = vmatpush1.bf16.msra.mxu0 %v1901
        %2461 = vmatprep.subr.bf16.mxu0 0
        %2462 = vmatpush1.bf16.msra.mxu0 %v1900
        %2463 = vmatprep.subr.bf16.mxu0 0
        %2464 = vmatpush1.bf16.msra.mxu0 %v1899
        %2465 = vmatprep.subr.bf16.mxu0 0
        %2466 = vmatpush2.bf16.msra.mxu0 %v1914
        %2467 = vmatprep.subr.bf16.mxu0 0
        %2468 = vmatpush2.bf16.msra.mxu0 %v1913
        %2469 = vmatprep.subr.bf16.mxu0 0
        %2470 = vmatpush2.bf16.msra.mxu0 %v1912
        %2471 = vmatprep.subr.bf16.mxu0 0
        %2472 = vmatpush2.bf16.msra.mxu0 %v1911
        %2473 = vmatprep.subr.bf16.mxu0 0
        %2474 = vmatpush2.bf16.msra.mxu0 %v1910
        %2475 = vmatprep.subr.bf16.mxu0 0
        %2476 = vmatpush2.bf16.msra.mxu0 %v1909
        %2477 = vmatprep.subr.bf16.mxu0 0
        %2478 = vmatpush2.bf16.msra.mxu0 %v1908
        %2479 = vmatprep.subr.bf16.mxu0 0
        %2480 = vmatpush2.bf16.msra.mxu0 %v1907
        %2481 = vmatprep.mubr.bf16.mxu0 %v807
        %2482 = vmatmul.mubr.bf16.gmra.mxu0 %v793
        %v2483 = vpop.f32.mrf.mxu0
        %v2484 = vadd.f32 %v2444, %v2483
        %v2485 = vpop.f32.mrf.mxu0
        %v2486 = vpop.f32.mrf.mxu0
        %v2487 = vpop.f32.mrf.mxu0
        %2488 = vdwg.mxu0
        %2489 = vmatprep.subr.bf16.mxu0 0
        %2490 = vmatpush1.bf16.msra.mxu0 %v1922
        %2491 = vmatprep.subr.bf16.mxu0 0
        %2492 = vmatpush1.bf16.msra.mxu0 %v1921
        %2493 = vmatprep.subr.bf16.mxu0 0
        %2494 = vmatpush1.bf16.msra.mxu0 %v1920
        %2495 = vmatprep.subr.bf16.mxu0 0
        %2496 = vmatpush1.bf16.msra.mxu0 %v1919
        %2497 = vmatprep.subr.bf16.mxu0 0
        %2498 = vmatpush1.bf16.msra.mxu0 %v1918
        %2499 = vmatprep.subr.bf16.mxu0 0
        %2500 = vmatpush1.bf16.msra.mxu0 %v1917
        %2501 = vmatprep.subr.bf16.mxu0 0
        %2502 = vmatpush1.bf16.msra.mxu0 %v1916
        %2503 = vmatprep.subr.bf16.mxu0 0
        %2504 = vmatpush1.bf16.msra.mxu0 %v1915
        %2505 = vmatprep.subr.bf16.mxu0 0
        %2506 = vmatpush2.bf16.msra.mxu0 %v1930
        %2507 = vmatprep.subr.bf16.mxu0 0
        %2508 = vmatpush2.bf16.msra.mxu0 %v1929
        %2509 = vmatprep.subr.bf16.mxu0 0
        %2510 = vmatpush2.bf16.msra.mxu0 %v1928
        %2511 = vmatprep.subr.bf16.mxu0 0
        %2512 = vmatpush2.bf16.msra.mxu0 %v1927
        %2513 = vmatprep.subr.bf16.mxu0 0
        %2514 = vmatpush2.bf16.msra.mxu0 %v1926
        %2515 = vmatprep.subr.bf16.mxu0 0
        %2516 = vmatpush2.bf16.msra.mxu0 %v1925
        %2517 = vmatprep.subr.bf16.mxu0 0
        %2518 = vmatpush2.bf16.msra.mxu0 %v1924
        %2519 = vmatprep.subr.bf16.mxu0 0
        %2520 = vmatpush2.bf16.msra.mxu0 %v1923
        %2521 = vmatprep.mubr.bf16.mxu0 %v817
        %2522 = vmatmul.mubr.bf16.gmra.mxu0 %v815
        %v2523 = vpop.f32.mrf.mxu0
        %v2524 = vadd.f32 %v2484, %v2523
        %v2525 = vpop.f32.mrf.mxu0
        %v2526 = vpop.f32.mrf.mxu0
        %v2527 = vpop.f32.mrf.mxu0
        %2528 = vdwg.mxu0
        %2529 = vmatprep.subr.bf16.mxu0 0
        %2530 = vmatpush1.bf16.msra.mxu0 %v1938
        %2531 = vmatprep.subr.bf16.mxu0 0
        %2532 = vmatpush1.bf16.msra.mxu0 %v1937
        %2533 = vmatprep.subr.bf16.mxu0 0
        %2534 = vmatpush1.bf16.msra.mxu0 %v1936
        %2535 = vmatprep.subr.bf16.mxu0 0
        %2536 = vmatpush1.bf16.msra.mxu0 %v1935
        %2537 = vmatprep.subr.bf16.mxu0 0
        %2538 = vmatpush1.bf16.msra.mxu0 %v1934
        %2539 = vmatprep.subr.bf16.mxu0 0
        %2540 = vmatpush1.bf16.msra.mxu0 %v1933
        %2541 = vmatprep.subr.bf16.mxu0 0
        %2542 = vmatpush1.bf16.msra.mxu0 %v1932
        %2543 = vmatprep.subr.bf16.mxu0 0
        %2544 = vmatpush1.bf16.msra.mxu0 %v1931
        %2545 = vmatprep.subr.bf16.mxu0 0
        %2546 = vmatpush2.bf16.msra.mxu0 %v1946
        %2547 = vmatprep.subr.bf16.mxu0 0
        %2548 = vmatpush2.bf16.msra.mxu0 %v1945
        %2549 = vmatprep.subr.bf16.mxu0 0
        %2550 = vmatpush2.bf16.msra.mxu0 %v1944
        %2551 = vmatprep.subr.bf16.mxu0 0
        %2552 = vmatpush2.bf16.msra.mxu0 %v1943
        %2553 = vmatprep.subr.bf16.mxu0 0
        %2554 = vmatpush2.bf16.msra.mxu0 %v1942
        %2555 = vmatprep.subr.bf16.mxu0 0
        %2556 = vmatpush2.bf16.msra.mxu0 %v1941
        %2557 = vmatprep.subr.bf16.mxu0 0
        %2558 = vmatpush2.bf16.msra.mxu0 %v1940
        %2559 = vmatprep.subr.bf16.mxu0 0
        %2560 = vmatpush2.bf16.msra.mxu0 %v1939
        %2561 = vmatprep.mubr.bf16.mxu0 %v814
        %2562 = vmatmul.mubr.bf16.gmra.mxu0 %v800
        %v2563 = vpop.f32.mrf.mxu0
        %v2564 = vadd.f32 %v2524, %v2563
        %v2565 = vpop.f32.mrf.mxu0
        %v2566 = vpop.f32.mrf.mxu0
        %v2567 = vpop.f32.mrf.mxu0
        %2568 = vdwg.mxu0
        %2569 = vmatprep.subr.bf16.mxu0 0
        %2570 = vmatpush1.bf16.msra.mxu0 %v1954
        %2571 = vmatprep.subr.bf16.mxu0 0
        %2572 = vmatpush1.bf16.msra.mxu0 %v1953
        %2573 = vmatprep.subr.bf16.mxu0 0
        %2574 = vmatpush1.bf16.msra.mxu0 %v1952
        %2575 = vmatprep.subr.bf16.mxu0 0
        %2576 = vmatpush1.bf16.msra.mxu0 %v1951
        %2577 = vmatprep.subr.bf16.mxu0 0
        %2578 = vmatpush1.bf16.msra.mxu0 %v1950
        %2579 = vmatprep.subr.bf16.mxu0 0
        %2580 = vmatpush1.bf16.msra.mxu0 %v1949
        %2581 = vmatprep.subr.bf16.mxu0 0
        %2582 = vmatpush1.bf16.msra.mxu0 %v1948
        %2583 = vmatprep.subr.bf16.mxu0 0
        %2584 = vmatpush1.bf16.msra.mxu0 %v1947
        %2585 = vmatprep.subr.bf16.mxu0 0
        %2586 = vmatpush2.bf16.msra.mxu0 %v1962
        %2587 = vmatprep.subr.bf16.mxu0 0
        %2588 = vmatpush2.bf16.msra.mxu0 %v1961
        %2589 = vmatprep.subr.bf16.mxu0 0
        %2590 = vmatpush2.bf16.msra.mxu0 %v1960
        %2591 = vmatprep.subr.bf16.mxu0 0
        %2592 = vmatpush2.bf16.msra.mxu0 %v1959
        %2593 = vmatprep.subr.bf16.mxu0 0
        %2594 = vmatpush2.bf16.msra.mxu0 %v1958
        %2595 = vmatprep.subr.bf16.mxu0 0
        %2596 = vmatpush2.bf16.msra.mxu0 %v1957
        %2597 = vmatprep.subr.bf16.mxu0 0
        %2598 = vmatpush2.bf16.msra.mxu0 %v1956
        %2599 = vmatprep.subr.bf16.mxu0 0
        %2600 = vmatpush2.bf16.msra.mxu0 %v1955
        %2601 = vmatprep.mubr.bf16.mxu0 %v818
        %2602 = vmatmul.mubr.bf16.gmra.mxu0 %v816
        %v2603 = vpop.f32.mrf.mxu0
        %v2604 = vadd.f32 %v2564, %v2603
        %v2605 = vpop.f32.mrf.mxu0
        %v2606 = vpop.f32.mrf.mxu0
        %v2607 = vpop.f32.mrf.mxu0
        %2608 = vdwg.mxu0
        %2609 = vmatprep.subr.bf16.mxu0 0
        %2610 = vmatpush1.bf16.msra.mxu0 %v1970
        %2611 = vmatprep.subr.bf16.mxu0 0
        %2612 = vmatpush1.bf16.msra.mxu0 %v1969
        %2613 = vmatprep.subr.bf16.mxu0 0
        %2614 = vmatpush1.bf16.msra.mxu0 %v1968
        %2615 = vmatprep.subr.bf16.mxu0 0
        %2616 = vmatpush1.bf16.msra.mxu0 %v1967
        %2617 = vmatprep.subr.bf16.mxu0 0
        %2618 = vmatpush1.bf16.msra.mxu0 %v1966
        %2619 = vmatprep.subr.bf16.mxu0 0
        %2620 = vmatpush1.bf16.msra.mxu0 %v1965
        %2621 = vmatprep.subr.bf16.mxu0 0
        %2622 = vmatpush1.bf16.msra.mxu0 %v1964
        %2623 = vmatprep.subr.bf16.mxu0 0
        %2624 = vmatpush1.bf16.msra.mxu0 %v1963
        %2625 = vmatprep.subr.bf16.mxu0 0
        %2626 = vmatpush2.bf16.msra.mxu0 %v1978
        %2627 = vmatprep.subr.bf16.mxu0 0
        %2628 = vmatpush2.bf16.msra.mxu0 %v1977
        %2629 = vmatprep.subr.bf16.mxu0 0
        %2630 = vmatpush2.bf16.msra.mxu0 %v1976
        %2631 = vmatprep.subr.bf16.mxu0 0
        %2632 = vmatpush2.bf16.msra.mxu0 %v1975
        %2633 = vmatprep.subr.bf16.mxu0 0
        %2634 = vmatpush2.bf16.msra.mxu0 %v1974
        %2635 = vmatprep.subr.bf16.mxu0 0
        %2636 = vmatpush2.bf16.msra.mxu0 %v1973
        %2637 = vmatprep.subr.bf16.mxu0 0
        %2638 = vmatpush2.bf16.msra.mxu0 %v1972
        %2639 = vmatprep.subr.bf16.mxu0 0
        %2640 = vmatpush2.bf16.msra.mxu0 %v1971
        %2641 = vmatprep.mubr.bf16.mxu0 %v856
        %2642 = vmatmul.mubr.bf16.gmra.mxu0 %v842
        %v2643 = vpop.f32.mrf.mxu0
        %v2644 = vadd.f32 %v2604, %v2643
        %v2645 = vpop.f32.mrf.mxu0
        %v2646 = vpop.f32.mrf.mxu0
        %v2647 = vpop.f32.mrf.mxu0
        %2648 = vdwg.mxu0
        %2649 = vmatprep.subr.bf16.mxu0 0
        %2650 = vmatpush1.bf16.msra.mxu0 %v1986
        %2651 = vmatprep.subr.bf16.mxu0 0
        %2652 = vmatpush1.bf16.msra.mxu0 %v1985
        %2653 = vmatprep.subr.bf16.mxu0 0
        %2654 = vmatpush1.bf16.msra.mxu0 %v1984
        %2655 = vmatprep.subr.bf16.mxu0 0
        %2656 = vmatpush1.bf16.msra.mxu0 %v1983
        %2657 = vmatprep.subr.bf16.mxu0 0
        %2658 = vmatpush1.bf16.msra.mxu0 %v1982
        %2659 = vmatprep.subr.bf16.mxu0 0
        %2660 = vmatpush1.bf16.msra.mxu0 %v1981
        %2661 = vmatprep.subr.bf16.mxu0 0
        %2662 = vmatpush1.bf16.msra.mxu0 %v1980
        %2663 = vmatprep.subr.bf16.mxu0 0
        %2664 = vmatpush1.bf16.msra.mxu0 %v1979
        %2665 = vmatprep.subr.bf16.mxu0 0
        %2666 = vmatpush2.bf16.msra.mxu0 %v1994
        %2667 = vmatprep.subr.bf16.mxu0 0
        %2668 = vmatpush2.bf16.msra.mxu0 %v1993
        %2669 = vmatprep.subr.bf16.mxu0 0
        %2670 = vmatpush2.bf16.msra.mxu0 %v1992
        %2671 = vmatprep.subr.bf16.mxu0 0
        %2672 = vmatpush2.bf16.msra.mxu0 %v1991
        %2673 = vmatprep.subr.bf16.mxu0 0
        %2674 = vmatpush2.bf16.msra.mxu0 %v1990
        %2675 = vmatprep.subr.bf16.mxu0 0
        %2676 = vmatpush2.bf16.msra.mxu0 %v1989
        %2677 = vmatprep.subr.bf16.mxu0 0
        %2678 = vmatpush2.bf16.msra.mxu0 %v1988
        %2679 = vmatprep.subr.bf16.mxu0 0
        %2680 = vmatpush2.bf16.msra.mxu0 %v1987
        %2681 = vmatprep.mubr.bf16.mxu0 %v866
        %2682 = vmatmul.mubr.bf16.gmra.mxu0 %v864
        %v2683 = vpop.f32.mrf.mxu0
        %v2684 = vadd.f32 %v2644, %v2683
        %v2685 = vpop.f32.mrf.mxu0
        %v2686 = vpop.f32.mrf.mxu0
        %v2687 = vpop.f32.mrf.mxu0
        %2688 = vdwg.mxu0
        %2689 = vmatprep.subr.bf16.mxu0 0
        %2690 = vmatpush1.bf16.msra.mxu0 %v2002
        %2691 = vmatprep.subr.bf16.mxu0 0
        %2692 = vmatpush1.bf16.msra.mxu0 %v2001
        %2693 = vmatprep.subr.bf16.mxu0 0
        %2694 = vmatpush1.bf16.msra.mxu0 %v2000
        %2695 = vmatprep.subr.bf16.mxu0 0
        %2696 = vmatpush1.bf16.msra.mxu0 %v1999
        %2697 = vmatprep.subr.bf16.mxu0 0
        %2698 = vmatpush1.bf16.msra.mxu0 %v1998
        %2699 = vmatprep.subr.bf16.mxu0 0
        %2700 = vmatpush1.bf16.msra.mxu0 %v1997
        %2701 = vmatprep.subr.bf16.mxu0 0
        %2702 = vmatpush1.bf16.msra.mxu0 %v1996
        %2703 = vmatprep.subr.bf16.mxu0 0
        %2704 = vmatpush1.bf16.msra.mxu0 %v1995
        %2705 = vmatprep.subr.bf16.mxu0 0
        %2706 = vmatpush2.bf16.msra.mxu0 %v2010
        %2707 = vmatprep.subr.bf16.mxu0 0
        %2708 = vmatpush2.bf16.msra.mxu0 %v2009
        %2709 = vmatprep.subr.bf16.mxu0 0
        %2710 = vmatpush2.bf16.msra.mxu0 %v2008
        %2711 = vmatprep.subr.bf16.mxu0 0
        %2712 = vmatpush2.bf16.msra.mxu0 %v2007
        %2713 = vmatprep.subr.bf16.mxu0 0
        %2714 = vmatpush2.bf16.msra.mxu0 %v2006
        %2715 = vmatprep.subr.bf16.mxu0 0
        %2716 = vmatpush2.bf16.msra.mxu0 %v2005
        %2717 = vmatprep.subr.bf16.mxu0 0
        %2718 = vmatpush2.bf16.msra.mxu0 %v2004
        %2719 = vmatprep.subr.bf16.mxu0 0
        %2720 = vmatpush2.bf16.msra.mxu0 %v2003
        %2721 = vmatprep.mubr.bf16.mxu0 %v863
        %2722 = vmatmul.mubr.bf16.gmra.mxu0 %v849
        %v2723 = vpop.f32.mrf.mxu0
        %v2724 = vadd.f32 %v2684, %v2723
        %v2725 = vpop.f32.mrf.mxu0
        %v2726 = vpop.f32.mrf.mxu0
        %v2727 = vpop.f32.mrf.mxu0
        %2728 = vdwg.mxu0
        %2729 = vmatprep.subr.bf16.mxu0 0
        %2730 = vmatpush1.bf16.msra.mxu0 %v2018
        %2731 = vmatprep.subr.bf16.mxu0 0
        %2732 = vmatpush1.bf16.msra.mxu0 %v2017
        %2733 = vmatprep.subr.bf16.mxu0 0
        %2734 = vmatpush1.bf16.msra.mxu0 %v2016
        %2735 = vmatprep.subr.bf16.mxu0 0
        %2736 = vmatpush1.bf16.msra.mxu0 %v2015
        %2737 = vmatprep.subr.bf16.mxu0 0
        %2738 = vmatpush1.bf16.msra.mxu0 %v2014
        %2739 = vmatprep.subr.bf16.mxu0 0
        %2740 = vmatpush1.bf16.msra.mxu0 %v2013
        %2741 = vmatprep.subr.bf16.mxu0 0
        %2742 = vmatpush1.bf16.msra.mxu0 %v2012
        %2743 = vmatprep.subr.bf16.mxu0 0
        %2744 = vmatpush1.bf16.msra.mxu0 %v2011
        %2745 = vmatprep.subr.bf16.mxu0 0
        %2746 = vmatpush2.bf16.msra.mxu0 %v2026
        %2747 = vmatprep.subr.bf16.mxu0 0
        %2748 = vmatpush2.bf16.msra.mxu0 %v2025
        %2749 = vmatprep.subr.bf16.mxu0 0
        %2750 = vmatpush2.bf16.msra.mxu0 %v2024
        %2751 = vmatprep.subr.bf16.mxu0 0
        %2752 = vmatpush2.bf16.msra.mxu0 %v2023
        %2753 = vmatprep.subr.bf16.mxu0 0
        %2754 = vmatpush2.bf16.msra.mxu0 %v2022
        %2755 = vmatprep.subr.bf16.mxu0 0
        %2756 = vmatpush2.bf16.msra.mxu0 %v2021
        %2757 = vmatprep.subr.bf16.mxu0 0
        %2758 = vmatpush2.bf16.msra.mxu0 %v2020
        %2759 = vmatprep.subr.bf16.mxu0 0
        %2760 = vmatpush2.bf16.msra.mxu0 %v2019
        %2761 = vmatprep.mubr.bf16.mxu0 %v867
        %2762 = vmatmul.mubr.bf16.gmra.mxu0 %v865
        %v2763 = vpop.f32.mrf.mxu0
        %v2764 = vadd.f32 %v2724, %v2763
        %v2765 = vpop.f32.mrf.mxu0
        %v2766 = vpop.f32.mrf.mxu0
        %v2767 = vpop.f32.mrf.mxu0
        %2768 = vdwg.mxu0
        %2769 = vmatprep.subr.bf16.mxu0 0
        %2770 = vmatpush1.bf16.msra.mxu0 %v2034
        %2771 = vmatprep.subr.bf16.mxu0 0
        %2772 = vmatpush1.bf16.msra.mxu0 %v2033
        %2773 = vmatprep.subr.bf16.mxu0 0
        %2774 = vmatpush1.bf16.msra.mxu0 %v2032
        %2775 = vmatprep.subr.bf16.mxu0 0
        %2776 = vmatpush1.bf16.msra.mxu0 %v2031
        %2777 = vmatprep.subr.bf16.mxu0 0
        %2778 = vmatpush1.bf16.msra.mxu0 %v2030
        %2779 = vmatprep.subr.bf16.mxu0 0
        %2780 = vmatpush1.bf16.msra.mxu0 %v2029
        %2781 = vmatprep.subr.bf16.mxu0 0
        %2782 = vmatpush1.bf16.msra.mxu0 %v2028
        %2783 = vmatprep.subr.bf16.mxu0 0
        %2784 = vmatpush1.bf16.msra.mxu0 %v2027
        %2785 = vmatprep.subr.bf16.mxu0 0
        %2786 = vmatpush2.bf16.msra.mxu0 %v2042
        %2787 = vmatprep.subr.bf16.mxu0 0
        %2788 = vmatpush2.bf16.msra.mxu0 %v2041
        %2789 = vmatprep.subr.bf16.mxu0 0
        %2790 = vmatpush2.bf16.msra.mxu0 %v2040
        %2791 = vmatprep.subr.bf16.mxu0 0
        %2792 = vmatpush2.bf16.msra.mxu0 %v2039
        %2793 = vmatprep.subr.bf16.mxu0 0
        %2794 = vmatpush2.bf16.msra.mxu0 %v2038
        %2795 = vmatprep.subr.bf16.mxu0 0
        %2796 = vmatpush2.bf16.msra.mxu0 %v2037
        %2797 = vmatprep.subr.bf16.mxu0 0
        %2798 = vmatpush2.bf16.msra.mxu0 %v2036
        %2799 = vmatprep.subr.bf16.mxu0 0
        %2800 = vmatpush2.bf16.msra.mxu0 %v2035
        %2801 = vmatprep.mubr.bf16.mxu0 %v904
        %2802 = vmatmul.mubr.bf16.gmra.mxu0 %v890
        %v2803 = vpop.f32.mrf.mxu0
        %v2804 = vadd.f32 %v2764, %v2803
        %v2805 = vpop.f32.mrf.mxu0
        %v2806 = vpop.f32.mrf.mxu0
        %v2807 = vpop.f32.mrf.mxu0
        %2808 = vdwg.mxu0
        %2809 = vmatprep.subr.bf16.mxu0 0
        %2810 = vmatpush1.bf16.msra.mxu0 %v2050
        %2811 = vmatprep.subr.bf16.mxu0 0
        %2812 = vmatpush1.bf16.msra.mxu0 %v2049
        %2813 = vmatprep.subr.bf16.mxu0 0
        %2814 = vmatpush1.bf16.msra.mxu0 %v2048
        %2815 = vmatprep.subr.bf16.mxu0 0
        %2816 = vmatpush1.bf16.msra.mxu0 %v2047
        %2817 = vmatprep.subr.bf16.mxu0 0
        %2818 = vmatpush1.bf16.msra.mxu0 %v2046
        %2819 = vmatprep.subr.bf16.mxu0 0
        %2820 = vmatpush1.bf16.msra.mxu0 %v2045
        %2821 = vmatprep.subr.bf16.mxu0 0
        %2822 = vmatpush1.bf16.msra.mxu0 %v2044
        %2823 = vmatprep.subr.bf16.mxu0 0
        %2824 = vmatpush1.bf16.msra.mxu0 %v2043
        %2825 = vmatprep.subr.bf16.mxu0 0
        %2826 = vmatpush2.bf16.msra.mxu0 %v2058
        %2827 = vmatprep.subr.bf16.mxu0 0
        %2828 = vmatpush2.bf16.msra.mxu0 %v2057
        %2829 = vmatprep.subr.bf16.mxu0 0
        %2830 = vmatpush2.bf16.msra.mxu0 %v2056
        %2831 = vmatprep.subr.bf16.mxu0 0
        %2832 = vmatpush2.bf16.msra.mxu0 %v2055
        %2833 = vmatprep.subr.bf16.mxu0 0
        %2834 = vmatpush2.bf16.msra.mxu0 %v2054
        %2835 = vmatprep.subr.bf16.mxu0 0
        %2836 = vmatpush2.bf16.msra.mxu0 %v2053
        %2837 = vmatprep.subr.bf16.mxu0 0
        %2838 = vmatpush2.bf16.msra.mxu0 %v2052
        %2839 = vmatprep.subr.bf16.mxu0 0
        %2840 = vmatpush2.bf16.msra.mxu0 %v2051
        %2841 = vmatprep.mubr.bf16.mxu0 %v906
        %2842 = vmatmul.mubr.bf16.gmra.mxu0 %v905
        %v2843 = vpop.f32.mrf.mxu0
        %v2844 = vadd.f32 %v2804, %v2843
        %v2845 = vpop.f32.mrf.mxu0
        %v2846 = vpop.f32.mrf.mxu0
        %v2847 = vpop.f32.mrf.mxu0
        %2848 = vdwg.mxu0
        %2849 = vmatprep.subr.bf16.mxu0 0
        %2850 = vmatpush1.bf16.msra.mxu0 0
        %2851 = vmatprep.subr.bf16.mxu0 0
        %2852 = vmatpush1.bf16.msra.mxu0 0
        %2853 = vmatprep.subr.bf16.mxu0 0
        %2854 = vmatpush1.bf16.msra.mxu0 0
        %2855 = vmatprep.subr.bf16.mxu0 0
        %2856 = vmatpush1.bf16.msra.mxu0 0
        %2857 = vmatprep.subr.bf16.mxu0 0
        %2858 = vmatpush1.bf16.msra.mxu0 0
        %2859 = vmatprep.subr.bf16.mxu0 0
        %2860 = vmatpush1.bf16.msra.mxu0 0
        %2861 = vmatprep.subr.bf16.mxu0 0
        %2862 = vmatpush1.bf16.msra.mxu0 0
        %2863 = vmatprep.subr.bf16.mxu0 0
        %2864 = vmatpush1.bf16.msra.mxu0 %v2059
        %2865 = vmatprep.subr.bf16.mxu0 0
        %2866 = vmatpush2.bf16.msra.mxu0 0
        %2867 = vmatprep.subr.bf16.mxu0 0
        %2868 = vmatpush2.bf16.msra.mxu0 0
        %2869 = vmatprep.subr.bf16.mxu0 0
        %2870 = vmatpush2.bf16.msra.mxu0 0
        %2871 = vmatprep.subr.bf16.mxu0 0
        %2872 = vmatpush2.bf16.msra.mxu0 0
        %2873 = vmatprep.subr.bf16.mxu0 0
        %2874 = vmatpush2.bf16.msra.mxu0 0
        %2875 = vmatprep.subr.bf16.mxu0 0
        %2876 = vmatpush2.bf16.msra.mxu0 0
        %2877 = vmatprep.subr.bf16.mxu0 0
        %2878 = vmatpush2.bf16.msra.mxu0 0
        %2879 = vmatprep.subr.bf16.mxu0 0
        %2880 = vmatpush2.bf16.msra.mxu0 0
        %2881 = vmatprep.mubr.bf16.mxu0 0
        %2882 = vmatmul.mubr.bf16.gmra.mxu0 %v2287
        %v2883 = vpop.f32.mrf.mxu0
        %v2884 = vadd.f32 %v2844, %v2883
        %v2885 = vpop.f32.mrf.mxu0
        %v2886 = vpop.f32.mrf.mxu0
        %v2887 = vpop.f32.mrf.mxu0
        %2888 = vdwg.mxu0
        %v2889 = vadd.f32 %v262, %v2884
        %vm2890 = vcmask 402432
        %2891 = vst.msk [vmem:[#allocation2] sm:$0x3] %vm2890, %v2889
        %p2892 = scmp.eq.s32.totalorder %s18, 3
        // Predicated region
        $region49: #{cnn_lstm_forward.3} parent=43 // pred_check
          %p2893 = pneg %p2892
        $region50: #{cnn_lstm_forward.3} parent=43 // pred_check_branch
          %2895 = sbr.rel (%p2893) target = $region52
        $region51: #{cnn_lstm_forward.3} parent=43 // pred_region
          %v2896 = vld [vmem:[#allocation2] sm:$0x3]
          %v2897 = vld [vmem:[%s5] sm:$0x1]
          %v2899 = vlaneseq
          %v2900 = vshrl.u32 %v2899, 7
          %v2901 = vsub.s32 0, %v2900
          %v2902 = vrot.slane %v2897, %v2901
          %v2904 = vadd.f32 %v2896, %v2902
          %v2905 = vmax.f32 %v2904, 0.0
          %v2906 = vpack.c.bf16 %v2905, %v2905
          %v2907 = vld [vmem:[%s2] sm:$0xf]
          %v2908 = vld [vmem:[%s2 + $0x1c] sm:$0xf]
          %v2909 = vld [vmem:[%s2 + $0x38] sm:$0xf]
          %v2910 = vld [vmem:[%s2 + $0x54] sm:$0xf]
          %v2911 = vld [vmem:[%s2 + $0x70] sm:$0xf]
          %v2912 = vld [vmem:[%s2 + $0x8c] sm:$0xf]
          %v2913 = vld [vmem:[%s2 + $0xa8] sm:$0x1]
          %v2921 = vunpack.c.l.b16 %v2907
          %v2922 = vunpack.c.l.b16 %v2908
          %v2923 = vunpack.c.l.b16 %v2909
          %v2924 = vunpack.c.l.b16 %v2910
          %v2925 = vunpack.c.l.b16 %v2911
          %v2926 = vunpack.c.l.b16 %v2912
          %v2927 = vunpack.c.l.b16 %v2913
          %v2928 = vpack.c.b16 %v2922, %v2921
          %v2929 = vpack.c.b16 %v2924, %v2923
          %v2930 = vpack.c.b16 %v2926, %v2925
          %v2931 = vpack.c.b16 %v2927, %v2927
          %vm2935 = vcmask 408576
          %v2937 = vsel %vm2935, %v2906, 0
          %vm2939 = vcmask 1040384
          %v2941 = vsel %vm2939, %v2931, 0
          %2943 = vmatprep.subr.bf16.mxu0 0
          %2944 = vmatpush1.bf16.msra.mxu0 0
          %2945 = vmatprep.subr.bf16.mxu0 0
          %2946 = vmatpush1.bf16.msra.mxu0 0
          %2947 = vmatprep.subr.bf16.mxu0 0
          %2948 = vmatpush1.bf16.msra.mxu0 0
          %2949 = vmatprep.subr.bf16.mxu0 0
          %2950 = vmatpush1.bf16.msra.mxu0 0
          %2951 = vmatprep.subr.bf16.mxu0 0
          %2952 = vmatpush1.bf16.msra.mxu0 %v2941
          %2953 = vmatprep.subr.bf16.mxu0 0
          %2954 = vmatpush1.bf16.msra.mxu0 %v2930
          %2955 = vmatprep.subr.bf16.mxu0 0
          %2956 = vmatpush1.bf16.msra.mxu0 %v2929
          %2957 = vmatprep.subr.bf16.mxu0 0
          %2958 = vmatpush1.bf16.msra.mxu0 %v2928
          %2959 = vmatprep.subr.bf16.mxu0 0
          %2960 = vmatpush2.bf16.msra.mxu0 0
          %2961 = vmatprep.subr.bf16.mxu0 0
          %2962 = vmatpush2.bf16.msra.mxu0 0
          %2963 = vmatprep.subr.bf16.mxu0 0
          %2964 = vmatpush2.bf16.msra.mxu0 0
          %2965 = vmatprep.subr.bf16.mxu0 0
          %2966 = vmatpush2.bf16.msra.mxu0 0
          %2967 = vmatprep.subr.bf16.mxu0 0
          %2968 = vmatpush2.bf16.msra.mxu0 0
          %2969 = vmatprep.subr.bf16.mxu0 0
          %2970 = vmatpush2.bf16.msra.mxu0 0
          %2971 = vmatprep.subr.bf16.mxu0 0
          %2972 = vmatpush2.bf16.msra.mxu0 0
          %2973 = vmatprep.subr.bf16.mxu0 0
          %2974 = vmatpush2.bf16.msra.mxu0 0
          %2975 = vmatprep.mubr.bf16.mxu0 0
          %2976 = vmatmul.mubr.bf16.gmra.mxu0 %v2937
          %v2977 = vpop.f32.mrf.mxu0
          %v2978 = vadd.f32 0.0, %v2977
          %v2979 = vpop.f32.mrf.mxu0
          %v2980 = vpop.f32.mrf.mxu0
          %v2981 = vpop.f32.mrf.mxu0
          %2982 = vdwg.mxu0
          %v2983 = vmax.f32 %v2978, 0.0
          %v2984 = vpack.c.bf16 %v2983, %v2983
          %v2985 = vld [vmem:[%s3] sm:$0xf]
          %v2986 = vld [vmem:[%s3 + $0xc] sm:$0xf]
          %v2987 = vld [vmem:[%s3 + $0x18] sm:$0xf]
          %v2988 = vld [vmem:[%s3 + $0x24] sm:$0xf]
          %v2989 = vld [vmem:[%s3 + $0x30] sm:$0xf]
          %v2990 = vld [vmem:[%s3 + $0x3c] sm:$0xf]
          %v2991 = vld [vmem:[%s3 + $0x48] sm:$0xf]
          %v2992 = vld [vmem:[%s3 + $0x54] sm:$0xf]
          %v2993 = vld [vmem:[%s3 + $0x60] sm:$0xf]
          %v2994 = vld [vmem:[%s3 + $0x6c] sm:$0xf]
          %v2995 = vld [vmem:[%s3 + $0x78] sm:$0xf]
          %v2996 = vld [vmem:[%s3 + $0x84] sm:$0xf]
          %v2997 = vld [vmem:[%s3 + $0x90] sm:$0xf]
          %v2998 = vld [vmem:[%s3 + $0x9c] sm:$0xf]
          %v2999 = vld [vmem:[%s3 + $0xa8] sm:$0xf]
          %v3000 = vld [vmem:[%s3 + $0xb4] sm:$0xf]
          %v3017 = vunpack.c.l.b16 %v2985
          %v3018 = vunpack.c.l.b16 %v2986
          %v3019 = vunpack.c.l.b16 %v2987
          %v3020 = vunpack.c.l.b16 %v2988
          %v3021 = vunpack.c.l.b16 %v2989
          %v3022 = vunpack.c.l.b16 %v2990
          %v3023 = vunpack.c.l.b16 %v2991
          %v3024 = vunpack.c.l.b16 %v2992
          %v3025 = vunpack.c.l.b16 %v2993
          %v3026 = vunpack.c.l.b16 %v2994
          %v3027 = vunpack.c.l.b16 %v2995
          %v3028 = vunpack.c.l.b16 %v2996
          %v3029 = vunpack.c.l.b16 %v2997
          %v3030 = vunpack.c.l.b16 %v2998
          %v3031 = vunpack.c.l.b16 %v2999
          %v3032 = vunpack.c.l.b16 %v3000
          %v3033 = vpack.c.b16 %v3018, %v3017
          %v3034 = vpack.c.b16 %v3020, %v3019
          %v3035 = vpack.c.b16 %v3022, %v3021
          %v3036 = vpack.c.b16 %v3024, %v3023
          %v3037 = vpack.c.b16 %v3026, %v3025
          %v3038 = vpack.c.b16 %v3028, %v3027
          %v3039 = vpack.c.b16 %v3030, %v3029
          %v3040 = vpack.c.b16 %v3032, %v3031
          %3049 = vmatprep.subr.bf16.mxu0 0
          %3050 = vmatpush1.bf16.msra.mxu0 %v3040
          %3051 = vmatprep.subr.bf16.mxu0 0
          %3052 = vmatpush1.bf16.msra.mxu0 %v3039
          %3053 = vmatprep.subr.bf16.mxu0 0
          %3054 = vmatpush1.bf16.msra.mxu0 %v3038
          %3055 = vmatprep.subr.bf16.mxu0 0
          %3056 = vmatpush1.bf16.msra.mxu0 %v3037
          %3057 = vmatprep.subr.bf16.mxu0 0
          %3058 = vmatpush1.bf16.msra.mxu0 %v3036
          %3059 = vmatprep.subr.bf16.mxu0 0
          %3060 = vmatpush1.bf16.msra.mxu0 %v3035
          %3061 = vmatprep.subr.bf16.mxu0 0
          %3062 = vmatpush1.bf16.msra.mxu0 %v3034
          %3063 = vmatprep.subr.bf16.mxu0 0
          %3064 = vmatpush1.bf16.msra.mxu0 %v3033
          %3065 = vmatprep.subr.bf16.mxu0 0
          %3066 = vmatpush2.bf16.msra.mxu0 0
          %3067 = vmatprep.subr.bf16.mxu0 0
          %3068 = vmatpush2.bf16.msra.mxu0 0
          %3069 = vmatprep.subr.bf16.mxu0 0
          %3070 = vmatpush2.bf16.msra.mxu0 0
          %3071 = vmatprep.subr.bf16.mxu0 0
          %3072 = vmatpush2.bf16.msra.mxu0 0
          %3073 = vmatprep.subr.bf16.mxu0 0
          %3074 = vmatpush2.bf16.msra.mxu0 0
          %3075 = vmatprep.subr.bf16.mxu0 0
          %3076 = vmatpush2.bf16.msra.mxu0 0
          %3077 = vmatprep.subr.bf16.mxu0 0
          %3078 = vmatpush2.bf16.msra.mxu0 0
          %3079 = vmatprep.subr.bf16.mxu0 0
          %3080 = vmatpush2.bf16.msra.mxu0 0
          %3081 = vmatprep.mubr.bf16.mxu0 0
          %3082 = vmatmul.mubr.bf16.gmra.mxu0 %v2984
          %v3083 = vpop.f32.mrf.mxu0
          %v3084 = vadd.f32 0.0, %v3083
          %v3085 = vpop.f32.mrf.mxu0
          %v3086 = vpop.f32.mrf.mxu0
          %v3087 = vpop.f32.mrf.mxu0
          %3088 = vdwg.mxu0
          %v3089 = vxor.u32 %v3084, 2147483648
          %v3090 = vmul.f32 %v3089, 1.442695
          %v3091 = vpow.pop %v3090
          %v3092 = vadd.f32 %v3091, 1.0
          %v3093 = vrcp.pop %v3092
          %v3094 = vmul.f32 1.0, %v3093
          %v3095 = vmul.f32 %v3094, %v2905
          %v3096 = vpack.c.bf16 %v3095, %v3095
          %v3097 = vld [vmem:[%s2 + $0x4] sm:$0xff]
          %v3098 = vld [vmem:[%s2 + $0xc] sm:$0xff]
          %v3099 = vld [vmem:[%s2 + $0x14] sm:$0xff]
          %v3100 = vld [vmem:[%s2 + $0x20] sm:$0xff]
          %v3101 = vld [vmem:[%s2 + $0x28] sm:$0xff]
          %v3102 = vld [vmem:[%s2 + $0x30] sm:$0xff]
          %v3103 = vld [vmem:[%s2 + $0x3c] sm:$0xff]
          %v3104 = vld [vmem:[%s2 + $0x44] sm:$0xff]
          %v3105 = vld [vmem:[%s2 + $0x4c] sm:$0xff]
          %v3106 = vld [vmem:[%s2 + $0x58] sm:$0xff]
          %v3107 = vld [vmem:[%s2 + $0x60] sm:$0xff]
          %v3108 = vld [vmem:[%s2 + $0x68] sm:$0xff]
          %v3109 = vld [vmem:[%s2 + $0x74] sm:$0xff]
          %v3110 = vld [vmem:[%s2 + $0x7c] sm:$0xff]
          %v3111 = vld [vmem:[%s2 + $0x84] sm:$0xff]
          %v3112 = vld [vmem:[%s2 + $0x90] sm:$0xff]
          %v3113 = vld [vmem:[%s2 + $0x98] sm:$0xff]
          %v3114 = vld [vmem:[%s2 + $0xa0] sm:$0xff]
          %v3115 = vld [vmem:[%s2 + $0xac] sm:$0x11]
          %v3116 = vld [vmem:[%s2 + $0xb4] sm:$0x11]
          %v3117 = vld [vmem:[%s2 + $0xbc] sm:$0x11]
          %v3118 = vld [vmem:[%s5 + $0x1] sm:$0x3f]
          %v3120 = vlaneseq
          %v3121 = vshrl.u32 %v3120, 7
          %v3122 = vsub.s32 0, %v3121
          %v3123 = vrot.slane %v3118, %v3122
          %v3124 = vlaneseq
          %v3125 = vshrl.u32 %v3124, 7
          %v3126 = vsub.s32 1, %v3125
          %v3127 = vrot.slane %v3118, %v3126
          %v3128 = vlaneseq
          %v3129 = vshrl.u32 %v3128, 7
          %v3130 = vsub.s32 2, %v3129
          %v3131 = vrot.slane %v3118, %v3130
          %v3132 = vlaneseq
          %v3133 = vshrl.u32 %v3132, 7
          %v3134 = vsub.s32 3, %v3133
          %v3135 = vrot.slane %v3118, %v3134
          %v3136 = vlaneseq
          %v3137 = vshrl.u32 %v3136, 7
          %v3138 = vsub.s32 4, %v3137
          %v3139 = vrot.slane %v3118, %v3138
          %v3140 = vlaneseq
          %v3141 = vshrl.u32 %v3140, 7
          %v3142 = vsub.s32 5, %v3141
          %v3143 = vrot.slane %v3118, %v3142
          %v3171 = vunpack.c.l.b16 %v3097
          %v3172 = vunpack.c.h.b16 %v3097
          %v3173 = vunpack.c.l.b16 %v3098
          %v3174 = vunpack.c.h.b16 %v3098
          %v3175 = vunpack.c.l.b16 %v3099
          %v3176 = vunpack.c.h.b16 %v3099
          %v3177 = vunpack.c.l.b16 %v3100
          %v3178 = vunpack.c.h.b16 %v3100
          %v3179 = vunpack.c.l.b16 %v3101
          %v3180 = vunpack.c.h.b16 %v3101
          %v3181 = vunpack.c.l.b16 %v3102
          %v3182 = vunpack.c.h.b16 %v3102
          %v3183 = vunpack.c.l.b16 %v3103
          %v3184 = vunpack.c.h.b16 %v3103
          %v3185 = vunpack.c.l.b16 %v3104
          %v3186 = vunpack.c.h.b16 %v3104
          %v3187 = vunpack.c.l.b16 %v3105
          %v3188 = vunpack.c.h.b16 %v3105
          %v3189 = vunpack.c.l.b16 %v3106
          %v3190 = vunpack.c.h.b16 %v3106
          %v3191 = vunpack.c.l.b16 %v3107
          %v3192 = vunpack.c.h.b16 %v3107
          %v3193 = vunpack.c.l.b16 %v3108
          %v3194 = vunpack.c.h.b16 %v3108
          %v3195 = vunpack.c.l.b16 %v3109
          %v3196 = vunpack.c.h.b16 %v3109
          %v3197 = vunpack.c.l.b16 %v3110
          %v3198 = vunpack.c.h.b16 %v3110
          %v3199 = vunpack.c.l.b16 %v3111
          %v3200 = vunpack.c.h.b16 %v3111
          %v3201 = vunpack.c.l.b16 %v3112
          %v3202 = vunpack.c.h.b16 %v3112
          %v3203 = vunpack.c.l.b16 %v3113
          %v3204 = vunpack.c.h.b16 %v3113
          %v3205 = vunpack.c.l.b16 %v3114
          %v3206 = vunpack.c.h.b16 %v3114
          %v3207 = vunpack.c.l.b16 %v3115
          %v3208 = vunpack.c.h.b16 %v3115
          %v3209 = vunpack.c.l.b16 %v3116
          %v3210 = vunpack.c.h.b16 %v3116
          %v3211 = vunpack.c.l.b16 %v3117
          %v3212 = vunpack.c.h.b16 %v3117
          %v3213 = vpack.c.b16 %v3177, %v3171
          %v3214 = vpack.c.b16 %v3178, %v3172
          %v3215 = vpack.c.b16 %v3179, %v3173
          %v3216 = vpack.c.b16 %v3180, %v3174
          %v3217 = vpack.c.b16 %v3181, %v3175
          %v3218 = vpack.c.b16 %v3182, %v3176
          %v3219 = vpack.c.b16 %v3189, %v3183
          %v3220 = vpack.c.b16 %v3190, %v3184
          %v3221 = vpack.c.b16 %v3191, %v3185
          %v3222 = vpack.c.b16 %v3192, %v3186
          %v3223 = vpack.c.b16 %v3193, %v3187
          %v3224 = vpack.c.b16 %v3194, %v3188
          %v3225 = vpack.c.b16 %v3201, %v3195
          %v3226 = vpack.c.b16 %v3202, %v3196
          %v3227 = vpack.c.b16 %v3203, %v3197
          %v3228 = vpack.c.b16 %v3204, %v3198
          %v3229 = vpack.c.b16 %v3205, %v3199
          %v3230 = vpack.c.b16 %v3206, %v3200
          %v3231 = vpack.c.b16 %v3207, %v3207
          %v3232 = vpack.c.b16 %v3208, %v3208
          %v3233 = vpack.c.b16 %v3209, %v3209
          %v3234 = vpack.c.b16 %v3210, %v3210
          %v3235 = vpack.c.b16 %v3211, %v3211
          %v3236 = vpack.c.b16 %v3212, %v3212
          %v3256 = vsel %vm2935, %v3096, 0
          %v3259 = vsel %vm2939, %v3231, 0
          %v3262 = vsel %vm2939, %v3232, 0
          %v3265 = vsel %vm2939, %v3233, 0
          %v3268 = vsel %vm2939, %v3234, 0
          %v3271 = vsel %vm2939, %v3235, 0
          %v3274 = vsel %vm2939, %v3236, 0
          %3276 = vmatprep.subr.bf16.mxu0 0
          %3277 = vmatpush1.bf16.msra.mxu0 0
          %3278 = vmatprep.subr.bf16.mxu0 0
          %3279 = vmatpush1.bf16.msra.mxu0 0
          %3280 = vmatprep.subr.bf16.mxu0 0
          %3281 = vmatpush1.bf16.msra.mxu0 0
          %3282 = vmatprep.subr.bf16.mxu0 0
          %3283 = vmatpush1.bf16.msra.mxu0 0
          %3284 = vmatprep.subr.bf16.mxu0 %v3262
          %3285 = vmatpush1.bf16.msra.mxu0 %v3259
          %3286 = vmatprep.subr.bf16.mxu0 %v3226
          %3287 = vmatpush1.bf16.msra.mxu0 %v3225
          %3288 = vmatprep.subr.bf16.mxu0 %v3220
          %3289 = vmatpush1.bf16.msra.mxu0 %v3219
          %3290 = vmatprep.subr.bf16.mxu0 %v3214
          %3291 = vmatpush1.bf16.msra.mxu0 %v3213
          %3292 = vmatprep.subr.bf16.mxu0 0
          %3293 = vmatpush2.bf16.msra.mxu0 0
          %3294 = vmatprep.subr.bf16.mxu0 0
          %3295 = vmatpush2.bf16.msra.mxu0 0
          %3296 = vmatprep.subr.bf16.mxu0 0
          %3297 = vmatpush2.bf16.msra.mxu0 0
          %3298 = vmatprep.subr.bf16.mxu0 0
          %3299 = vmatpush2.bf16.msra.mxu0 0
          %3300 = vmatprep.subr.bf16.mxu0 0
          %3301 = vmatpush2.bf16.msra.mxu0 0
          %3302 = vmatprep.subr.bf16.mxu0 0
          %3303 = vmatpush2.bf16.msra.mxu0 0
          %3304 = vmatprep.subr.bf16.mxu0 0
          %3305 = vmatpush2.bf16.msra.mxu0 0
          %3306 = vmatprep.subr.bf16.mxu0 0
          %3307 = vmatpush2.bf16.msra.mxu0 0
          %3308 = vmatprep.mubr.bf16.mxu0 0
          %3309 = vmatmul.mubr.bf16.gmra.mxu0 %v3256
          %v3310 = vpop.f32.mrf.mxu0
          %v3311 = vadd.f32 %v3123, %v3310
          %v3312 = vpop.f32.mrf.mxu0
          %v3313 = vadd.f32 %v3127, %v3312
          %v3314 = vpop.f32.mrf.mxu0
          %v3315 = vpop.f32.mrf.mxu0
          %3316 = vdwg.mxu0
          %3317 = vmatprep.subr.bf16.mxu0 0
          %3318 = vmatpush1.bf16.msra.mxu0 0
          %3319 = vmatprep.subr.bf16.mxu0 0
          %3320 = vmatpush1.bf16.msra.mxu0 0
          %3321 = vmatprep.subr.bf16.mxu0 0
          %3322 = vmatpush1.bf16.msra.mxu0 0
          %3323 = vmatprep.subr.bf16.mxu0 0
          %3324 = vmatpush1.bf16.msra.mxu0 0
          %3325 = vmatprep.subr.bf16.mxu0 %v3268
          %3326 = vmatpush1.bf16.msra.mxu0 %v3265
          %3327 = vmatprep.subr.bf16.mxu0 %v3228
          %3328 = vmatpush1.bf16.msra.mxu0 %v3227
          %3329 = vmatprep.subr.bf16.mxu0 %v3222
          %3330 = vmatpush1.bf16.msra.mxu0 %v3221
          %3331 = vmatprep.subr.bf16.mxu0 %v3216
          %3332 = vmatpush1.bf16.msra.mxu0 %v3215
          %3333 = vmatprep.subr.bf16.mxu0 0
          %3334 = vmatpush2.bf16.msra.mxu0 0
          %3335 = vmatprep.subr.bf16.mxu0 0
          %3336 = vmatpush2.bf16.msra.mxu0 0
          %3337 = vmatprep.subr.bf16.mxu0 0
          %3338 = vmatpush2.bf16.msra.mxu0 0
          %3339 = vmatprep.subr.bf16.mxu0 0
          %3340 = vmatpush2.bf16.msra.mxu0 0
          %3341 = vmatprep.subr.bf16.mxu0 0
          %3342 = vmatpush2.bf16.msra.mxu0 0
          %3343 = vmatprep.subr.bf16.mxu0 0
          %3344 = vmatpush2.bf16.msra.mxu0 0
          %3345 = vmatprep.subr.bf16.mxu0 0
          %3346 = vmatpush2.bf16.msra.mxu0 0
          %3347 = vmatprep.subr.bf16.mxu0 0
          %3348 = vmatpush2.bf16.msra.mxu0 0
          %3349 = vmatprep.mubr.bf16.mxu0 0
          %3350 = vmatmul.mubr.bf16.gmra.mxu0 %v3256
          %v3351 = vpop.f32.mrf.mxu0
          %v3352 = vadd.f32 %v3131, %v3351
          %v3353 = vpop.f32.mrf.mxu0
          %v3354 = vadd.f32 %v3135, %v3353
          %v3355 = vpop.f32.mrf.mxu0
          %v3356 = vpop.f32.mrf.mxu0
          %3357 = vdwg.mxu0
          %3358 = vmatprep.subr.bf16.mxu0 0
          %3359 = vmatpush1.bf16.msra.mxu0 0
          %3360 = vmatprep.subr.bf16.mxu0 0
          %3361 = vmatpush1.bf16.msra.mxu0 0
          %3362 = vmatprep.subr.bf16.mxu0 0
          %3363 = vmatpush1.bf16.msra.mxu0 0
          %3364 = vmatprep.subr.bf16.mxu0 0
          %3365 = vmatpush1.bf16.msra.mxu0 0
          %3366 = vmatprep.subr.bf16.mxu0 %v3274
          %3367 = vmatpush1.bf16.msra.mxu0 %v3271
          %3368 = vmatprep.subr.bf16.mxu0 %v3230
          %3369 = vmatpush1.bf16.msra.mxu0 %v3229
          %3370 = vmatprep.subr.bf16.mxu0 %v3224
          %3371 = vmatpush1.bf16.msra.mxu0 %v3223
          %3372 = vmatprep.subr.bf16.mxu0 %v3218
          %3373 = vmatpush1.bf16.msra.mxu0 %v3217
          %3374 = vmatprep.subr.bf16.mxu0 0
          %3375 = vmatpush2.bf16.msra.mxu0 0
          %3376 = vmatprep.subr.bf16.mxu0 0
          %3377 = vmatpush2.bf16.msra.mxu0 0
          %3378 = vmatprep.subr.bf16.mxu0 0
          %3379 = vmatpush2.bf16.msra.mxu0 0
          %3380 = vmatprep.subr.bf16.mxu0 0
          %3381 = vmatpush2.bf16.msra.mxu0 0
          %3382 = vmatprep.subr.bf16.mxu0 0
          %3383 = vmatpush2.bf16.msra.mxu0 0
          %3384 = vmatprep.subr.bf16.mxu0 0
          %3385 = vmatpush2.bf16.msra.mxu0 0
          %3386 = vmatprep.subr.bf16.mxu0 0
          %3387 = vmatpush2.bf16.msra.mxu0 0
          %3388 = vmatprep.subr.bf16.mxu0 0
          %3389 = vmatpush2.bf16.msra.mxu0 0
          %3390 = vmatprep.mubr.bf16.mxu0 0
          %3391 = vmatmul.mubr.bf16.gmra.mxu0 %v3256
          %v3392 = vpop.f32.mrf.mxu0
          %v3393 = vadd.f32 %v3139, %v3392
          %v3394 = vpop.f32.mrf.mxu0
          %v3395 = vadd.f32 %v3143, %v3394
          %v3396 = vpop.f32.mrf.mxu0
          %v3397 = vpop.f32.mrf.mxu0
          %3398 = vdwg.mxu0
          %v3399 = vxor.u32 %v3311, 2147483648
          %v3400 = vxor.u32 %v3313, 2147483648
          %v3401 = vmul.f32 %v3399, 1.442695
          %v3402 = vpow.pop %v3401
          %v3403 = vmul.f32 %v3400, 1.442695
          %v3404 = vpow.pop %v3403
          %v3405 = vadd.f32 %v3402, 1.0
          %v3406 = vadd.f32 %v3404, 1.0
          %v3407 = vrcp.pop %v3405
          %v3408 = vmul.f32 1.0, %v3407
          %v3409 = vrcp.pop %v3406
          %v3410 = vmul.f32 1.0, %v3409
          %v3411 = vtanh.pop %v3352
          %v3412 = vtanh.pop %v3354
          %v3413 = vxor.u32 %v3393, 2147483648
          %v3414 = vxor.u32 %v3395, 2147483648
          %v3415 = vmul.f32 %v3413, 1.442695
          %v3416 = vpow.pop %v3415
          %v3417 = vmul.f32 %v3414, 1.442695
          %v3418 = vpow.pop %v3417
          %v3419 = vadd.f32 %v3416, 1.0
          %v3420 = vadd.f32 %v3418, 1.0
          %v3421 = vrcp.pop %v3419
          %v3422 = vmul.f32 1.0, %v3421
          %v3423 = vrcp.pop %v3420
          %v3424 = vmul.f32 1.0, %v3423
          %v3425 = vmul.f32 %v3408, %v3411
          %v3426 = vmul.f32 %v3410, %v3412
          %v3427 = vtanh.pop %v3425
          %v3428 = vtanh.pop %v3426
          %v3429 = vmul.f32 %v3422, %v3427
          %v3430 = vmul.f32 %v3424, %v3428
          %v3431 = vpack.c.bf16 %v3429, %v3429
          %v3432 = vpack.c.bf16 %v3430, %v3430
          %v3433 = vld [vmem:[%s4] sm:$0xf]
          %v3434 = vld [vmem:[%s4 + $0x14] sm:$0xf]
          %v3435 = vld [vmem:[%s4 + $0x28] sm:$0xf]
          %v3436 = vld [vmem:[%s4 + $0x3c] sm:$0xf]
          %v3437 = vld [vmem:[%s4 + $0x50] sm:$0xf]
          %v3438 = vld [vmem:[%s4 + $0x64] sm:$0xf]
          %v3439 = vld [vmem:[%s4 + $0x78] sm:$0xf]
          %v3440 = vld [vmem:[%s4 + $0x8c] sm:$0xf]
          %v3441 = vld [vmem:[%s4 + $0xa0] sm:$0xf]
          %v3442 = vld [vmem:[%s4 + $0xb4] sm:$0xf]
          %v3443 = vld [vmem:[%s4 + $0xc8] sm:$0xf]
          %v3444 = vld [vmem:[%s4 + $0xdc] sm:$0xf]
          %v3445 = vld [vmem:[%s4 + $0xf0] sm:$0xf]
          %v3446 = vld [vmem:[%s4 + $0x104] sm:$0xf]
          %v3447 = vld [vmem:[%s4 + $0x118] sm:$0xf]
          %v3448 = vld [vmem:[%s4 + $0x12c] sm:$0xf]
          %v3449 = vld [vmem:[%s4 + $0x140] sm:$0xf]
          %v3450 = vld [vmem:[%s4 + $0x154] sm:$0xf]
          %v3451 = vld [vmem:[%s4 + $0x168] sm:$0xf]
          %v3452 = vld [vmem:[%s4 + $0x17c] sm:$0xf]
          %v3453 = vld [vmem:[%s4 + $0x190] sm:$0xf]
          %v3454 = vld [vmem:[%s4 + $0x1a4] sm:$0xf]
          %v3455 = vld [vmem:[%s4 + $0x1b8] sm:$0xf]
          %v3456 = vld [vmem:[%s4 + $0x1cc] sm:$0xf]
          %v3457 = vld [vmem:[%s4 + $0x1e0] sm:$0xf]
          %v3458 = vld [vmem:[%s4 + $0x1f4] sm:$0xf]
          %v3459 = vld [vmem:[%s4 + $0x208] sm:$0xf]
          %v3460 = vld [vmem:[%s4 + $0x21c] sm:$0xf]
          %v3461 = vld [vmem:[%s4 + $0x230] sm:$0xf]
          %v3462 = vld [vmem:[%s4 + $0x244] sm:$0xf]
          %v3463 = vld [vmem:[%s4 + $0x258] sm:$0xf]
          %v3464 = vld [vmem:[%s4 + $0x26c] sm:$0xf]
          %v3497 = vunpack.c.l.b16 %v3433
          %v3498 = vunpack.c.l.b16 %v3434
          %v3499 = vunpack.c.l.b16 %v3435
          %v3500 = vunpack.c.l.b16 %v3436
          %v3501 = vunpack.c.l.b16 %v3437
          %v3502 = vunpack.c.l.b16 %v3438
          %v3503 = vunpack.c.l.b16 %v3439
          %v3504 = vunpack.c.l.b16 %v3440
          %v3505 = vunpack.c.l.b16 %v3441
          %v3506 = vunpack.c.l.b16 %v3442
          %v3507 = vunpack.c.l.b16 %v3443
          %v3508 = vunpack.c.l.b16 %v3444
          %v3509 = vunpack.c.l.b16 %v3445
          %v3510 = vunpack.c.l.b16 %v3446
          %v3511 = vunpack.c.l.b16 %v3447
          %v3512 = vunpack.c.l.b16 %v3448
          %v3513 = vunpack.c.l.b16 %v3449
          %v3514 = vunpack.c.l.b16 %v3450
          %v3515 = vunpack.c.l.b16 %v3451
          %v3516 = vunpack.c.l.b16 %v3452
          %v3517 = vunpack.c.l.b16 %v3453
          %v3518 = vunpack.c.l.b16 %v3454
          %v3519 = vunpack.c.l.b16 %v3455
          %v3520 = vunpack.c.l.b16 %v3456
          %v3521 = vunpack.c.l.b16 %v3457
          %v3522 = vunpack.c.l.b16 %v3458
          %v3523 = vunpack.c.l.b16 %v3459
          %v3524 = vunpack.c.l.b16 %v3460
          %v3525 = vunpack.c.l.b16 %v3461
          %v3526 = vunpack.c.l.b16 %v3462
          %v3527 = vunpack.c.l.b16 %v3463
          %v3528 = vunpack.c.l.b16 %v3464
          %v3529 = vpack.c.b16 %v3498, %v3497
          %v3530 = vpack.c.b16 %v3500, %v3499
          %v3531 = vpack.c.b16 %v3502, %v3501
          %v3532 = vpack.c.b16 %v3504, %v3503
          %v3533 = vpack.c.b16 %v3506, %v3505
          %v3534 = vpack.c.b16 %v3508, %v3507
          %v3535 = vpack.c.b16 %v3510, %v3509
          %v3536 = vpack.c.b16 %v3512, %v3511
          %v3537 = vpack.c.b16 %v3514, %v3513
          %v3538 = vpack.c.b16 %v3516, %v3515
          %v3539 = vpack.c.b16 %v3518, %v3517
          %v3540 = vpack.c.b16 %v3520, %v3519
          %v3541 = vpack.c.b16 %v3522, %v3521
          %v3542 = vpack.c.b16 %v3524, %v3523
          %v3543 = vpack.c.b16 %v3526, %v3525
          %v3544 = vpack.c.b16 %v3528, %v3527
          %3561 = vmatprep.subr.bf16.mxu0 0
          %3562 = vmatpush1.bf16.msra.mxu0 %v3536
          %3563 = vmatprep.subr.bf16.mxu0 0
          %3564 = vmatpush1.bf16.msra.mxu0 %v3535
          %3565 = vmatprep.subr.bf16.mxu0 0
          %3566 = vmatpush1.bf16.msra.mxu0 %v3534
          %3567 = vmatprep.subr.bf16.mxu0 0
          %3568 = vmatpush1.bf16.msra.mxu0 %v3533
          %3569 = vmatprep.subr.bf16.mxu0 0
          %3570 = vmatpush1.bf16.msra.mxu0 %v3532
          %3571 = vmatprep.subr.bf16.mxu0 0
          %3572 = vmatpush1.bf16.msra.mxu0 %v3531
          %3573 = vmatprep.subr.bf16.mxu0 0
          %3574 = vmatpush1.bf16.msra.mxu0 %v3530
          %3575 = vmatprep.subr.bf16.mxu0 0
          %3576 = vmatpush1.bf16.msra.mxu0 %v3529
          %3577 = vmatprep.subr.bf16.mxu0 0
          %3578 = vmatpush2.bf16.msra.mxu0 %v3544
          %3579 = vmatprep.subr.bf16.mxu0 0
          %3580 = vmatpush2.bf16.msra.mxu0 %v3543
          %3581 = vmatprep.subr.bf16.mxu0 0
          %3582 = vmatpush2.bf16.msra.mxu0 %v3542
          %3583 = vmatprep.subr.bf16.mxu0 0
          %3584 = vmatpush2.bf16.msra.mxu0 %v3541
          %3585 = vmatprep.subr.bf16.mxu0 0
          %3586 = vmatpush2.bf16.msra.mxu0 %v3540
          %3587 = vmatprep.subr.bf16.mxu0 0
          %3588 = vmatpush2.bf16.msra.mxu0 %v3539
          %3589 = vmatprep.subr.bf16.mxu0 0
          %3590 = vmatpush2.bf16.msra.mxu0 %v3538
          %3591 = vmatprep.subr.bf16.mxu0 0
          %3592 = vmatpush2.bf16.msra.mxu0 %v3537
          %3593 = vmatprep.mubr.bf16.mxu0 %v3432
          %3594 = vmatmul.mubr.bf16.gmra.mxu0 %v3431
          %v3595 = vpop.f32.mrf.mxu0
          %v3596 = vadd.f32 0.0, %v3595
          %v3597 = vpop.f32.mrf.mxu0
          %v3598 = vpop.f32.mrf.mxu0
          %v3599 = vpop.f32.mrf.mxu0
          %3600 = vdwg.mxu0
          %v3601 = vmax.f32 %v3596, 0.0
          %v3602 = vpack.c.bf16 %v3601, %v3601
          %v3603 = vld [vmem:[%s3 + $0x4] sm:$0xff]
          %v3604 = vld [vmem:[%s3 + $0x10] sm:$0xff]
          %v3605 = vld [vmem:[%s3 + $0x1c] sm:$0xff]
          %v3606 = vld [vmem:[%s3 + $0x28] sm:$0xff]
          %v3607 = vld [vmem:[%s3 + $0x34] sm:$0xff]
          %v3608 = vld [vmem:[%s3 + $0x40] sm:$0xff]
          %v3609 = vld [vmem:[%s3 + $0x4c] sm:$0xff]
          %v3610 = vld [vmem:[%s3 + $0x58] sm:$0xff]
          %v3611 = vld [vmem:[%s3 + $0x64] sm:$0xff]
          %v3612 = vld [vmem:[%s3 + $0x70] sm:$0xff]
          %v3613 = vld [vmem:[%s3 + $0x7c] sm:$0xff]
          %v3614 = vld [vmem:[%s3 + $0x88] sm:$0xff]
          %v3615 = vld [vmem:[%s3 + $0x94] sm:$0xff]
          %v3616 = vld [vmem:[%s3 + $0xa0] sm:$0xff]
          %v3617 = vld [vmem:[%s3 + $0xac] sm:$0xff]
          %v3618 = vld [vmem:[%s3 + $0xb8] sm:$0xff]
          %v3635 = vunpack.c.l.b16 %v3603
          %v3636 = vunpack.c.h.b16 %v3603
          %v3637 = vunpack.c.l.b16 %v3604
          %v3638 = vunpack.c.h.b16 %v3604
          %v3639 = vunpack.c.l.b16 %v3605
          %v3640 = vunpack.c.h.b16 %v3605
          %v3641 = vunpack.c.l.b16 %v3606
          %v3642 = vunpack.c.h.b16 %v3606
          %v3643 = vunpack.c.l.b16 %v3607
          %v3644 = vunpack.c.h.b16 %v3607
          %v3645 = vunpack.c.l.b16 %v3608
          %v3646 = vunpack.c.h.b16 %v3608
          %v3647 = vunpack.c.l.b16 %v3609
          %v3648 = vunpack.c.h.b16 %v3609
          %v3649 = vunpack.c.l.b16 %v3610
          %v3650 = vunpack.c.h.b16 %v3610
          %v3651 = vunpack.c.l.b16 %v3611
          %v3652 = vunpack.c.h.b16 %v3611
          %v3653 = vunpack.c.l.b16 %v3612
          %v3654 = vunpack.c.h.b16 %v3612
          %v3655 = vunpack.c.l.b16 %v3613
          %v3656 = vunpack.c.h.b16 %v3613
          %v3657 = vunpack.c.l.b16 %v3614
          %v3658 = vunpack.c.h.b16 %v3614
          %v3659 = vunpack.c.l.b16 %v3615
          %v3660 = vunpack.c.h.b16 %v3615
          %v3661 = vunpack.c.l.b16 %v3616
          %v3662 = vunpack.c.h.b16 %v3616
          %v3663 = vunpack.c.l.b16 %v3617
          %v3664 = vunpack.c.h.b16 %v3617
          %v3665 = vunpack.c.l.b16 %v3618
          %v3666 = vunpack.c.h.b16 %v3618
          %v3667 = vpack.c.b16 %v3637, %v3635
          %v3668 = vpack.c.b16 %v3638, %v3636
          %v3669 = vpack.c.b16 %v3641, %v3639
          %v3670 = vpack.c.b16 %v3642, %v3640
          %v3671 = vpack.c.b16 %v3645, %v3643
          %v3672 = vpack.c.b16 %v3646, %v3644
          %v3673 = vpack.c.b16 %v3649, %v3647
          %v3674 = vpack.c.b16 %v3650, %v3648
          %v3675 = vpack.c.b16 %v3653, %v3651
          %v3676 = vpack.c.b16 %v3654, %v3652
          %v3677 = vpack.c.b16 %v3657, %v3655
          %v3678 = vpack.c.b16 %v3658, %v3656
          %v3679 = vpack.c.b16 %v3661, %v3659
          %v3680 = vpack.c.b16 %v3662, %v3660
          %v3681 = vpack.c.b16 %v3665, %v3663
          %v3682 = vpack.c.b16 %v3666, %v3664
          %3699 = vmatprep.subr.bf16.mxu0 %v3682
          %3700 = vmatpush1.bf16.msra.mxu0 %v3681
          %3701 = vmatprep.subr.bf16.mxu0 %v3680
          %3702 = vmatpush1.bf16.msra.mxu0 %v3679
          %3703 = vmatprep.subr.bf16.mxu0 %v3678
          %3704 = vmatpush1.bf16.msra.mxu0 %v3677
          %3705 = vmatprep.subr.bf16.mxu0 %v3676
          %3706 = vmatpush1.bf16.msra.mxu0 %v3675
          %3707 = vmatprep.subr.bf16.mxu0 %v3674
          %3708 = vmatpush1.bf16.msra.mxu0 %v3673
          %3709 = vmatprep.subr.bf16.mxu0 %v3672
          %3710 = vmatpush1.bf16.msra.mxu0 %v3671
          %3711 = vmatprep.subr.bf16.mxu0 %v3670
          %3712 = vmatpush1.bf16.msra.mxu0 %v3669
          %3713 = vmatprep.subr.bf16.mxu0 %v3668
          %3714 = vmatpush1.bf16.msra.mxu0 %v3667
          %3715 = vmatprep.subr.bf16.mxu0 0
          %3716 = vmatpush2.bf16.msra.mxu0 0
          %3717 = vmatprep.subr.bf16.mxu0 0
          %3718 = vmatpush2.bf16.msra.mxu0 0
          %3719 = vmatprep.subr.bf16.mxu0 0
          %3720 = vmatpush2.bf16.msra.mxu0 0
          %3721 = vmatprep.subr.bf16.mxu0 0
          %3722 = vmatpush2.bf16.msra.mxu0 0
          %3723 = vmatprep.subr.bf16.mxu0 0
          %3724 = vmatpush2.bf16.msra.mxu0 0
          %3725 = vmatprep.subr.bf16.mxu0 0
          %3726 = vmatpush2.bf16.msra.mxu0 0
          %3727 = vmatprep.subr.bf16.mxu0 0
          %3728 = vmatpush2.bf16.msra.mxu0 0
          %3729 = vmatprep.subr.bf16.mxu0 0
          %3730 = vmatpush2.bf16.msra.mxu0 0
          %3731 = vmatprep.mubr.bf16.mxu0 0
          %3732 = vmatmul.mubr.bf16.gmra.mxu0 %v3602
          %v3733 = vpop.f32.mrf.mxu0
          %v3734 = vadd.f32 0.0, %v3733
          %v3735 = vpop.f32.mrf.mxu0
          %v3736 = vadd.f32 0.0, %v3735
          %v3737 = vpop.f32.mrf.mxu0
          %v3738 = vpop.f32.mrf.mxu0
          %3739 = vdwg.mxu0
          %v3740 = vxor.u32 %v3734, 2147483648
          %v3741 = vxor.u32 %v3736, 2147483648
          %v3742 = vmul.f32 %v3740, 1.442695
          %v3743 = vpow.pop %v3742
          %v3744 = vmul.f32 %v3741, 1.442695
          %v3745 = vpow.pop %v3744
          %v3746 = vadd.f32 %v3743, 1.0
          %v3747 = vadd.f32 %v3745, 1.0
          %v3748 = vrcp.pop %v3746
          %v3749 = vmul.f32 1.0, %v3748
          %v3750 = vrcp.pop %v3747
          %v3751 = vmul.f32 1.0, %v3750
          %v3752 = vmul.f32 %v3749, %v3429
          %v3753 = vmul.f32 %v3751, %v3430
          %v3754 = vpack.c.bf16 %v3752, %v3752
          %v3755 = vpack.c.bf16 %v3753, %v3753
          %v3756 = vld [vmem:[%s4 + $0x4] sm:$0xff]
          %v3757 = vld [vmem:[%s4 + $0xc] sm:$0xff]
          %v3758 = vld [vmem:[%s4 + $0x18] sm:$0xff]
          %v3759 = vld [vmem:[%s4 + $0x20] sm:$0xff]
          %v3760 = vld [vmem:[%s4 + $0x2c] sm:$0xff]
          %v3761 = vld [vmem:[%s4 + $0x34] sm:$0xff]
          %v3762 = vld [vmem:[%s4 + $0x40] sm:$0xff]
          %v3763 = vld [vmem:[%s4 + $0x48] sm:$0xff]
          %v3764 = vld [vmem:[%s4 + $0x54] sm:$0xff]
          %v3765 = vld [vmem:[%s4 + $0x5c] sm:$0xff]
          %v3766 = vld [vmem:[%s4 + $0x68] sm:$0xff]
          %v3767 = vld [vmem:[%s4 + $0x70] sm:$0xff]
          %v3768 = vld [vmem:[%s4 + $0x7c] sm:$0xff]
          %v3769 = vld [vmem:[%s4 + $0x84] sm:$0xff]
          %v3770 = vld [vmem:[%s4 + $0x90] sm:$0xff]
          %v3771 = vld [vmem:[%s4 + $0x98] sm:$0xff]
          %v3772 = vld [vmem:[%s4 + $0xa4] sm:$0xff]
          %v3773 = vld [vmem:[%s4 + $0xac] sm:$0xff]
          %v3774 = vld [vmem:[%s4 + $0xb8] sm:$0xff]
          %v3775 = vld [vmem:[%s4 + $0xc0] sm:$0xff]
          %v3776 = vld [vmem:[%s4 + $0xcc] sm:$0xff]
          %v3777 = vld [vmem:[%s4 + $0xd4] sm:$0xff]
          %v3778 = vld [vmem:[%s4 + $0xe0] sm:$0xff]
          %v3779 = vld [vmem:[%s4 + $0xe8] sm:$0xff]
          %v3780 = vld [vmem:[%s4 + $0xf4] sm:$0xff]
          %v3781 = vld [vmem:[%s4 + $0xfc] sm:$0xff]
          %v3782 = vld [vmem:[%s4 + $0x108] sm:$0xff]
          %v3783 = vld [vmem:[%s4 + $0x110] sm:$0xff]
          %v3784 = vld [vmem:[%s4 + $0x11c] sm:$0xff]
          %v3785 = vld [vmem:[%s4 + $0x124] sm:$0xff]
          %v3786 = vld [vmem:[%s4 + $0x130] sm:$0xff]
          %v3787 = vld [vmem:[%s4 + $0x138] sm:$0xff]
          %v3788 = vld [vmem:[%s4 + $0x144] sm:$0xff]
          %v3789 = vld [vmem:[%s4 + $0x14c] sm:$0xff]
          %v3790 = vld [vmem:[%s4 + $0x158] sm:$0xff]
          %v3791 = vld [vmem:[%s4 + $0x160] sm:$0xff]
          %v3792 = vld [vmem:[%s4 + $0x16c] sm:$0xff]
          %v3793 = vld [vmem:[%s4 + $0x174] sm:$0xff]
          %v3794 = vld [vmem:[%s4 + $0x180] sm:$0xff]
          %v3795 = vld [vmem:[%s4 + $0x188] sm:$0xff]
          %v3796 = vld [vmem:[%s4 + $0x194] sm:$0xff]
          %v3797 = vld [vmem:[%s4 + $0x19c] sm:$0xff]
          %v3798 = vld [vmem:[%s4 + $0x1a8] sm:$0xff]
          %v3799 = vld [vmem:[%s4 + $0x1b0] sm:$0xff]
          %v3800 = vld [vmem:[%s4 + $0x1bc] sm:$0xff]
          %v3801 = vld [vmem:[%s4 + $0x1c4] sm:$0xff]
          %v3802 = vld [vmem:[%s4 + $0x1d0] sm:$0xff]
          %v3803 = vld [vmem:[%s4 + $0x1d8] sm:$0xff]
          %v3804 = vld [vmem:[%s4 + $0x1e4] sm:$0xff]
          %v3805 = vld [vmem:[%s4 + $0x1ec] sm:$0xff]
          %v3806 = vld [vmem:[%s4 + $0x1f8] sm:$0xff]
          %v3807 = vld [vmem:[%s4 + $0x200] sm:$0xff]
          %v3808 = vld [vmem:[%s4 + $0x20c] sm:$0xff]
          %v3809 = vld [vmem:[%s4 + $0x214] sm:$0xff]
          %v3810 = vld [vmem:[%s4 + $0x220] sm:$0xff]
          %v3811 = vld [vmem:[%s4 + $0x228] sm:$0xff]
          %v3812 = vld [vmem:[%s4 + $0x234] sm:$0xff]
          %v3813 = vld [vmem:[%s4 + $0x23c] sm:$0xff]
          %v3814 = vld [vmem:[%s4 + $0x248] sm:$0xff]
          %v3815 = vld [vmem:[%s4 + $0x250] sm:$0xff]
          %v3816 = vld [vmem:[%s4 + $0x25c] sm:$0xff]
          %v3817 = vld [vmem:[%s4 + $0x264] sm:$0xff]
          %v3818 = vld [vmem:[%s4 + $0x270] sm:$0xff]
          %v3819 = vld [vmem:[%s4 + $0x278] sm:$0xff]
          %v3820 = vld [vmem:[%s5 + $0x7] sm:$0xf]
          %v3822 = vlaneseq
          %v3823 = vshrl.u32 %v3822, 7
          %v3824 = vsub.s32 0, %v3823
          %v3825 = vrot.slane %v3820, %v3824
          %v3826 = vlaneseq
          %v3827 = vshrl.u32 %v3826, 7
          %v3828 = vsub.s32 1, %v3827
          %v3829 = vrot.slane %v3820, %v3828
          %v3830 = vlaneseq
          %v3831 = vshrl.u32 %v3830, 7
          %v3832 = vsub.s32 2, %v3831
          %v3833 = vrot.slane %v3820, %v3832
          %v3834 = vlaneseq
          %v3835 = vshrl.u32 %v3834, 7
          %v3836 = vsub.s32 3, %v3835
          %v3837 = vrot.slane %v3820, %v3836
          %v3906 = vunpack.c.l.b16 %v3756
          %v3907 = vunpack.c.h.b16 %v3756
          %v3908 = vunpack.c.l.b16 %v3757
          %v3909 = vunpack.c.h.b16 %v3757
          %v3910 = vunpack.c.l.b16 %v3758
          %v3911 = vunpack.c.h.b16 %v3758
          %v3912 = vunpack.c.l.b16 %v3759
          %v3913 = vunpack.c.h.b16 %v3759
          %v3914 = vunpack.c.l.b16 %v3760
          %v3915 = vunpack.c.h.b16 %v3760
          %v3916 = vunpack.c.l.b16 %v3761
          %v3917 = vunpack.c.h.b16 %v3761
          %v3918 = vunpack.c.l.b16 %v3762
          %v3919 = vunpack.c.h.b16 %v3762
          %v3920 = vunpack.c.l.b16 %v3763
          %v3921 = vunpack.c.h.b16 %v3763
          %v3922 = vunpack.c.l.b16 %v3764
          %v3923 = vunpack.c.h.b16 %v3764
          %v3924 = vunpack.c.l.b16 %v3765
          %v3925 = vunpack.c.h.b16 %v3765
          %v3926 = vunpack.c.l.b16 %v3766
          %v3927 = vunpack.c.h.b16 %v3766
          %v3928 = vunpack.c.l.b16 %v3767
          %v3929 = vunpack.c.h.b16 %v3767
          %v3930 = vunpack.c.l.b16 %v3768
          %v3931 = vunpack.c.h.b16 %v3768
          %v3932 = vunpack.c.l.b16 %v3769
          %v3933 = vunpack.c.h.b16 %v3769
          %v3934 = vunpack.c.l.b16 %v3770
          %v3935 = vunpack.c.h.b16 %v3770
          %v3936 = vunpack.c.l.b16 %v3771
          %v3937 = vunpack.c.h.b16 %v3771
          %v3938 = vunpack.c.l.b16 %v3772
          %v3939 = vunpack.c.h.b16 %v3772
          %v3940 = vunpack.c.l.b16 %v3773
          %v3941 = vunpack.c.h.b16 %v3773
          %v3942 = vunpack.c.l.b16 %v3774
          %v3943 = vunpack.c.h.b16 %v3774
          %v3944 = vunpack.c.l.b16 %v3775
          %v3945 = vunpack.c.h.b16 %v3775
          %v3946 = vunpack.c.l.b16 %v3776
          %v3947 = vunpack.c.h.b16 %v3776
          %v3948 = vunpack.c.l.b16 %v3777
          %v3949 = vunpack.c.h.b16 %v3777
          %v3950 = vunpack.c.l.b16 %v3778
          %v3951 = vunpack.c.h.b16 %v3778
          %v3952 = vunpack.c.l.b16 %v3779
          %v3953 = vunpack.c.h.b16 %v3779
          %v3954 = vunpack.c.l.b16 %v3780
          %v3955 = vunpack.c.h.b16 %v3780
          %v3956 = vunpack.c.l.b16 %v3781
          %v3957 = vunpack.c.h.b16 %v3781
          %v3958 = vunpack.c.l.b16 %v3782
          %v3959 = vunpack.c.h.b16 %v3782
          %v3960 = vunpack.c.l.b16 %v3783
          %v3961 = vunpack.c.h.b16 %v3783
          %v3962 = vunpack.c.l.b16 %v3784
          %v3963 = vunpack.c.h.b16 %v3784
          %v3964 = vunpack.c.l.b16 %v3785
          %v3965 = vunpack.c.h.b16 %v3785
          %v3966 = vunpack.c.l.b16 %v3786
          %v3967 = vunpack.c.h.b16 %v3786
          %v3968 = vunpack.c.l.b16 %v3787
          %v3969 = vunpack.c.h.b16 %v3787
          %v3970 = vunpack.c.l.b16 %v3788
          %v3971 = vunpack.c.h.b16 %v3788
          %v3972 = vunpack.c.l.b16 %v3789
          %v3973 = vunpack.c.h.b16 %v3789
          %v3974 = vunpack.c.l.b16 %v3790
          %v3975 = vunpack.c.h.b16 %v3790
          %v3976 = vunpack.c.l.b16 %v3791
          %v3977 = vunpack.c.h.b16 %v3791
          %v3978 = vunpack.c.l.b16 %v3792
          %v3979 = vunpack.c.h.b16 %v3792
          %v3980 = vunpack.c.l.b16 %v3793
          %v3981 = vunpack.c.h.b16 %v3793
          %v3982 = vunpack.c.l.b16 %v3794
          %v3983 = vunpack.c.h.b16 %v3794
          %v3984 = vunpack.c.l.b16 %v3795
          %v3985 = vunpack.c.h.b16 %v3795
          %v3986 = vunpack.c.l.b16 %v3796
          %v3987 = vunpack.c.h.b16 %v3796
          %v3988 = vunpack.c.l.b16 %v3797
          %v3989 = vunpack.c.h.b16 %v3797
          %v3990 = vunpack.c.l.b16 %v3798
          %v3991 = vunpack.c.h.b16 %v3798
          %v3992 = vunpack.c.l.b16 %v3799
          %v3993 = vunpack.c.h.b16 %v3799
          %v3994 = vunpack.c.l.b16 %v3800
          %v3995 = vunpack.c.h.b16 %v3800
          %v3996 = vunpack.c.l.b16 %v3801
          %v3997 = vunpack.c.h.b16 %v3801
          %v3998 = vunpack.c.l.b16 %v3802
          %v3999 = vunpack.c.h.b16 %v3802
          %v4000 = vunpack.c.l.b16 %v3803
          %v4001 = vunpack.c.h.b16 %v3803
          %v4002 = vunpack.c.l.b16 %v3804
          %v4003 = vunpack.c.h.b16 %v3804
          %v4004 = vunpack.c.l.b16 %v3805
          %v4005 = vunpack.c.h.b16 %v3805
          %v4006 = vunpack.c.l.b16 %v3806
          %v4007 = vunpack.c.h.b16 %v3806
          %v4008 = vunpack.c.l.b16 %v3807
          %v4009 = vunpack.c.h.b16 %v3807
          %v4010 = vunpack.c.l.b16 %v3808
          %v4011 = vunpack.c.h.b16 %v3808
          %v4012 = vunpack.c.l.b16 %v3809
          %v4013 = vunpack.c.h.b16 %v3809
          %v4014 = vunpack.c.l.b16 %v3810
          %v4015 = vunpack.c.h.b16 %v3810
          %v4016 = vunpack.c.l.b16 %v3811
          %v4017 = vunpack.c.h.b16 %v3811
          %v4018 = vunpack.c.l.b16 %v3812
          %v4019 = vunpack.c.h.b16 %v3812
          %v4020 = vunpack.c.l.b16 %v3813
          %v4021 = vunpack.c.h.b16 %v3813
          %v4022 = vunpack.c.l.b16 %v3814
          %v4023 = vunpack.c.h.b16 %v3814
          %v4024 = vunpack.c.l.b16 %v3815
          %v4025 = vunpack.c.h.b16 %v3815
          %v4026 = vunpack.c.l.b16 %v3816
          %v4027 = vunpack.c.h.b16 %v3816
          %v4028 = vunpack.c.l.b16 %v3817
          %v4029 = vunpack.c.h.b16 %v3817
          %v4030 = vunpack.c.l.b16 %v3818
          %v4031 = vunpack.c.h.b16 %v3818
          %v4032 = vunpack.c.l.b16 %v3819
          %v4033 = vunpack.c.h.b16 %v3819
          %v4034 = vpack.c.b16 %v3910, %v3906
          %v4035 = vpack.c.b16 %v3911, %v3907
          %v4036 = vpack.c.b16 %v3912, %v3908
          %v4037 = vpack.c.b16 %v3913, %v3909
          %v4038 = vpack.c.b16 %v3918, %v3914
          %v4039 = vpack.c.b16 %v3919, %v3915
          %v4040 = vpack.c.b16 %v3920, %v3916
          %v4041 = vpack.c.b16 %v3921, %v3917
          %v4042 = vpack.c.b16 %v3926, %v3922
          %v4043 = vpack.c.b16 %v3927, %v3923
          %v4044 = vpack.c.b16 %v3928, %v3924
          %v4045 = vpack.c.b16 %v3929, %v3925
          %v4046 = vpack.c.b16 %v3934, %v3930
          %v4047 = vpack.c.b16 %v3935, %v3931
          %v4048 = vpack.c.b16 %v3936, %v3932
          %v4049 = vpack.c.b16 %v3937, %v3933
          %v4050 = vpack.c.b16 %v3942, %v3938
          %v4051 = vpack.c.b16 %v3943, %v3939
          %v4052 = vpack.c.b16 %v3944, %v3940
          %v4053 = vpack.c.b16 %v3945, %v3941
          %v4054 = vpack.c.b16 %v3950, %v3946
          %v4055 = vpack.c.b16 %v3951, %v3947
          %v4056 = vpack.c.b16 %v3952, %v3948
          %v4057 = vpack.c.b16 %v3953, %v3949
          %v4058 = vpack.c.b16 %v3958, %v3954
          %v4059 = vpack.c.b16 %v3959, %v3955
          %v4060 = vpack.c.b16 %v3960, %v3956
          %v4061 = vpack.c.b16 %v3961, %v3957
          %v4062 = vpack.c.b16 %v3966, %v3962
          %v4063 = vpack.c.b16 %v3967, %v3963
          %v4064 = vpack.c.b16 %v3968, %v3964
          %v4065 = vpack.c.b16 %v3969, %v3965
          %v4066 = vpack.c.b16 %v3974, %v3970
          %v4067 = vpack.c.b16 %v3975, %v3971
          %v4068 = vpack.c.b16 %v3976, %v3972
          %v4069 = vpack.c.b16 %v3977, %v3973
          %v4070 = vpack.c.b16 %v3982, %v3978
          %v4071 = vpack.c.b16 %v3983, %v3979
          %v4072 = vpack.c.b16 %v3984, %v3980
          %v4073 = vpack.c.b16 %v3985, %v3981
          %v4074 = vpack.c.b16 %v3990, %v3986
          %v4075 = vpack.c.b16 %v3991, %v3987
          %v4076 = vpack.c.b16 %v3992, %v3988
          %v4077 = vpack.c.b16 %v3993, %v3989
          %v4078 = vpack.c.b16 %v3998, %v3994
          %v4079 = vpack.c.b16 %v3999, %v3995
          %v4080 = vpack.c.b16 %v4000, %v3996
          %v4081 = vpack.c.b16 %v4001, %v3997
          %v4082 = vpack.c.b16 %v4006, %v4002
          %v4083 = vpack.c.b16 %v4007, %v4003
          %v4084 = vpack.c.b16 %v4008, %v4004
          %v4085 = vpack.c.b16 %v4009, %v4005
          %v4086 = vpack.c.b16 %v4014, %v4010
          %v4087 = vpack.c.b16 %v4015, %v4011
          %v4088 = vpack.c.b16 %v4016, %v4012
          %v4089 = vpack.c.b16 %v4017, %v4013
          %v4090 = vpack.c.b16 %v4022, %v4018
          %v4091 = vpack.c.b16 %v4023, %v4019
          %v4092 = vpack.c.b16 %v4024, %v4020
          %v4093 = vpack.c.b16 %v4025, %v4021
          %v4094 = vpack.c.b16 %v4030, %v4026
          %v4095 = vpack.c.b16 %v4031, %v4027
          %v4096 = vpack.c.b16 %v4032, %v4028
          %v4097 = vpack.c.b16 %v4033, %v4029
          %4162 = vmatprep.subr.bf16.mxu0 %v4063
          %4163 = vmatpush1.bf16.msra.mxu0 %v4062
          %4164 = vmatprep.subr.bf16.mxu0 %v4059
          %4165 = vmatpush1.bf16.msra.mxu0 %v4058
          %4166 = vmatprep.subr.bf16.mxu0 %v4055
          %4167 = vmatpush1.bf16.msra.mxu0 %v4054
          %4168 = vmatprep.subr.bf16.mxu0 %v4051
          %4169 = vmatpush1.bf16.msra.mxu0 %v4050
          %4170 = vmatprep.subr.bf16.mxu0 %v4047
          %4171 = vmatpush1.bf16.msra.mxu0 %v4046
          %4172 = vmatprep.subr.bf16.mxu0 %v4043
          %4173 = vmatpush1.bf16.msra.mxu0 %v4042
          %4174 = vmatprep.subr.bf16.mxu0 %v4039
          %4175 = vmatpush1.bf16.msra.mxu0 %v4038
          %4176 = vmatprep.subr.bf16.mxu0 %v4035
          %4177 = vmatpush1.bf16.msra.mxu0 %v4034
          %4178 = vmatprep.subr.bf16.mxu0 %v4095
          %4179 = vmatpush2.bf16.msra.mxu0 %v4094
          %4180 = vmatprep.subr.bf16.mxu0 %v4091
          %4181 = vmatpush2.bf16.msra.mxu0 %v4090
          %4182 = vmatprep.subr.bf16.mxu0 %v4087
          %4183 = vmatpush2.bf16.msra.mxu0 %v4086
          %4184 = vmatprep.subr.bf16.mxu0 %v4083
          %4185 = vmatpush2.bf16.msra.mxu0 %v4082
          %4186 = vmatprep.subr.bf16.mxu0 %v4079
          %4187 = vmatpush2.bf16.msra.mxu0 %v4078
          %4188 = vmatprep.subr.bf16.mxu0 %v4075
          %4189 = vmatpush2.bf16.msra.mxu0 %v4074
          %4190 = vmatprep.subr.bf16.mxu0 %v4071
          %4191 = vmatpush2.bf16.msra.mxu0 %v4070
          %4192 = vmatprep.subr.bf16.mxu0 %v4067
          %4193 = vmatpush2.bf16.msra.mxu0 %v4066
          %4194 = vmatprep.mubr.bf16.mxu0 %v3755
          %4195 = vmatmul.mubr.bf16.gmra.mxu0 %v3754
          %v4196 = vpop.f32.mrf.mxu0
          %v4197 = vadd.f32 %v3825, %v4196
          %v4198 = vpop.f32.mrf.mxu0
          %v4199 = vadd.f32 %v3829, %v4198
          %v4200 = vpop.f32.mrf.mxu0
          %v4201 = vpop.f32.mrf.mxu0
          %4202 = vdwg.mxu0
          %4203 = vmatprep.subr.bf16.mxu0 %v4065
          %4204 = vmatpush1.bf16.msra.mxu0 %v4064
          %4205 = vmatprep.subr.bf16.mxu0 %v4061
          %4206 = vmatpush1.bf16.msra.mxu0 %v4060
          %4207 = vmatprep.subr.bf16.mxu0 %v4057
          %4208 = vmatpush1.bf16.msra.mxu0 %v4056
          %4209 = vmatprep.subr.bf16.mxu0 %v4053
          %4210 = vmatpush1.bf16.msra.mxu0 %v4052
          %4211 = vmatprep.subr.bf16.mxu0 %v4049
          %4212 = vmatpush1.bf16.msra.mxu0 %v4048
          %4213 = vmatprep.subr.bf16.mxu0 %v4045
          %4214 = vmatpush1.bf16.msra.mxu0 %v4044
          %4215 = vmatprep.subr.bf16.mxu0 %v4041
          %4216 = vmatpush1.bf16.msra.mxu0 %v4040
          %4217 = vmatprep.subr.bf16.mxu0 %v4037
          %4218 = vmatpush1.bf16.msra.mxu0 %v4036
          %4219 = vmatprep.subr.bf16.mxu0 %v4097
          %4220 = vmatpush2.bf16.msra.mxu0 %v4096
          %4221 = vmatprep.subr.bf16.mxu0 %v4093
          %4222 = vmatpush2.bf16.msra.mxu0 %v4092
          %4223 = vmatprep.subr.bf16.mxu0 %v4089
          %4224 = vmatpush2.bf16.msra.mxu0 %v4088
          %4225 = vmatprep.subr.bf16.mxu0 %v4085
          %4226 = vmatpush2.bf16.msra.mxu0 %v4084
          %4227 = vmatprep.subr.bf16.mxu0 %v4081
          %4228 = vmatpush2.bf16.msra.mxu0 %v4080
          %4229 = vmatprep.subr.bf16.mxu0 %v4077
          %4230 = vmatpush2.bf16.msra.mxu0 %v4076
          %4231 = vmatprep.subr.bf16.mxu0 %v4073
          %4232 = vmatpush2.bf16.msra.mxu0 %v4072
          %4233 = vmatprep.subr.bf16.mxu0 %v4069
          %4234 = vmatpush2.bf16.msra.mxu0 %v4068
          %4235 = vmatprep.mubr.bf16.mxu0 %v3755
          %4236 = vmatmul.mubr.bf16.gmra.mxu0 %v3754
          %v4237 = vpop.f32.mrf.mxu0
          %v4238 = vadd.f32 %v3833, %v4237
          %v4239 = vpop.f32.mrf.mxu0
          %v4240 = vadd.f32 %v3837, %v4239
          %v4241 = vpop.f32.mrf.mxu0
          %v4242 = vpop.f32.mrf.mxu0
          %4243 = vdwg.mxu0
          %v4244 = vxor.u32 %v4197, 2147483648
          %v4245 = vxor.u32 %v4199, 2147483648
          %v4246 = vxor.u32 %v4238, 2147483648
          %v4247 = vxor.u32 %v4240, 2147483648
          %v4248 = vmul.f32 %v4244, 1.442695
          %v4249 = vpow.pop %v4248
          %v4250 = vmul.f32 %v4245, 1.442695
          %v4251 = vpow.pop %v4250
          %v4252 = vmul.f32 %v4246, 1.442695
          %v4253 = vpow.pop %v4252
          %v4254 = vmul.f32 %v4247, 1.442695
          %v4255 = vpow.pop %v4254
          %v4256 = vadd.f32 %v4249, 1.0
          %v4257 = vadd.f32 %v4251, 1.0
          %v4258 = vadd.f32 %v4253, 1.0
          %v4259 = vadd.f32 %v4255, 1.0
          %v4260 = vrcp.pop %v4256
          %v4261 = vmul.f32 1.0, %v4260
          %v4262 = vrcp.pop %v4257
          %v4263 = vmul.f32 1.0, %v4262
          %v4264 = vrcp.pop %v4258
          %v4265 = vmul.f32 1.0, %v4264
          %v4266 = vrcp.pop %v4259
          %v4267 = vmul.f32 1.0, %v4266
          %v4272 = vcombine.low %v4261, %v4263
          %v4273 = vcombine.low %v4265, %v4267
          %v4275 = vunpack.c.l.s4 1983009808
          %v4276 = vunpack.c.0.s8 %v4275
          %v4277 = vlaneseq
          %v4278 = vshrl.u32 %v4277, 7
          %v4279 = vsub.s32 %v4276, %v4278
          %v4280 = vrot.slane %v4272, %v4279
          %v4282 = vunpack.c.l.s4 1983009808
          %v4283 = vunpack.c.0.s8 %v4282
          %v4284 = vlaneseq
          %v4285 = vshrl.u32 %v4284, 7
          %v4286 = vsub.s32 %v4283, %v4285
          %v4287 = vrot.slane %v4273, %v4286
          %v4288 = vcombine.low %v4280, %v4287
          %4290 = vst [vmem:[#allocation3] sm:$0xff] %v4288
        $region52: #{cnn_lstm_forward.3} parent=43 // pred_fallthru
          _
        // Predicated region
        $region53: #{cnn_lstm_forward.3} parent=43 // pred_check
          %p4291 = pneg %p167
        $region54: #{cnn_lstm_forward.3} parent=43 // pred_check_branch
          %4293 = sbr.rel (%p4291) target = $region56
        $region55: #{cnn_lstm_forward.3} parent=43 // pred_region
          %s4295 = ssub.s32 128, 128
          %4296 = vsyncadd [#allocation4], %s4295
          %s4298 = sshll.u32 [#allocation3], 4
          %s4299 = int_to_ptr.vmem [resolvable:$true] %s4298
          %4301 = dma.vmem_to_hbm [thread:$0]  %s4299, 128, %s6, [#allocation4]
        $region56: #{cnn_lstm_forward.3} parent=43 // pred_fallthru
          _
        // Predicated region
        $region57: #{cnn_lstm_forward.3} parent=43 // pred_check
          %p4302 = pneg %p167
        $region58: #{cnn_lstm_forward.3} parent=43 // pred_check_branch
          %4304 = sbr.rel (%p4302) target = $region60
        $region59: #{cnn_lstm_forward.3} parent=43 // pred_region
          %4305 = dma.done [#allocation4], 128
        $region60: #{cnn_lstm_forward.3} parent=43 // pred_fallthru
          _
      $region44: #{cnn_lstm_forward.3} parent=5 // pred_fallthru
        _
      %p4306 = scmp.le.s32.totalorder 2, %s13
      // Predicated region
      $region61: #{cnn_lstm_forward.3} parent=5 // pred_check
        %p4307 = pneg %p4306
      $region62: #{cnn_lstm_forward.3} parent=5 // pred_check_branch
        %4309 = sbr.rel (%p4307) target = $region64
      $region63: #{cnn_lstm_forward.3} parent=5 // pred_region
        %s4310 = ssub.s32 %s13, 2
      $region64: #{cnn_lstm_forward.3} parent=5 // pred_fallthru
        _
    $region6: #{cnn_lstm_forward.3} parent=1 // loop_footer
      %s17 = sadd.s32 1, %s13
    $region7: #{cnn_lstm_forward.3} parent=1 // loop_footer_branch
      %12 = sbr.rel target = $region3
    $region8: #{cnn_lstm_forward.3} parent=1 // loop_exit
      _
    %4311 = vsyncpa [#allocation4], 1
    %s4312 = scalar_lea.sflag [#allocation4], 1
    %4313 = vsyncpa %s4312, 1

</llo_original>
